<compile_context>
chip_gen: v5e
topology: v5e:2x2
jax: 0.10.0
libtpu: 0.0.40
codegen_flags: <defaults>
</compile_context>

<pallas_src>
import numpy as np

import jax
import jax.numpy as jnp
from jax import lax
from jax.experimental import pallas as pl
from jax.experimental.pallas import tpu as pltpu

F32 = jnp.float32
BF16 = jnp.bfloat16

_VMEM = pl.BlockSpec(memory_space=pltpu.MemorySpace.VMEM)


# ---------------------------------------------------------------------------
# The fused kernel.
# ---------------------------------------------------------------------------
def _deepergcn_kernel(xp_ref, eattr_ref, src_ref, dst_ref, bmask_ref,
                      nw1_ref, nm_ref, nw2_ref, nv_ref,
                      ew1_ref, em_ref, ew2_ref, ev_ref,
                      w1s_ref, w2s_ref, pv32_ref, pv64_ref,
                      dw_ref, db_ref, q_ref):
    num_layers = w1s_ref.shape[0]
    c = w1s_ref.shape[1]                      # hidden*2 = 32

    def layer_norm(x, gamma, beta):
        mu = jnp.mean(x, axis=-1, keepdims=True)
        d = x - mu
        var = jnp.mean(d * d, axis=-1, keepdims=True)
        return d * lax.rsqrt(var + 1e-5) * gamma + beta

    def encoder(xin, w1, vec, m, w2):
        # Linear -> GroupNorm (stats via group-averaging matmul) -> ReLU -> Linear
        b1, gamma, beta, b2 = vec[0:1], vec[1:2], vec[2:3], vec[3:4]
        h = jnp.dot(xin.astype(BF16), w1, preferred_element_type=F32) + b1
        mean = jnp.dot(h, m, preferred_element_type=F32)          # per-group mean
        d = h - mean
        var = jnp.dot(d * d, m, preferred_element_type=F32)       # per-group var
        hn = d * lax.rsqrt(var + 1e-5) * gamma + beta
        return jnp.dot(jnp.maximum(hn, 0.0).astype(BF16), w2,
                       preferred_element_type=F32) + b2

    # ---------------- Prologue: node/pos (block-diag fused) + edge encoders --------
    h_enc = encoder(xp_ref[...], nw1_ref[...], nv_ref[...], nm_ref[...], nw2_ref[...])
    ea = encoder(eattr_ref[...], ew1_ref[...], ev_ref[...], em_ref[...], ew2_ref[...])

    src_oh = src_ref[...]                     # [E, N] bf16 one-hot gather matrix
    dst_oh = dst_ref[...]                     # [E, N] bf16 one-hot scatter matrix
    contract_e = (((0,), (0,)), ((), ()))     # contract the edge axis of both operands

    def gen_conv(pre, l):
        # message: relu(x[src] + edge_attr) + 1e-7
        x_j = jnp.dot(src_oh, pre.astype(BF16), preferred_element_type=F32)   # [E, C]
        msg = jnp.maximum(x_j + ea, 0.0) + 1e-7
        # segment softmax; global per-channel max shift (constant cancels per segment)
        t_row = pv32_ref[l, 0:1, :]                                           # [1, C]
        z = t_row * msg
        pexp = jnp.exp(z - jnp.max(z, axis=0, keepdims=True))
        # ONE fused scatter: [N,E]x[E,2C] for numerator and denominator together
        edge_cat = jnp.concatenate([pexp * msg, pexp], axis=1).astype(BF16)   # [E,2C]
        scat = lax.dot_general(dst_oh, edge_cat, contract_e,
                               preferred_element_type=F32)                    # [N,2C]
        numer, denom = scat[:, :c], scat[:, c:]
        inv = jnp.where(denom > 0.0, 1.0 / jnp.maximum(denom, 1e-30), 0.0)    # 0-deg guard
        agg = numer * inv
        # MLP: Linear(C,2C) -> LayerNorm -> ReLU -> Linear(2C,C)   (bf16 in, f32 acc)
        hm = jnp.dot((agg + pre).astype(BF16), w1s_ref[l],
                     preferred_element_type=F32) + pv64_ref[l, 0:1, :]
        hn = layer_norm(hm, pv64_ref[l, 1:2, :], pv64_ref[l, 2:3, :])
        return jnp.dot(jnp.maximum(hn, 0.0).astype(BF16), w2s_ref[l],
                       preferred_element_type=F32) + pv32_ref[l, 3:4, :]

    # layer 0: bare conv on the encoded features (module applies layers[0].conv only)
    hx = gen_conv(h_enc, 0)
    # layers 1..L-1: "res+"  hx = hx + conv(relu(LayerNorm_l(hx)))
    # (fully unrolled; use lax.fori_loop if num_layers grows beyond VMEM residency)
    for l in range(1, num_layers):
        pre = jnp.maximum(layer_norm(hx, pv32_ref[l, 1:2, :], pv32_ref[l, 2:3, :]), 0.0)
        # TODO(synk): dropout(p=0.1) between act and conv is identity in eval mode.
        hx = hx + gen_conv(pre, l)

    # --------- Epilogue: relu(LN_0(hx)) -> decoder Linear -> global_max_pool -------
    xr = jnp.maximum(layer_norm(hx, pv32_ref[0, 1:2, :], pv32_ref[0, 2:3, :]), 0.0)
    # TODO(synk): F.dropout(p=0.1) is identity in eval mode.
    y = jnp.dot(xr.astype(BF16), dw_ref[...], preferred_element_type=F32) + db_ref[...]
    neg = (bmask_ref[...] - 1.0) * 3.0e38     # additive mask: 0 in-graph, -3e38 outside
    rows = [jnp.max(y + neg[:, b:b + 1], axis=0, keepdims=True)
            for b in range(q_ref.shape[0])]
    q_ref[...] = jnp.concatenate(rows, axis=0)          # single store


# ---------------------------------------------------------------------------
# Host-side parameter packing.
# ---------------------------------------------------------------------------
def _group_avg_matrix(group_sizes):
    """M[j, c] = 1/|group(c)| if group(j) == group(c) else 0  (so mean = h @ M)."""
    gid = np.concatenate([np.full((s,), i) for i, s in enumerate(group_sizes)])
    same = (gid[:, None] == gid[None, :]).astype(np.float32)
    inv = 1.0 / np.concatenate([np.full((s,), float(s)) for s in group_sizes])
    return jnp.asarray(same * inv[None, :], dtype=F32)


def _pack_fused_node_pos(pn, pp):
    """Block-diagonal fusion of node_encoder (GroupNorm(1,16)) and pos_encoder
    (GroupNorm(4,16)); output channels [0:16]=node, [16:32]=pos == torch.cat order."""
    din_n, mid_n = pn["w1"].shape
    din_p, mid_p = pp["w1"].shape
    out_n, out_p = pn["w2"].shape[1], pp["w2"].shape[1]
    w1 = jnp.zeros((din_n + din_p, mid_n + mid_p), F32)
    w1 = w1.at[:din_n, :mid_n].set(pn["w1"]).at[din_n:, mid_n:].set(pp["w1"])
    w2 = jnp.zeros((mid_n + mid_p, out_n + out_p), F32)
    w2 = w2.at[:mid_n, :out_n].set(pn["w2"]).at[mid_n:, out_n:].set(pp["w2"])
    vec = jnp.concatenate([
        jnp.concatenate([pn["b1"], pp["b1"]], axis=1),
        jnp.concatenate([pn["gamma"], pp["gamma"]], axis=1),
        jnp.concatenate([pn["beta"], pp["beta"]], axis=1),
        jnp.concatenate([pn["b2"], pp["b2"]], axis=1),
    ], axis=0)                                             # [4, 32]: b1,gamma,beta,b2
    m = _group_avg_matrix([mid_n] + [mid_p // 4] * 4)      # GN(1,16) (+) GN(4,16)
    return w1.astype(BF16), m, w2.astype(BF16), vec


def _pack_edge_encoder(pe):
    mid = pe["w1"].shape[1]
    vec = jnp.concatenate([pe["b1"], pe["gamma"], pe["beta"], pe["b2"]], axis=0)
    return (pe["w1"].astype(BF16), _group_avg_matrix([mid // 4] * 4),
            pe["w2"].astype(BF16), vec)


def _pack_layers(convs, norms):
    num_layers = convs["w1"].shape[0]
    c = convs["w2"].shape[2]
    t_row = jnp.broadcast_to(convs["t"], (num_layers, 1, c))
    pv32 = jnp.concatenate([t_row, norms["gamma"], norms["beta"], convs["b2"]],
                           axis=1)                                   # [L, 4, C]
    pv64 = jnp.concatenate([convs["b1"], convs["g1"], convs["be1"]], axis=1)  # [L,3,2C]
    return convs["w1"].astype(BF16), convs["w2"].astype(BF16), pv32, pv64


# ---------------------------------------------------------------------------
# Full forward.
# ---------------------------------------------------------------------------
def deeper_gcn_forward(params, x, pos, edge_attr, edge_index, batch, batch_size):
    n = x.shape[0]
    src, dst = edge_index[0], edge_index[1]
    node_ids = jnp.arange(n)
    # One-hot gather/scatter matrices in bf16 (0/1 exact; f32 MXU accumulation).
    src_oh = (src[:, None] == node_ids[None, :]).astype(BF16)               # [E, N]
    dst_oh = (dst[:, None] == node_ids[None, :]).astype(BF16)               # [E, N]
    bmask = (batch[:, None] == jnp.arange(batch_size)[None, :]).astype(F32)  # [N, B]
    xp = jnp.concatenate([x, pos], axis=1)                                   # [N, 5]

    nw1, nm, nw2, nv = _pack_fused_node_pos(params["node_encoder"],
                                            params["pos_encoder"])
    ew1, em, ew2, ev = _pack_edge_encoder(params["edge_encoder"])
    w1s, w2s, pv32, pv64 = _pack_layers(params["convs"], params["norms"])
    dw = params["decoder"]["w"].astype(BF16)
    db = params["decoder"]["b"]
    out_dim = dw.shape[1]

    q = pl.pallas_call(
        _deepergcn_kernel,
        out_shape=jax.ShapeDtypeStruct((batch_size, out_dim), F32),
        in_specs=[_VMEM] * 19,
        out_specs=_VMEM,
    )(xp, edge_attr, src_oh, dst_oh, bmask,
      nw1, nm, nw2, nv, ew1, em, ew2, ev,
      w1s, w2s, pv32, pv64, dw, db)
    return {"q": q}


# ---------------------------------------------------------------------------
# Deterministic parameter init (matches module shapes; nn.Linear biases zeroed per
# reset_parameters, norm weights=1 / biases=0, GENConv t=1.0).  Conv / norm params
# are stored pre-stacked along a leading [L, ...] axis.
# ---------------------------------------------------------------------------
def init_params(key, input_dim=1, pos_dim=4, edge_dim=4, output_dim=5,
                hidden=16, num_layers=8):
    c = 2 * hidden
    keys = jax.random.split(key, 8)

    def lin(k, din, dout):
        return jax.random.normal(k, (din, dout), F32) / jnp.sqrt(jnp.asarray(din, F32))

    def lin_stack(k, din, dout):
        return (jax.random.normal(k, (num_layers, din, dout), F32)
                / jnp.sqrt(jnp.asarray(din, F32)))

    def enc(k, din, mid, dout):
        k1, k2 = jax.random.split(k)
        return dict(w1=lin(k1, din, mid), b1=jnp.zeros((1, mid), F32),
                    gamma=jnp.ones((1, mid), F32), beta=jnp.zeros((1, mid), F32),
                    w2=lin(k2, mid, dout), b2=jnp.zeros((1, dout), F32))

    convs = dict(
        t=jnp.ones((num_layers, 1, 1), F32),
        w1=lin_stack(keys[3], c, 2 * c), b1=jnp.zeros((num_layers, 1, 2 * c), F32),
        g1=jnp.ones((num_layers, 1, 2 * c), F32),
        be1=jnp.zeros((num_layers, 1, 2 * c), F32),
        w2=lin_stack(keys[4], 2 * c, c), b2=jnp.zeros((num_layers, 1, c), F32),
    )
    norms = dict(gamma=jnp.ones((num_layers, 1, c), F32),
                 beta=jnp.zeros((num_layers, 1, c), F32))
    return dict(
        node_encoder=enc(keys[0], input_dim, 16, hidden),
        pos_encoder=enc(keys[1], pos_dim, 16, hidden),
        edge_encoder=enc(keys[2], edge_dim, 32, c),
        convs=convs, norms=norms,
        decoder=dict(w=lin(keys[5], c, output_dim),
                     b=jnp.zeros((1, output_dim), F32)),
    )


if __name__ == "__main__":
    key = jax.random.PRNGKey(0)
    k1, k2, k3, k4, k5 = jax.random.split(key, 5)

    N, E, B = 16, 32, 2
    x = jax.random.normal(k1, (N, 1), F32)          # data.x
    pos = jax.random.normal(k2, (N, 4), F32)        # data.pos
    edge_attr = jax.random.normal(k3, (E, 4), F32)  # data.edge_attr
    src = jax.random.randint(k4, (E,), 0, N, dtype=jnp.int32)
    dst = jax.random.randint(k5, (E,), 0, N, dtype=jnp.int32)
    edge_index = jnp.stack([src, dst], axis=0)      # data.edge_index [2, E]
    batch = (jnp.arange(N) >= N // 2).astype(jnp.int32)  # data.batch, 2 graphs

    params = init_params(jax.random.PRNGKey(42))
    fwd = jax.jit(deeper_gcn_forward, static_argnames=("batch_size",))
    out = fwd(params, x, pos, edge_attr, edge_index, batch, batch_size=B)
    q = jax.block_until_ready(out["q"])
    assert q.shape == (B, 5) and q.dtype == jnp.float32
    assert bool(jnp.all(jnp.isfinite(q)))
    print("KERNEL_OK")
</pallas_src>

<mosaic_0001>
module attributes {stable_mosaic.version = 11 : i64} {
  func.func @_deepergcn_kernel(%arg0: memref<16x5xf32, #tpu.memory_space<vmem>>, %arg1: memref<32x4xf32, #tpu.memory_space<vmem>>, %arg2: memref<32x16xbf16, #tpu.memory_space<vmem>>, %arg3: memref<32x16xbf16, #tpu.memory_space<vmem>>, %arg4: memref<16x2xf32, #tpu.memory_space<vmem>>, %arg5: memref<5x32xbf16, #tpu.memory_space<vmem>>, %arg6: memref<32x32xf32, #tpu.memory_space<vmem>>, %arg7: memref<32x32xbf16, #tpu.memory_space<vmem>>, %arg8: memref<4x32xf32, #tpu.memory_space<vmem>>, %arg9: memref<4x32xbf16, #tpu.memory_space<vmem>>, %arg10: memref<32x32xf32, #tpu.memory_space<vmem>>, %arg11: memref<32x32xbf16, #tpu.memory_space<vmem>>, %arg12: memref<4x32xf32, #tpu.memory_space<vmem>>, %arg13: memref<8x32x64xbf16, #tpu.memory_space<vmem>>, %arg14: memref<8x64x32xbf16, #tpu.memory_space<vmem>>, %arg15: memref<8x4x32xf32, #tpu.memory_space<vmem>>, %arg16: memref<8x3x64xf32, #tpu.memory_space<vmem>>, %arg17: memref<32x5xbf16, #tpu.memory_space<vmem>>, %arg18: memref<1x5xf32, #tpu.memory_space<vmem>>, %arg19: memref<2x5xf32, #tpu.memory_space<vmem>>) attributes {dimension_semantics = [], scalar_prefetch = 0 : i64, scratch_operands = 0 : i64, tpu.core_type = #tpu.core_type<tc>} {
    %c0 = arith.constant 0 : index
    %c0_0 = arith.constant 0 : index
    %0 = vector.load %arg0[%c0, %c0_0] : memref<16x5xf32, #tpu.memory_space<vmem>>, vector<16x5xf32>
    %c0_1 = arith.constant 0 : index
    %c0_2 = arith.constant 0 : index
    %1 = vector.load %arg5[%c0_1, %c0_2] : memref<5x32xbf16, #tpu.memory_space<vmem>>, vector<5x32xbf16>
    %c0_3 = arith.constant 0 : index
    %c0_4 = arith.constant 0 : index
    %2 = vector.load %arg8[%c0_3, %c0_4] : memref<4x32xf32, #tpu.memory_space<vmem>>, vector<4x32xf32>
    %c0_5 = arith.constant 0 : index
    %c0_6 = arith.constant 0 : index
    %3 = vector.load %arg6[%c0_5, %c0_6] : memref<32x32xf32, #tpu.memory_space<vmem>>, vector<32x32xf32>
    %c0_7 = arith.constant 0 : index
    %c0_8 = arith.constant 0 : index
    %4 = vector.load %arg7[%c0_7, %c0_8] : memref<32x32xbf16, #tpu.memory_space<vmem>>, vector<32x32xbf16>
    %5 = vector.extract_strided_slice %2 {offsets = [0, 0], sizes = [1, 32], strides = [1, 1]} : vector<4x32xf32> to vector<1x32xf32>
    %6 = vector.extract_strided_slice %2 {offsets = [1, 0], sizes = [1, 32], strides = [1, 1]} : vector<4x32xf32> to vector<1x32xf32>
    %7 = vector.extract_strided_slice %2 {offsets = [2, 0], sizes = [1, 32], strides = [1, 1]} : vector<4x32xf32> to vector<1x32xf32>
    %8 = vector.extract_strided_slice %2 {offsets = [3, 0], sizes = [1, 32], strides = [1, 1]} : vector<4x32xf32> to vector<1x32xf32>
    %9 = arith.truncf %0 : vector<16x5xf32> to vector<16x5xbf16>
    %cst = arith.constant dense<0.000000e+00> : vector<16x32xf32>
    %10 = tpu.matmul %9, %1, %cst {dimension_numbers = #tpu.dot_dimension_numbers<[1], [0], [0], [1], [0, 0, 1, 1], [], []>} : vector<16x5xbf16>, vector<5x32xbf16>, vector<16x32xf32> -> vector<16x32xf32>
    %11 = vector.broadcast %5 : vector<1x32xf32> to vector<16x32xf32>
    %12 = arith.addf %10, %11 : vector<16x32xf32>
    %cst_9 = arith.constant dense<0.000000e+00> : vector<16x32xf32>
    %13 = tpu.matmul %12, %3, %cst_9 {dimension_numbers = #tpu.dot_dimension_numbers<[1], [0], [0], [1], [0, 0, 1, 1], [], []>} : vector<16x32xf32>, vector<32x32xf32>, vector<16x32xf32> -> vector<16x32xf32>
    %14 = arith.subf %12, %13 : vector<16x32xf32>
    %15 = arith.mulf %14, %14 : vector<16x32xf32>
    %cst_10 = arith.constant dense<0.000000e+00> : vector<16x32xf32>
    %16 = tpu.matmul %15, %3, %cst_10 {dimension_numbers = #tpu.dot_dimension_numbers<[1], [0], [0], [1], [0, 0, 1, 1], [], []>} : vector<16x32xf32>, vector<32x32xf32>, vector<16x32xf32> -> vector<16x32xf32>
    %cst_11 = arith.constant 9.99999974E-6 : f32
    %17 = vector.broadcast %cst_11 : f32 to vector<16x32xf32>
    %18 = arith.addf %16, %17 : vector<16x32xf32>
    %19 = math.rsqrt %18 : vector<16x32xf32>
    %20 = arith.mulf %14, %19 : vector<16x32xf32>
    %21 = vector.broadcast %6 : vector<1x32xf32> to vector<16x32xf32>
    %22 = arith.mulf %20, %21 : vector<16x32xf32>
    %23 = vector.broadcast %7 : vector<1x32xf32> to vector<16x32xf32>
    %24 = arith.addf %22, %23 : vector<16x32xf32>
    %cst_12 = arith.constant 0.000000e+00 : f32
    %25 = vector.broadcast %cst_12 : f32 to vector<16x32xf32>
    %26 = arith.maximumf %24, %25 : vector<16x32xf32>
    %27 = arith.truncf %26 : vector<16x32xf32> to vector<16x32xbf16>
    %cst_13 = arith.constant dense<0.000000e+00> : vector<16x32xf32>
    %28 = tpu.matmul %27, %4, %cst_13 {dimension_numbers = #tpu.dot_dimension_numbers<[1], [0], [0], [1], [0, 0, 1, 1], [], []>} : vector<16x32xbf16>, vector<32x32xbf16>, vector<16x32xf32> -> vector<16x32xf32>
    %29 = vector.broadcast %8 : vector<1x32xf32> to vector<16x32xf32>
    %30 = arith.addf %28, %29 : vector<16x32xf32>
    %c0_14 = arith.constant 0 : index
    %c0_15 = arith.constant 0 : index
    %31 = vector.load %arg1[%c0_14, %c0_15] : memref<32x4xf32, #tpu.memory_space<vmem>>, vector<32x4xf32>
    %c0_16 = arith.constant 0 : index
    %c0_17 = arith.constant 0 : index
    %32 = vector.load %arg9[%c0_16, %c0_17] : memref<4x32xbf16, #tpu.memory_space<vmem>>, vector<4x32xbf16>
    %c0_18 = arith.constant 0 : index
    %c0_19 = arith.constant 0 : index
    %33 = vector.load %arg12[%c0_18, %c0_19] : memref<4x32xf32, #tpu.memory_space<vmem>>, vector<4x32xf32>
    %c0_20 = arith.constant 0 : index
    %c0_21 = arith.constant 0 : index
    %34 = vector.load %arg10[%c0_20, %c0_21] : memref<32x32xf32, #tpu.memory_space<vmem>>, vector<32x32xf32>
    %c0_22 = arith.constant 0 : index
    %c0_23 = arith.constant 0 : index
    %35 = vector.load %arg11[%c0_22, %c0_23] : memref<32x32xbf16, #tpu.memory_space<vmem>>, vector<32x32xbf16>
    %36 = vector.extract_strided_slice %33 {offsets = [0, 0], sizes = [1, 32], strides = [1, 1]} : vector<4x32xf32> to vector<1x32xf32>
    %37 = vector.extract_strided_slice %33 {offsets = [1, 0], sizes = [1, 32], strides = [1, 1]} : vector<4x32xf32> to vector<1x32xf32>
    %38 = vector.extract_strided_slice %33 {offsets = [2, 0], sizes = [1, 32], strides = [1, 1]} : vector<4x32xf32> to vector<1x32xf32>
    %39 = vector.extract_strided_slice %33 {offsets = [3, 0], sizes = [1, 32], strides = [1, 1]} : vector<4x32xf32> to vector<1x32xf32>
    %40 = arith.truncf %31 : vector<32x4xf32> to vector<32x4xbf16>
    %cst_24 = arith.constant dense<0.000000e+00> : vector<32x32xf32>
    %41 = tpu.matmul %40, %32, %cst_24 {dimension_numbers = #tpu.dot_dimension_numbers<[1], [0], [0], [1], [0, 0, 1, 1], [], []>} : vector<32x4xbf16>, vector<4x32xbf16>, vector<32x32xf32> -> vector<32x32xf32>
    %42 = vector.broadcast %36 : vector<1x32xf32> to vector<32x32xf32>
    %43 = arith.addf %41, %42 : vector<32x32xf32>
    %cst_25 = arith.constant dense<0.000000e+00> : vector<32x32xf32>
    %44 = tpu.matmul %43, %34, %cst_25 {dimension_numbers = #tpu.dot_dimension_numbers<[1], [0], [0], [1], [0, 0, 1, 1], [], []>} : vector<32x32xf32>, vector<32x32xf32>, vector<32x32xf32> -> vector<32x32xf32>
    %45 = arith.subf %43, %44 : vector<32x32xf32>
    %46 = arith.mulf %45, %45 : vector<32x32xf32>
    %cst_26 = arith.constant dense<0.000000e+00> : vector<32x32xf32>
    %47 = tpu.matmul %46, %34, %cst_26 {dimension_numbers = #tpu.dot_dimension_numbers<[1], [0], [0], [1], [0, 0, 1, 1], [], []>} : vector<32x32xf32>, vector<32x32xf32>, vector<32x32xf32> -> vector<32x32xf32>
    %cst_27 = arith.constant 9.99999974E-6 : f32
    %48 = vector.broadcast %cst_27 : f32 to vector<32x32xf32>
    %49 = arith.addf %47, %48 : vector<32x32xf32>
    %50 = math.rsqrt %49 : vector<32x32xf32>
    %51 = arith.mulf %45, %50 : vector<32x32xf32>
    %52 = vector.broadcast %37 : vector<1x32xf32> to vector<32x32xf32>
    %53 = arith.mulf %51, %52 : vector<32x32xf32>
    %54 = vector.broadcast %38 : vector<1x32xf32> to vector<32x32xf32>
    %55 = arith.addf %53, %54 : vector<32x32xf32>
    %cst_28 = arith.constant 0.000000e+00 : f32
    %56 = vector.broadcast %cst_28 : f32 to vector<32x32xf32>
    %57 = arith.maximumf %55, %56 : vector<32x32xf32>
    %58 = arith.truncf %57 : vector<32x32xf32> to vector<32x32xbf16>
    %cst_29 = arith.constant dense<0.000000e+00> : vector<32x32xf32>
    %59 = tpu.matmul %58, %35, %cst_29 {dimension_numbers = #tpu.dot_dimension_numbers<[1], [0], [0], [1], [0, 0, 1, 1], [], []>} : vector<32x32xbf16>, vector<32x32xbf16>, vector<32x32xf32> -> vector<32x32xf32>
    %60 = vector.broadcast %39 : vector<1x32xf32> to vector<32x32xf32>
    %61 = arith.addf %59, %60 : vector<32x32xf32>
    %c0_30 = arith.constant 0 : index
    %c0_31 = arith.constant 0 : index
    %62 = vector.load %arg2[%c0_30, %c0_31] : memref<32x16xbf16, #tpu.memory_space<vmem>>, vector<32x16xbf16>
    %c0_32 = arith.constant 0 : index
    %c0_33 = arith.constant 0 : index
    %63 = vector.load %arg3[%c0_32, %c0_33] : memref<32x16xbf16, #tpu.memory_space<vmem>>, vector<32x16xbf16>
    %64 = arith.truncf %30 : vector<16x32xf32> to vector<16x32xbf16>
    %cst_34 = arith.constant dense<0.000000e+00> : vector<32x32xf32>
    %65 = tpu.matmul %62, %64, %cst_34 {dimension_numbers = #tpu.dot_dimension_numbers<[1], [0], [0], [1], [0, 0, 1, 1], [], []>} : vector<32x16xbf16>, vector<16x32xbf16>, vector<32x32xf32> -> vector<32x32xf32>
    %66 = arith.addf %65, %61 : vector<32x32xf32>
    %cst_35 = arith.constant 0.000000e+00 : f32
    %67 = vector.broadcast %cst_35 : f32 to vector<32x32xf32>
    %68 = arith.maximumf %66, %67 : vector<32x32xf32>
    %cst_36 = arith.constant 1.000000e-07 : f32
    %69 = vector.broadcast %cst_36 : f32 to vector<32x32xf32>
    %70 = arith.addf %68, %69 : vector<32x32xf32>
    %c0_37 = arith.constant 0 : index
    %c0_38 = arith.constant 0 : index
    %c0_39 = arith.constant 0 : index
    %71 = vector.load %arg15[%c0_37, %c0_38, %c0_39] : memref<8x4x32xf32, #tpu.memory_space<vmem>>, vector<1x1x32xf32>
    %72 = vector.shape_cast %71 : vector<1x1x32xf32> to vector<1x32xf32>
    %73 = vector.broadcast %72 : vector<1x32xf32> to vector<32x32xf32>
    %74 = arith.mulf %73, %70 : vector<32x32xf32>
    %cst_40 = arith.constant dense<0xFF800000> : vector<32xf32>
    %75 = vector.multi_reduction <maximumf>, %74, %cst_40 [0] : vector<32x32xf32> to vector<32xf32>
    %76 = vector.shape_cast %75 : vector<32xf32> to vector<1x32xf32>
    %77 = vector.broadcast %76 : vector<1x32xf32> to vector<32x32xf32>
    %78 = arith.subf %74, %77 : vector<32x32xf32>
    %79 = math.exp %78 : vector<32x32xf32>
    %80 = arith.mulf %79, %70 : vector<32x32xf32>
    %81 = tpu.concatenate %80, %79 in 1 : vector<32x32xf32>, vector<32x32xf32> -> vector<32x64xf32>
    %82 = arith.truncf %81 : vector<32x64xf32> to vector<32x64xbf16>
    %cst_41 = arith.constant dense<0.000000e+00> : vector<16x64xf32>
    %83 = tpu.matmul %63, %82, %cst_41 {dimension_numbers = #tpu.dot_dimension_numbers<[0], [0], [1], [1], [0, 1, 1, 1], [], []>} : vector<32x16xbf16>, vector<32x64xbf16>, vector<16x64xf32> -> vector<16x64xf32>
    %84 = vector.extract_strided_slice %83 {offsets = [0, 0], sizes = [16, 32], strides = [1, 1]} : vector<16x64xf32> to vector<16x32xf32>
    %85 = vector.extract_strided_slice %83 {offsets = [0, 32], sizes = [16, 32], strides = [1, 1]} : vector<16x64xf32> to vector<16x32xf32>
    %cst_42 = arith.constant 0.000000e+00 : f32
    %86 = vector.broadcast %cst_42 : f32 to vector<16x32xf32>
    %87 = arith.cmpf ogt, %85, %86 : vector<16x32xf32>
    %cst_43 = arith.constant 1.000000e-30 : f32
    %88 = vector.broadcast %cst_43 : f32 to vector<16x32xf32>
    %89 = arith.maximumf %85, %88 : vector<16x32xf32>
    %cst_44 = arith.constant 1.000000e+00 : f32
    %90 = vector.broadcast %cst_44 : f32 to vector<16x32xf32>
    %91 = arith.divf %90, %89 : vector<16x32xf32>
    %cst_45 = arith.constant 0.000000e+00 : f32
    %92 = vector.broadcast %cst_45 : f32 to vector<16x32xf32>
    %93 = arith.select %87, %91, %92 : vector<16x32xi1>, vector<16x32xf32>
    %94 = arith.mulf %84, %93 : vector<16x32xf32>
    %95 = arith.addf %94, %30 : vector<16x32xf32>
    %96 = arith.truncf %95 : vector<16x32xf32> to vector<16x32xbf16>
    %c0_46 = arith.constant 0 : index
    %c0_47 = arith.constant 0 : index
    %c0_48 = arith.constant 0 : index
    %97 = vector.load %arg13[%c0_46, %c0_47, %c0_48] : memref<8x32x64xbf16, #tpu.memory_space<vmem>>, vector<1x32x64xbf16>
    %98 = vector.shape_cast %97 : vector<1x32x64xbf16> to vector<32x64xbf16>
    %cst_49 = arith.constant dense<0.000000e+00> : vector<16x64xf32>
    %99 = tpu.matmul %96, %98, %cst_49 {dimension_numbers = #tpu.dot_dimension_numbers<[1], [0], [0], [1], [0, 0, 1, 1], [], []>} : vector<16x32xbf16>, vector<32x64xbf16>, vector<16x64xf32> -> vector<16x64xf32>
    %c0_50 = arith.constant 0 : index
    %c0_51 = arith.constant 0 : index
    %c0_52 = arith.constant 0 : index
    %100 = vector.load %arg16[%c0_50, %c0_51, %c0_52] : memref<8x3x64xf32, #tpu.memory_space<vmem>>, vector<1x1x64xf32>
    %101 = vector.shape_cast %100 : vector<1x1x64xf32> to vector<1x64xf32>
    %102 = vector.broadcast %101 : vector<1x64xf32> to vector<16x64xf32>
    %103 = arith.addf %99, %102 : vector<16x64xf32>
    %c0_53 = arith.constant 0 : index
    %c1 = arith.constant 1 : index
    %c0_54 = arith.constant 0 : index
    %104 = vector.load %arg16[%c0_53, %c1, %c0_54] : memref<8x3x64xf32, #tpu.memory_space<vmem>>, vector<1x1x64xf32>
    %105 = vector.shape_cast %104 : vector<1x1x64xf32> to vector<1x64xf32>
    %c0_55 = arith.constant 0 : index
    %c2 = arith.constant 2 : index
    %c0_56 = arith.constant 0 : index
    %106 = vector.load %arg16[%c0_55, %c2, %c0_56] : memref<8x3x64xf32, #tpu.memory_space<vmem>>, vector<1x1x64xf32>
    %107 = vector.shape_cast %106 : vector<1x1x64xf32> to vector<1x64xf32>
    %cst_57 = arith.constant dense<0.000000e+00> : vector<16xf32>
    %108 = vector.multi_reduction <add>, %103, %cst_57 [1] : vector<16x64xf32> to vector<16xf32>
    %109 = vector.shape_cast %108 : vector<16xf32> to vector<16x1xf32>
    %cst_58 = arith.constant 6.400000e+01 : f32
    %110 = vector.broadcast %cst_58 : f32 to vector<16x1xf32>
    %111 = arith.divf %109, %110 : vector<16x1xf32>
    %112 = vector.broadcast %111 : vector<16x1xf32> to vector<16x64xf32>
    %113 = arith.subf %103, %112 : vector<16x64xf32>
    %114 = arith.mulf %113, %113 : vector<16x64xf32>
    %cst_59 = arith.constant dense<0.000000e+00> : vector<16xf32>
    %115 = vector.multi_reduction <add>, %114, %cst_59 [1] : vector<16x64xf32> to vector<16xf32>
    %116 = vector.shape_cast %115 : vector<16xf32> to vector<16x1xf32>
    %cst_60 = arith.constant 6.400000e+01 : f32
    %117 = vector.broadcast %cst_60 : f32 to vector<16x1xf32>
    %118 = arith.divf %116, %117 : vector<16x1xf32>
    %cst_61 = arith.constant 9.99999974E-6 : f32
    %119 = vector.broadcast %cst_61 : f32 to vector<16x1xf32>
    %120 = arith.addf %118, %119 : vector<16x1xf32>
    %121 = math.rsqrt %120 : vector<16x1xf32>
    %122 = vector.broadcast %121 : vector<16x1xf32> to vector<16x64xf32>
    %123 = arith.mulf %113, %122 : vector<16x64xf32>
    %124 = vector.broadcast %105 : vector<1x64xf32> to vector<16x64xf32>
    %125 = arith.mulf %123, %124 : vector<16x64xf32>
    %126 = vector.broadcast %107 : vector<1x64xf32> to vector<16x64xf32>
    %127 = arith.addf %125, %126 : vector<16x64xf32>
    %cst_62 = arith.constant 0.000000e+00 : f32
    %128 = vector.broadcast %cst_62 : f32 to vector<16x64xf32>
    %129 = arith.maximumf %127, %128 : vector<16x64xf32>
    %130 = arith.truncf %129 : vector<16x64xf32> to vector<16x64xbf16>
    %c0_63 = arith.constant 0 : index
    %c0_64 = arith.constant 0 : index
    %c0_65 = arith.constant 0 : index
    %131 = vector.load %arg14[%c0_63, %c0_64, %c0_65] : memref<8x64x32xbf16, #tpu.memory_space<vmem>>, vector<1x64x32xbf16>
    %132 = vector.shape_cast %131 : vector<1x64x32xbf16> to vector<64x32xbf16>
    %cst_66 = arith.constant dense<0.000000e+00> : vector<16x32xf32>
    %133 = tpu.matmul %130, %132, %cst_66 {dimension_numbers = #tpu.dot_dimension_numbers<[1], [0], [0], [1], [0, 0, 1, 1], [], []>} : vector<16x64xbf16>, vector<64x32xbf16>, vector<16x32xf32> -> vector<16x32xf32>
    %c0_67 = arith.constant 0 : index
    %c3 = arith.constant 3 : index
    %c0_68 = arith.constant 0 : index
    %134 = vector.load %arg15[%c0_67, %c3, %c0_68] : memref<8x4x32xf32, #tpu.memory_space<vmem>>, vector<1x1x32xf32>
    %135 = vector.shape_cast %134 : vector<1x1x32xf32> to vector<1x32xf32>
    %136 = vector.broadcast %135 : vector<1x32xf32> to vector<16x32xf32>
    %137 = arith.addf %133, %136 : vector<16x32xf32>
    %c1_69 = arith.constant 1 : index
    %c1_70 = arith.constant 1 : index
    %c0_71 = arith.constant 0 : index
    %138 = vector.load %arg15[%c1_69, %c1_70, %c0_71] : memref<8x4x32xf32, #tpu.memory_space<vmem>>, vector<1x1x32xf32>
    %139 = vector.shape_cast %138 : vector<1x1x32xf32> to vector<1x32xf32>
    %c1_72 = arith.constant 1 : index
    %c2_73 = arith.constant 2 : index
    %c0_74 = arith.constant 0 : index
    %140 = vector.load %arg15[%c1_72, %c2_73, %c0_74] : memref<8x4x32xf32, #tpu.memory_space<vmem>>, vector<1x1x32xf32>
    %141 = vector.shape_cast %140 : vector<1x1x32xf32> to vector<1x32xf32>
    %cst_75 = arith.constant dense<0.000000e+00> : vector<16xf32>
    %142 = vector.multi_reduction <add>, %137, %cst_75 [1] : vector<16x32xf32> to vector<16xf32>
    %143 = vector.shape_cast %142 : vector<16xf32> to vector<16x1xf32>
    %cst_76 = arith.constant 3.200000e+01 : f32
    %144 = vector.broadcast %cst_76 : f32 to vector<16x1xf32>
    %145 = arith.divf %143, %144 : vector<16x1xf32>
    %146 = vector.broadcast %145 : vector<16x1xf32> to vector<16x32xf32>
    %147 = arith.subf %137, %146 : vector<16x32xf32>
    %148 = arith.mulf %147, %147 : vector<16x32xf32>
    %cst_77 = arith.constant dense<0.000000e+00> : vector<16xf32>
    %149 = vector.multi_reduction <add>, %148, %cst_77 [1] : vector<16x32xf32> to vector<16xf32>
    %150 = vector.shape_cast %149 : vector<16xf32> to vector<16x1xf32>
    %cst_78 = arith.constant 3.200000e+01 : f32
    %151 = vector.broadcast %cst_78 : f32 to vector<16x1xf32>
    %152 = arith.divf %150, %151 : vector<16x1xf32>
    %cst_79 = arith.constant 9.99999974E-6 : f32
    %153 = vector.broadcast %cst_79 : f32 to vector<16x1xf32>
    %154 = arith.addf %152, %153 : vector<16x1xf32>
    %155 = math.rsqrt %154 : vector<16x1xf32>
    %156 = vector.broadcast %155 : vector<16x1xf32> to vector<16x32xf32>
    %157 = arith.mulf %147, %156 : vector<16x32xf32>
    %158 = vector.broadcast %139 : vector<1x32xf32> to vector<16x32xf32>
    %159 = arith.mulf %157, %158 : vector<16x32xf32>
    %160 = vector.broadcast %141 : vector<1x32xf32> to vector<16x32xf32>
    %161 = arith.addf %159, %160 : vector<16x32xf32>
    %cst_80 = arith.constant 0.000000e+00 : f32
    %162 = vector.broadcast %cst_80 : f32 to vector<16x32xf32>
    %163 = arith.maximumf %161, %162 : vector<16x32xf32>
    %164 = arith.truncf %163 : vector<16x32xf32> to vector<16x32xbf16>
    %cst_81 = arith.constant dense<0.000000e+00> : vector<32x32xf32>
    %165 = tpu.matmul %62, %164, %cst_81 {dimension_numbers = #tpu.dot_dimension_numbers<[1], [0], [0], [1], [0, 0, 1, 1], [], []>} : vector<32x16xbf16>, vector<16x32xbf16>, vector<32x32xf32> -> vector<32x32xf32>
    %166 = arith.addf %165, %61 : vector<32x32xf32>
    %cst_82 = arith.constant 0.000000e+00 : f32
    %167 = vector.broadcast %cst_82 : f32 to vector<32x32xf32>
    %168 = arith.maximumf %166, %167 : vector<32x32xf32>
    %cst_83 = arith.constant 1.000000e-07 : f32
    %169 = vector.broadcast %cst_83 : f32 to vector<32x32xf32>
    %170 = arith.addf %168, %169 : vector<32x32xf32>
    %c1_84 = arith.constant 1 : index
    %c0_85 = arith.constant 0 : index
    %c0_86 = arith.constant 0 : index
    %171 = vector.load %arg15[%c1_84, %c0_85, %c0_86] : memref<8x4x32xf32, #tpu.memory_space<vmem>>, vector<1x1x32xf32>
    %172 = vector.shape_cast %171 : vector<1x1x32xf32> to vector<1x32xf32>
    %173 = vector.broadcast %172 : vector<1x32xf32> to vector<32x32xf32>
    %174 = arith.mulf %173, %170 : vector<32x32xf32>
    %cst_87 = arith.constant dense<0xFF800000> : vector<32xf32>
    %175 = vector.multi_reduction <maximumf>, %174, %cst_87 [0] : vector<32x32xf32> to vector<32xf32>
    %176 = vector.shape_cast %175 : vector<32xf32> to vector<1x32xf32>
    %177 = vector.broadcast %176 : vector<1x32xf32> to vector<32x32xf32>
    %178 = arith.subf %174, %177 : vector<32x32xf32>
    %179 = math.exp %178 : vector<32x32xf32>
    %180 = arith.mulf %179, %170 : vector<32x32xf32>
    %181 = tpu.concatenate %180, %179 in 1 : vector<32x32xf32>, vector<32x32xf32> -> vector<32x64xf32>
    %182 = arith.truncf %181 : vector<32x64xf32> to vector<32x64xbf16>
    %cst_88 = arith.constant dense<0.000000e+00> : vector<16x64xf32>
    %183 = tpu.matmul %63, %182, %cst_88 {dimension_numbers = #tpu.dot_dimension_numbers<[0], [0], [1], [1], [0, 1, 1, 1], [], []>} : vector<32x16xbf16>, vector<32x64xbf16>, vector<16x64xf32> -> vector<16x64xf32>
    %184 = vector.extract_strided_slice %183 {offsets = [0, 0], sizes = [16, 32], strides = [1, 1]} : vector<16x64xf32> to vector<16x32xf32>
    %185 = vector.extract_strided_slice %183 {offsets = [0, 32], sizes = [16, 32], strides = [1, 1]} : vector<16x64xf32> to vector<16x32xf32>
    %cst_89 = arith.constant 0.000000e+00 : f32
    %186 = vector.broadcast %cst_89 : f32 to vector<16x32xf32>
    %187 = arith.cmpf ogt, %185, %186 : vector<16x32xf32>
    %cst_90 = arith.constant 1.000000e-30 : f32
    %188 = vector.broadcast %cst_90 : f32 to vector<16x32xf32>
    %189 = arith.maximumf %185, %188 : vector<16x32xf32>
    %cst_91 = arith.constant 1.000000e+00 : f32
    %190 = vector.broadcast %cst_91 : f32 to vector<16x32xf32>
    %191 = arith.divf %190, %189 : vector<16x32xf32>
    %cst_92 = arith.constant 0.000000e+00 : f32
    %192 = vector.broadcast %cst_92 : f32 to vector<16x32xf32>
    %193 = arith.select %187, %191, %192 : vector<16x32xi1>, vector<16x32xf32>
    %194 = arith.mulf %184, %193 : vector<16x32xf32>
    %195 = arith.addf %194, %163 : vector<16x32xf32>
    %196 = arith.truncf %195 : vector<16x32xf32> to vector<16x32xbf16>
    %c1_93 = arith.constant 1 : index
    %c0_94 = arith.constant 0 : index
    %c0_95 = arith.constant 0 : index
    %197 = vector.load %arg13[%c1_93, %c0_94, %c0_95] : memref<8x32x64xbf16, #tpu.memory_space<vmem>>, vector<1x32x64xbf16>
    %198 = vector.shape_cast %197 : vector<1x32x64xbf16> to vector<32x64xbf16>
    %cst_96 = arith.constant dense<0.000000e+00> : vector<16x64xf32>
    %199 = tpu.matmul %196, %198, %cst_96 {dimension_numbers = #tpu.dot_dimension_numbers<[1], [0], [0], [1], [0, 0, 1, 1], [], []>} : vector<16x32xbf16>, vector<32x64xbf16>, vector<16x64xf32> -> vector<16x64xf32>
    %c1_97 = arith.constant 1 : index
    %c0_98 = arith.constant 0 : index
    %c0_99 = arith.constant 0 : index
    %200 = vector.load %arg16[%c1_97, %c0_98, %c0_99] : memref<8x3x64xf32, #tpu.memory_space<vmem>>, vector<1x1x64xf32>
    %201 = vector.shape_cast %200 : vector<1x1x64xf32> to vector<1x64xf32>
    %202 = vector.broadcast %201 : vector<1x64xf32> to vector<16x64xf32>
    %203 = arith.addf %199, %202 : vector<16x64xf32>
    %c1_100 = arith.constant 1 : index
    %c1_101 = arith.constant 1 : index
    %c0_102 = arith.constant 0 : index
    %204 = vector.load %arg16[%c1_100, %c1_101, %c0_102] : memref<8x3x64xf32, #tpu.memory_space<vmem>>, vector<1x1x64xf32>
    %205 = vector.shape_cast %204 : vector<1x1x64xf32> to vector<1x64xf32>
    %c1_103 = arith.constant 1 : index
    %c2_104 = arith.constant 2 : index
    %c0_105 = arith.constant 0 : index
    %206 = vector.load %arg16[%c1_103, %c2_104, %c0_105] : memref<8x3x64xf32, #tpu.memory_space<vmem>>, vector<1x1x64xf32>
    %207 = vector.shape_cast %206 : vector<1x1x64xf32> to vector<1x64xf32>
    %cst_106 = arith.constant dense<0.000000e+00> : vector<16xf32>
    %208 = vector.multi_reduction <add>, %203, %cst_106 [1] : vector<16x64xf32> to vector<16xf32>
    %209 = vector.shape_cast %208 : vector<16xf32> to vector<16x1xf32>
    %cst_107 = arith.constant 6.400000e+01 : f32
    %210 = vector.broadcast %cst_107 : f32 to vector<16x1xf32>
    %211 = arith.divf %209, %210 : vector<16x1xf32>
    %212 = vector.broadcast %211 : vector<16x1xf32> to vector<16x64xf32>
    %213 = arith.subf %203, %212 : vector<16x64xf32>
    %214 = arith.mulf %213, %213 : vector<16x64xf32>
    %cst_108 = arith.constant dense<0.000000e+00> : vector<16xf32>
    %215 = vector.multi_reduction <add>, %214, %cst_108 [1] : vector<16x64xf32> to vector<16xf32>
    %216 = vector.shape_cast %215 : vector<16xf32> to vector<16x1xf32>
    %cst_109 = arith.constant 6.400000e+01 : f32
    %217 = vector.broadcast %cst_109 : f32 to vector<16x1xf32>
    %218 = arith.divf %216, %217 : vector<16x1xf32>
    %cst_110 = arith.constant 9.99999974E-6 : f32
    %219 = vector.broadcast %cst_110 : f32 to vector<16x1xf32>
    %220 = arith.addf %218, %219 : vector<16x1xf32>
    %221 = math.rsqrt %220 : vector<16x1xf32>
    %222 = vector.broadcast %221 : vector<16x1xf32> to vector<16x64xf32>
    %223 = arith.mulf %213, %222 : vector<16x64xf32>
    %224 = vector.broadcast %205 : vector<1x64xf32> to vector<16x64xf32>
    %225 = arith.mulf %223, %224 : vector<16x64xf32>
    %226 = vector.broadcast %207 : vector<1x64xf32> to vector<16x64xf32>
    %227 = arith.addf %225, %226 : vector<16x64xf32>
    %cst_111 = arith.constant 0.000000e+00 : f32
    %228 = vector.broadcast %cst_111 : f32 to vector<16x64xf32>
    %229 = arith.maximumf %227, %228 : vector<16x64xf32>
    %230 = arith.truncf %229 : vector<16x64xf32> to vector<16x64xbf16>
    %c1_112 = arith.constant 1 : index
    %c0_113 = arith.constant 0 : index
    %c0_114 = arith.constant 0 : index
    %231 = vector.load %arg14[%c1_112, %c0_113, %c0_114] : memref<8x64x32xbf16, #tpu.memory_space<vmem>>, vector<1x64x32xbf16>
    %232 = vector.shape_cast %231 : vector<1x64x32xbf16> to vector<64x32xbf16>
    %cst_115 = arith.constant dense<0.000000e+00> : vector<16x32xf32>
    %233 = tpu.matmul %230, %232, %cst_115 {dimension_numbers = #tpu.dot_dimension_numbers<[1], [0], [0], [1], [0, 0, 1, 1], [], []>} : vector<16x64xbf16>, vector<64x32xbf16>, vector<16x32xf32> -> vector<16x32xf32>
    %c1_116 = arith.constant 1 : index
    %c3_117 = arith.constant 3 : index
    %c0_118 = arith.constant 0 : index
    %234 = vector.load %arg15[%c1_116, %c3_117, %c0_118] : memref<8x4x32xf32, #tpu.memory_space<vmem>>, vector<1x1x32xf32>
    %235 = vector.shape_cast %234 : vector<1x1x32xf32> to vector<1x32xf32>
    %236 = vector.broadcast %235 : vector<1x32xf32> to vector<16x32xf32>
    %237 = arith.addf %233, %236 : vector<16x32xf32>
    %238 = arith.addf %137, %237 : vector<16x32xf32>
    %c2_119 = arith.constant 2 : index
    %c1_120 = arith.constant 1 : index
    %c0_121 = arith.constant 0 : index
    %239 = vector.load %arg15[%c2_119, %c1_120, %c0_121] : memref<8x4x32xf32, #tpu.memory_space<vmem>>, vector<1x1x32xf32>
    %240 = vector.shape_cast %239 : vector<1x1x32xf32> to vector<1x32xf32>
    %c2_122 = arith.constant 2 : index
    %c2_123 = arith.constant 2 : index
    %c0_124 = arith.constant 0 : index
    %241 = vector.load %arg15[%c2_122, %c2_123, %c0_124] : memref<8x4x32xf32, #tpu.memory_space<vmem>>, vector<1x1x32xf32>
    %242 = vector.shape_cast %241 : vector<1x1x32xf32> to vector<1x32xf32>
    %cst_125 = arith.constant dense<0.000000e+00> : vector<16xf32>
    %243 = vector.multi_reduction <add>, %238, %cst_125 [1] : vector<16x32xf32> to vector<16xf32>
    %244 = vector.shape_cast %243 : vector<16xf32> to vector<16x1xf32>
    %cst_126 = arith.constant 3.200000e+01 : f32
    %245 = vector.broadcast %cst_126 : f32 to vector<16x1xf32>
    %246 = arith.divf %244, %245 : vector<16x1xf32>
    %247 = vector.broadcast %246 : vector<16x1xf32> to vector<16x32xf32>
    %248 = arith.subf %238, %247 : vector<16x32xf32>
    %249 = arith.mulf %248, %248 : vector<16x32xf32>
    %cst_127 = arith.constant dense<0.000000e+00> : vector<16xf32>
    %250 = vector.multi_reduction <add>, %249, %cst_127 [1] : vector<16x32xf32> to vector<16xf32>
    %251 = vector.shape_cast %250 : vector<16xf32> to vector<16x1xf32>
    %cst_128 = arith.constant 3.200000e+01 : f32
    %252 = vector.broadcast %cst_128 : f32 to vector<16x1xf32>
    %253 = arith.divf %251, %252 : vector<16x1xf32>
    %cst_129 = arith.constant 9.99999974E-6 : f32
    %254 = vector.broadcast %cst_129 : f32 to vector<16x1xf32>
    %255 = arith.addf %253, %254 : vector<16x1xf32>
    %256 = math.rsqrt %255 : vector<16x1xf32>
    %257 = vector.broadcast %256 : vector<16x1xf32> to vector<16x32xf32>
    %258 = arith.mulf %248, %257 : vector<16x32xf32>
    %259 = vector.broadcast %240 : vector<1x32xf32> to vector<16x32xf32>
    %260 = arith.mulf %258, %259 : vector<16x32xf32>
    %261 = vector.broadcast %242 : vector<1x32xf32> to vector<16x32xf32>
    %262 = arith.addf %260, %261 : vector<16x32xf32>
    %cst_130 = arith.constant 0.000000e+00 : f32
    %263 = vector.broadcast %cst_130 : f32 to vector<16x32xf32>
    %264 = arith.maximumf %262, %263 : vector<16x32xf32>
    %265 = arith.truncf %264 : vector<16x32xf32> to vector<16x32xbf16>
    %cst_131 = arith.constant dense<0.000000e+00> : vector<32x32xf32>
    %266 = tpu.matmul %62, %265, %cst_131 {dimension_numbers = #tpu.dot_dimension_numbers<[1], [0], [0], [1], [0, 0, 1, 1], [], []>} : vector<32x16xbf16>, vector<16x32xbf16>, vector<32x32xf32> -> vector<32x32xf32>
    %267 = arith.addf %266, %61 : vector<32x32xf32>
    %cst_132 = arith.constant 0.000000e+00 : f32
    %268 = vector.broadcast %cst_132 : f32 to vector<32x32xf32>
    %269 = arith.maximumf %267, %268 : vector<32x32xf32>
    %cst_133 = arith.constant 1.000000e-07 : f32
    %270 = vector.broadcast %cst_133 : f32 to vector<32x32xf32>
    %271 = arith.addf %269, %270 : vector<32x32xf32>
    %c2_134 = arith.constant 2 : index
    %c0_135 = arith.constant 0 : index
    %c0_136 = arith.constant 0 : index
    %272 = vector.load %arg15[%c2_134, %c0_135, %c0_136] : memref<8x4x32xf32, #tpu.memory_space<vmem>>, vector<1x1x32xf32>
    %273 = vector.shape_cast %272 : vector<1x1x32xf32> to vector<1x32xf32>
    %274 = vector.broadcast %273 : vector<1x32xf32> to vector<32x32xf32>
    %275 = arith.mulf %274, %271 : vector<32x32xf32>
    %cst_137 = arith.constant dense<0xFF800000> : vector<32xf32>
    %276 = vector.multi_reduction <maximumf>, %275, %cst_137 [0] : vector<32x32xf32> to vector<32xf32>
    %277 = vector.shape_cast %276 : vector<32xf32> to vector<1x32xf32>
    %278 = vector.broadcast %277 : vector<1x32xf32> to vector<32x32xf32>
    %279 = arith.subf %275, %278 : vector<32x32xf32>
    %280 = math.exp %279 : vector<32x32xf32>
    %281 = arith.mulf %280, %271 : vector<32x32xf32>
    %282 = tpu.concatenate %281, %280 in 1 : vector<32x32xf32>, vector<32x32xf32> -> vector<32x64xf32>
    %283 = arith.truncf %282 : vector<32x64xf32> to vector<32x64xbf16>
    %cst_138 = arith.constant dense<0.000000e+00> : vector<16x64xf32>
    %284 = tpu.matmul %63, %283, %cst_138 {dimension_numbers = #tpu.dot_dimension_numbers<[0], [0], [1], [1], [0, 1, 1, 1], [], []>} : vector<32x16xbf16>, vector<32x64xbf16>, vector<16x64xf32> -> vector<16x64xf32>
    %285 = vector.extract_strided_slice %284 {offsets = [0, 0], sizes = [16, 32], strides = [1, 1]} : vector<16x64xf32> to vector<16x32xf32>
    %286 = vector.extract_strided_slice %284 {offsets = [0, 32], sizes = [16, 32], strides = [1, 1]} : vector<16x64xf32> to vector<16x32xf32>
    %cst_139 = arith.constant 0.000000e+00 : f32
    %287 = vector.broadcast %cst_139 : f32 to vector<16x32xf32>
    %288 = arith.cmpf ogt, %286, %287 : vector<16x32xf32>
    %cst_140 = arith.constant 1.000000e-30 : f32
    %289 = vector.broadcast %cst_140 : f32 to vector<16x32xf32>
    %290 = arith.maximumf %286, %289 : vector<16x32xf32>
    %cst_141 = arith.constant 1.000000e+00 : f32
    %291 = vector.broadcast %cst_141 : f32 to vector<16x32xf32>
    %292 = arith.divf %291, %290 : vector<16x32xf32>
    %cst_142 = arith.constant 0.000000e+00 : f32
    %293 = vector.broadcast %cst_142 : f32 to vector<16x32xf32>
    %294 = arith.select %288, %292, %293 : vector<16x32xi1>, vector<16x32xf32>
    %295 = arith.mulf %285, %294 : vector<16x32xf32>
    %296 = arith.addf %295, %264 : vector<16x32xf32>
    %297 = arith.truncf %296 : vector<16x32xf32> to vector<16x32xbf16>
    %c2_143 = arith.constant 2 : index
    %c0_144 = arith.constant 0 : index
    %c0_145 = arith.constant 0 : index
    %298 = vector.load %arg13[%c2_143, %c0_144, %c0_145] : memref<8x32x64xbf16, #tpu.memory_space<vmem>>, vector<1x32x64xbf16>
    %299 = vector.shape_cast %298 : vector<1x32x64xbf16> to vector<32x64xbf16>
    %cst_146 = arith.constant dense<0.000000e+00> : vector<16x64xf32>
    %300 = tpu.matmul %297, %299, %cst_146 {dimension_numbers = #tpu.dot_dimension_numbers<[1], [0], [0], [1], [0, 0, 1, 1], [], []>} : vector<16x32xbf16>, vector<32x64xbf16>, vector<16x64xf32> -> vector<16x64xf32>
    %c2_147 = arith.constant 2 : index
    %c0_148 = arith.constant 0 : index
    %c0_149 = arith.constant 0 : index
    %301 = vector.load %arg16[%c2_147, %c0_148, %c0_149] : memref<8x3x64xf32, #tpu.memory_space<vmem>>, vector<1x1x64xf32>
    %302 = vector.shape_cast %301 : vector<1x1x64xf32> to vector<1x64xf32>
    %303 = vector.broadcast %302 : vector<1x64xf32> to vector<16x64xf32>
    %304 = arith.addf %300, %303 : vector<16x64xf32>
    %c2_150 = arith.constant 2 : index
    %c1_151 = arith.constant 1 : index
    %c0_152 = arith.constant 0 : index
    %305 = vector.load %arg16[%c2_150, %c1_151, %c0_152] : memref<8x3x64xf32, #tpu.memory_space<vmem>>, vector<1x1x64xf32>
    %306 = vector.shape_cast %305 : vector<1x1x64xf32> to vector<1x64xf32>
    %c2_153 = arith.constant 2 : index
    %c2_154 = arith.constant 2 : index
    %c0_155 = arith.constant 0 : index
    %307 = vector.load %arg16[%c2_153, %c2_154, %c0_155] : memref<8x3x64xf32, #tpu.memory_space<vmem>>, vector<1x1x64xf32>
    %308 = vector.shape_cast %307 : vector<1x1x64xf32> to vector<1x64xf32>
    %cst_156 = arith.constant dense<0.000000e+00> : vector<16xf32>
    %309 = vector.multi_reduction <add>, %304, %cst_156 [1] : vector<16x64xf32> to vector<16xf32>
    %310 = vector.shape_cast %309 : vector<16xf32> to vector<16x1xf32>
    %cst_157 = arith.constant 6.400000e+01 : f32
    %311 = vector.broadcast %cst_157 : f32 to vector<16x1xf32>
    %312 = arith.divf %310, %311 : vector<16x1xf32>
    %313 = vector.broadcast %312 : vector<16x1xf32> to vector<16x64xf32>
    %314 = arith.subf %304, %313 : vector<16x64xf32>
    %315 = arith.mulf %314, %314 : vector<16x64xf32>
    %cst_158 = arith.constant dense<0.000000e+00> : vector<16xf32>
    %316 = vector.multi_reduction <add>, %315, %cst_158 [1] : vector<16x64xf32> to vector<16xf32>
    %317 = vector.shape_cast %316 : vector<16xf32> to vector<16x1xf32>
    %cst_159 = arith.constant 6.400000e+01 : f32
    %318 = vector.broadcast %cst_159 : f32 to vector<16x1xf32>
    %319 = arith.divf %317, %318 : vector<16x1xf32>
    %cst_160 = arith.constant 9.99999974E-6 : f32
    %320 = vector.broadcast %cst_160 : f32 to vector<16x1xf32>
    %321 = arith.addf %319, %320 : vector<16x1xf32>
    %322 = math.rsqrt %321 : vector<16x1xf32>
    %323 = vector.broadcast %322 : vector<16x1xf32> to vector<16x64xf32>
    %324 = arith.mulf %314, %323 : vector<16x64xf32>
    %325 = vector.broadcast %306 : vector<1x64xf32> to vector<16x64xf32>
    %326 = arith.mulf %324, %325 : vector<16x64xf32>
    %327 = vector.broadcast %308 : vector<1x64xf32> to vector<16x64xf32>
    %328 = arith.addf %326, %327 : vector<16x64xf32>
    %cst_161 = arith.constant 0.000000e+00 : f32
    %329 = vector.broadcast %cst_161 : f32 to vector<16x64xf32>
    %330 = arith.maximumf %328, %329 : vector<16x64xf32>
    %331 = arith.truncf %330 : vector<16x64xf32> to vector<16x64xbf16>
    %c2_162 = arith.constant 2 : index
    %c0_163 = arith.constant 0 : index
    %c0_164 = arith.constant 0 : index
    %332 = vector.load %arg14[%c2_162, %c0_163, %c0_164] : memref<8x64x32xbf16, #tpu.memory_space<vmem>>, vector<1x64x32xbf16>
    %333 = vector.shape_cast %332 : vector<1x64x32xbf16> to vector<64x32xbf16>
    %cst_165 = arith.constant dense<0.000000e+00> : vector<16x32xf32>
    %334 = tpu.matmul %331, %333, %cst_165 {dimension_numbers = #tpu.dot_dimension_numbers<[1], [0], [0], [1], [0, 0, 1, 1], [], []>} : vector<16x64xbf16>, vector<64x32xbf16>, vector<16x32xf32> -> vector<16x32xf32>
    %c2_166 = arith.constant 2 : index
    %c3_167 = arith.constant 3 : index
    %c0_168 = arith.constant 0 : index
    %335 = vector.load %arg15[%c2_166, %c3_167, %c0_168] : memref<8x4x32xf32, #tpu.memory_space<vmem>>, vector<1x1x32xf32>
    %336 = vector.shape_cast %335 : vector<1x1x32xf32> to vector<1x32xf32>
    %337 = vector.broadcast %336 : vector<1x32xf32> to vector<16x32xf32>
    %338 = arith.addf %334, %337 : vector<16x32xf32>
    %339 = arith.addf %238, %338 : vector<16x32xf32>
    %c3_169 = arith.constant 3 : index
    %c1_170 = arith.constant 1 : index
    %c0_171 = arith.constant 0 : index
    %340 = vector.load %arg15[%c3_169, %c1_170, %c0_171] : memref<8x4x32xf32, #tpu.memory_space<vmem>>, vector<1x1x32xf32>
    %341 = vector.shape_cast %340 : vector<1x1x32xf32> to vector<1x32xf32>
    %c3_172 = arith.constant 3 : index
    %c2_173 = arith.constant 2 : index
    %c0_174 = arith.constant 0 : index
    %342 = vector.load %arg15[%c3_172, %c2_173, %c0_174] : memref<8x4x32xf32, #tpu.memory_space<vmem>>, vector<1x1x32xf32>
    %343 = vector.shape_cast %342 : vector<1x1x32xf32> to vector<1x32xf32>
    %cst_175 = arith.constant dense<0.000000e+00> : vector<16xf32>
    %344 = vector.multi_reduction <add>, %339, %cst_175 [1] : vector<16x32xf32> to vector<16xf32>
    %345 = vector.shape_cast %344 : vector<16xf32> to vector<16x1xf32>
    %cst_176 = arith.constant 3.200000e+01 : f32
    %346 = vector.broadcast %cst_176 : f32 to vector<16x1xf32>
    %347 = arith.divf %345, %346 : vector<16x1xf32>
    %348 = vector.broadcast %347 : vector<16x1xf32> to vector<16x32xf32>
    %349 = arith.subf %339, %348 : vector<16x32xf32>
    %350 = arith.mulf %349, %349 : vector<16x32xf32>
    %cst_177 = arith.constant dense<0.000000e+00> : vector<16xf32>
    %351 = vector.multi_reduction <add>, %350, %cst_177 [1] : vector<16x32xf32> to vector<16xf32>
    %352 = vector.shape_cast %351 : vector<16xf32> to vector<16x1xf32>
    %cst_178 = arith.constant 3.200000e+01 : f32
    %353 = vector.broadcast %cst_178 : f32 to vector<16x1xf32>
    %354 = arith.divf %352, %353 : vector<16x1xf32>
    %cst_179 = arith.constant 9.99999974E-6 : f32
    %355 = vector.broadcast %cst_179 : f32 to vector<16x1xf32>
    %356 = arith.addf %354, %355 : vector<16x1xf32>
    %357 = math.rsqrt %356 : vector<16x1xf32>
    %358 = vector.broadcast %357 : vector<16x1xf32> to vector<16x32xf32>
    %359 = arith.mulf %349, %358 : vector<16x32xf32>
    %360 = vector.broadcast %341 : vector<1x32xf32> to vector<16x32xf32>
    %361 = arith.mulf %359, %360 : vector<16x32xf32>
    %362 = vector.broadcast %343 : vector<1x32xf32> to vector<16x32xf32>
    %363 = arith.addf %361, %362 : vector<16x32xf32>
    %cst_180 = arith.constant 0.000000e+00 : f32
    %364 = vector.broadcast %cst_180 : f32 to vector<16x32xf32>
    %365 = arith.maximumf %363, %364 : vector<16x32xf32>
    %366 = arith.truncf %365 : vector<16x32xf32> to vector<16x32xbf16>
    %cst_181 = arith.constant dense<0.000000e+00> : vector<32x32xf32>
    %367 = tpu.matmul %62, %366, %cst_181 {dimension_numbers = #tpu.dot_dimension_numbers<[1], [0], [0], [1], [0, 0, 1, 1], [], []>} : vector<32x16xbf16>, vector<16x32xbf16>, vector<32x32xf32> -> vector<32x32xf32>
    %368 = arith.addf %367, %61 : vector<32x32xf32>
    %cst_182 = arith.constant 0.000000e+00 : f32
    %369 = vector.broadcast %cst_182 : f32 to vector<32x32xf32>
    %370 = arith.maximumf %368, %369 : vector<32x32xf32>
    %cst_183 = arith.constant 1.000000e-07 : f32
    %371 = vector.broadcast %cst_183 : f32 to vector<32x32xf32>
    %372 = arith.addf %370, %371 : vector<32x32xf32>
    %c3_184 = arith.constant 3 : index
    %c0_185 = arith.constant 0 : index
    %c0_186 = arith.constant 0 : index
    %373 = vector.load %arg15[%c3_184, %c0_185, %c0_186] : memref<8x4x32xf32, #tpu.memory_space<vmem>>, vector<1x1x32xf32>
    %374 = vector.shape_cast %373 : vector<1x1x32xf32> to vector<1x32xf32>
    %375 = vector.broadcast %374 : vector<1x32xf32> to vector<32x32xf32>
    %376 = arith.mulf %375, %372 : vector<32x32xf32>
    %cst_187 = arith.constant dense<0xFF800000> : vector<32xf32>
    %377 = vector.multi_reduction <maximumf>, %376, %cst_187 [0] : vector<32x32xf32> to vector<32xf32>
    %378 = vector.shape_cast %377 : vector<32xf32> to vector<1x32xf32>
    %379 = vector.broadcast %378 : vector<1x32xf32> to vector<32x32xf32>
    %380 = arith.subf %376, %379 : vector<32x32xf32>
    %381 = math.exp %380 : vector<32x32xf32>
    %382 = arith.mulf %381, %372 : vector<32x32xf32>
    %383 = tpu.concatenate %382, %381 in 1 : vector<32x32xf32>, vector<32x32xf32> -> vector<32x64xf32>
    %384 = arith.truncf %383 : vector<32x64xf32> to vector<32x64xbf16>
    %cst_188 = arith.constant dense<0.000000e+00> : vector<16x64xf32>
    %385 = tpu.matmul %63, %384, %cst_188 {dimension_numbers = #tpu.dot_dimension_numbers<[0], [0], [1], [1], [0, 1, 1, 1], [], []>} : vector<32x16xbf16>, vector<32x64xbf16>, vector<16x64xf32> -> vector<16x64xf32>
    %386 = vector.extract_strided_slice %385 {offsets = [0, 0], sizes = [16, 32], strides = [1, 1]} : vector<16x64xf32> to vector<16x32xf32>
    %387 = vector.extract_strided_slice %385 {offsets = [0, 32], sizes = [16, 32], strides = [1, 1]} : vector<16x64xf32> to vector<16x32xf32>
    %cst_189 = arith.constant 0.000000e+00 : f32
    %388 = vector.broadcast %cst_189 : f32 to vector<16x32xf32>
    %389 = arith.cmpf ogt, %387, %388 : vector<16x32xf32>
    %cst_190 = arith.constant 1.000000e-30 : f32
    %390 = vector.broadcast %cst_190 : f32 to vector<16x32xf32>
    %391 = arith.maximumf %387, %390 : vector<16x32xf32>
    %cst_191 = arith.constant 1.000000e+00 : f32
    %392 = vector.broadcast %cst_191 : f32 to vector<16x32xf32>
    %393 = arith.divf %392, %391 : vector<16x32xf32>
    %cst_192 = arith.constant 0.000000e+00 : f32
    %394 = vector.broadcast %cst_192 : f32 to vector<16x32xf32>
    %395 = arith.select %389, %393, %394 : vector<16x32xi1>, vector<16x32xf32>
    %396 = arith.mulf %386, %395 : vector<16x32xf32>
    %397 = arith.addf %396, %365 : vector<16x32xf32>
    %398 = arith.truncf %397 : vector<16x32xf32> to vector<16x32xbf16>
    %c3_193 = arith.constant 3 : index
    %c0_194 = arith.constant 0 : index
    %c0_195 = arith.constant 0 : index
    %399 = vector.load %arg13[%c3_193, %c0_194, %c0_195] : memref<8x32x64xbf16, #tpu.memory_space<vmem>>, vector<1x32x64xbf16>
    %400 = vector.shape_cast %399 : vector<1x32x64xbf16> to vector<32x64xbf16>
    %cst_196 = arith.constant dense<0.000000e+00> : vector<16x64xf32>
    %401 = tpu.matmul %398, %400, %cst_196 {dimension_numbers = #tpu.dot_dimension_numbers<[1], [0], [0], [1], [0, 0, 1, 1], [], []>} : vector<16x32xbf16>, vector<32x64xbf16>, vector<16x64xf32> -> vector<16x64xf32>
    %c3_197 = arith.constant 3 : index
    %c0_198 = arith.constant 0 : index
    %c0_199 = arith.constant 0 : index
    %402 = vector.load %arg16[%c3_197, %c0_198, %c0_199] : memref<8x3x64xf32, #tpu.memory_space<vmem>>, vector<1x1x64xf32>
    %403 = vector.shape_cast %402 : vector<1x1x64xf32> to vector<1x64xf32>
    %404 = vector.broadcast %403 : vector<1x64xf32> to vector<16x64xf32>
    %405 = arith.addf %401, %404 : vector<16x64xf32>
    %c3_200 = arith.constant 3 : index
    %c1_201 = arith.constant 1 : index
    %c0_202 = arith.constant 0 : index
    %406 = vector.load %arg16[%c3_200, %c1_201, %c0_202] : memref<8x3x64xf32, #tpu.memory_space<vmem>>, vector<1x1x64xf32>
    %407 = vector.shape_cast %406 : vector<1x1x64xf32> to vector<1x64xf32>
    %c3_203 = arith.constant 3 : index
    %c2_204 = arith.constant 2 : index
    %c0_205 = arith.constant 0 : index
    %408 = vector.load %arg16[%c3_203, %c2_204, %c0_205] : memref<8x3x64xf32, #tpu.memory_space<vmem>>, vector<1x1x64xf32>
    %409 = vector.shape_cast %408 : vector<1x1x64xf32> to vector<1x64xf32>
    %cst_206 = arith.constant dense<0.000000e+00> : vector<16xf32>
    %410 = vector.multi_reduction <add>, %405, %cst_206 [1] : vector<16x64xf32> to vector<16xf32>
    %411 = vector.shape_cast %410 : vector<16xf32> to vector<16x1xf32>
    %cst_207 = arith.constant 6.400000e+01 : f32
    %412 = vector.broadcast %cst_207 : f32 to vector<16x1xf32>
    %413 = arith.divf %411, %412 : vector<16x1xf32>
    %414 = vector.broadcast %413 : vector<16x1xf32> to vector<16x64xf32>
    %415 = arith.subf %405, %414 : vector<16x64xf32>
    %416 = arith.mulf %415, %415 : vector<16x64xf32>
    %cst_208 = arith.constant dense<0.000000e+00> : vector<16xf32>
    %417 = vector.multi_reduction <add>, %416, %cst_208 [1] : vector<16x64xf32> to vector<16xf32>
    %418 = vector.shape_cast %417 : vector<16xf32> to vector<16x1xf32>
    %cst_209 = arith.constant 6.400000e+01 : f32
    %419 = vector.broadcast %cst_209 : f32 to vector<16x1xf32>
    %420 = arith.divf %418, %419 : vector<16x1xf32>
    %cst_210 = arith.constant 9.99999974E-6 : f32
    %421 = vector.broadcast %cst_210 : f32 to vector<16x1xf32>
    %422 = arith.addf %420, %421 : vector<16x1xf32>
    %423 = math.rsqrt %422 : vector<16x1xf32>
    %424 = vector.broadcast %423 : vector<16x1xf32> to vector<16x64xf32>
    %425 = arith.mulf %415, %424 : vector<16x64xf32>
    %426 = vector.broadcast %407 : vector<1x64xf32> to vector<16x64xf32>
    %427 = arith.mulf %425, %426 : vector<16x64xf32>
    %428 = vector.broadcast %409 : vector<1x64xf32> to vector<16x64xf32>
    %429 = arith.addf %427, %428 : vector<16x64xf32>
    %cst_211 = arith.constant 0.000000e+00 : f32
    %430 = vector.broadcast %cst_211 : f32 to vector<16x64xf32>
    %431 = arith.maximumf %429, %430 : vector<16x64xf32>
    %432 = arith.truncf %431 : vector<16x64xf32> to vector<16x64xbf16>
    %c3_212 = arith.constant 3 : index
    %c0_213 = arith.constant 0 : index
    %c0_214 = arith.constant 0 : index
    %433 = vector.load %arg14[%c3_212, %c0_213, %c0_214] : memref<8x64x32xbf16, #tpu.memory_space<vmem>>, vector<1x64x32xbf16>
    %434 = vector.shape_cast %433 : vector<1x64x32xbf16> to vector<64x32xbf16>
    %cst_215 = arith.constant dense<0.000000e+00> : vector<16x32xf32>
    %435 = tpu.matmul %432, %434, %cst_215 {dimension_numbers = #tpu.dot_dimension_numbers<[1], [0], [0], [1], [0, 0, 1, 1], [], []>} : vector<16x64xbf16>, vector<64x32xbf16>, vector<16x32xf32> -> vector<16x32xf32>
    %c3_216 = arith.constant 3 : index
    %c3_217 = arith.constant 3 : index
    %c0_218 = arith.constant 0 : index
    %436 = vector.load %arg15[%c3_216, %c3_217, %c0_218] : memref<8x4x32xf32, #tpu.memory_space<vmem>>, vector<1x1x32xf32>
    %437 = vector.shape_cast %436 : vector<1x1x32xf32> to vector<1x32xf32>
    %438 = vector.broadcast %437 : vector<1x32xf32> to vector<16x32xf32>
    %439 = arith.addf %435, %438 : vector<16x32xf32>
    %440 = arith.addf %339, %439 : vector<16x32xf32>
    %c4 = arith.constant 4 : index
    %c1_219 = arith.constant 1 : index
    %c0_220 = arith.constant 0 : index
    %441 = vector.load %arg15[%c4, %c1_219, %c0_220] : memref<8x4x32xf32, #tpu.memory_space<vmem>>, vector<1x1x32xf32>
    %442 = vector.shape_cast %441 : vector<1x1x32xf32> to vector<1x32xf32>
    %c4_221 = arith.constant 4 : index
    %c2_222 = arith.constant 2 : index
    %c0_223 = arith.constant 0 : index
    %443 = vector.load %arg15[%c4_221, %c2_222, %c0_223] : memref<8x4x32xf32, #tpu.memory_space<vmem>>, vector<1x1x32xf32>
    %444 = vector.shape_cast %443 : vector<1x1x32xf32> to vector<1x32xf32>
    %cst_224 = arith.constant dense<0.000000e+00> : vector<16xf32>
    %445 = vector.multi_reduction <add>, %440, %cst_224 [1] : vector<16x32xf32> to vector<16xf32>
    %446 = vector.shape_cast %445 : vector<16xf32> to vector<16x1xf32>
    %cst_225 = arith.constant 3.200000e+01 : f32
    %447 = vector.broadcast %cst_225 : f32 to vector<16x1xf32>
    %448 = arith.divf %446, %447 : vector<16x1xf32>
    %449 = vector.broadcast %448 : vector<16x1xf32> to vector<16x32xf32>
    %450 = arith.subf %440, %449 : vector<16x32xf32>
    %451 = arith.mulf %450, %450 : vector<16x32xf32>
    %cst_226 = arith.constant dense<0.000000e+00> : vector<16xf32>
    %452 = vector.multi_reduction <add>, %451, %cst_226 [1] : vector<16x32xf32> to vector<16xf32>
    %453 = vector.shape_cast %452 : vector<16xf32> to vector<16x1xf32>
    %cst_227 = arith.constant 3.200000e+01 : f32
    %454 = vector.broadcast %cst_227 : f32 to vector<16x1xf32>
    %455 = arith.divf %453, %454 : vector<16x1xf32>
    %cst_228 = arith.constant 9.99999974E-6 : f32
    %456 = vector.broadcast %cst_228 : f32 to vector<16x1xf32>
    %457 = arith.addf %455, %456 : vector<16x1xf32>
    %458 = math.rsqrt %457 : vector<16x1xf32>
    %459 = vector.broadcast %458 : vector<16x1xf32> to vector<16x32xf32>
    %460 = arith.mulf %450, %459 : vector<16x32xf32>
    %461 = vector.broadcast %442 : vector<1x32xf32> to vector<16x32xf32>
    %462 = arith.mulf %460, %461 : vector<16x32xf32>
    %463 = vector.broadcast %444 : vector<1x32xf32> to vector<16x32xf32>
    %464 = arith.addf %462, %463 : vector<16x32xf32>
    %cst_229 = arith.constant 0.000000e+00 : f32
    %465 = vector.broadcast %cst_229 : f32 to vector<16x32xf32>
    %466 = arith.maximumf %464, %465 : vector<16x32xf32>
    %467 = arith.truncf %466 : vector<16x32xf32> to vector<16x32xbf16>
    %cst_230 = arith.constant dense<0.000000e+00> : vector<32x32xf32>
    %468 = tpu.matmul %62, %467, %cst_230 {dimension_numbers = #tpu.dot_dimension_numbers<[1], [0], [0], [1], [0, 0, 1, 1], [], []>} : vector<32x16xbf16>, vector<16x32xbf16>, vector<32x32xf32> -> vector<32x32xf32>
    %469 = arith.addf %468, %61 : vector<32x32xf32>
    %cst_231 = arith.constant 0.000000e+00 : f32
    %470 = vector.broadcast %cst_231 : f32 to vector<32x32xf32>
    %471 = arith.maximumf %469, %470 : vector<32x32xf32>
    %cst_232 = arith.constant 1.000000e-07 : f32
    %472 = vector.broadcast %cst_232 : f32 to vector<32x32xf32>
    %473 = arith.addf %471, %472 : vector<32x32xf32>
    %c4_233 = arith.constant 4 : index
    %c0_234 = arith.constant 0 : index
    %c0_235 = arith.constant 0 : index
    %474 = vector.load %arg15[%c4_233, %c0_234, %c0_235] : memref<8x4x32xf32, #tpu.memory_space<vmem>>, vector<1x1x32xf32>
    %475 = vector.shape_cast %474 : vector<1x1x32xf32> to vector<1x32xf32>
    %476 = vector.broadcast %475 : vector<1x32xf32> to vector<32x32xf32>
    %477 = arith.mulf %476, %473 : vector<32x32xf32>
    %cst_236 = arith.constant dense<0xFF800000> : vector<32xf32>
    %478 = vector.multi_reduction <maximumf>, %477, %cst_236 [0] : vector<32x32xf32> to vector<32xf32>
    %479 = vector.shape_cast %478 : vector<32xf32> to vector<1x32xf32>
    %480 = vector.broadcast %479 : vector<1x32xf32> to vector<32x32xf32>
    %481 = arith.subf %477, %480 : vector<32x32xf32>
    %482 = math.exp %481 : vector<32x32xf32>
    %483 = arith.mulf %482, %473 : vector<32x32xf32>
    %484 = tpu.concatenate %483, %482 in 1 : vector<32x32xf32>, vector<32x32xf32> -> vector<32x64xf32>
    %485 = arith.truncf %484 : vector<32x64xf32> to vector<32x64xbf16>
    %cst_237 = arith.constant dense<0.000000e+00> : vector<16x64xf32>
    %486 = tpu.matmul %63, %485, %cst_237 {dimension_numbers = #tpu.dot_dimension_numbers<[0], [0], [1], [1], [0, 1, 1, 1], [], []>} : vector<32x16xbf16>, vector<32x64xbf16>, vector<16x64xf32> -> vector<16x64xf32>
    %487 = vector.extract_strided_slice %486 {offsets = [0, 0], sizes = [16, 32], strides = [1, 1]} : vector<16x64xf32> to vector<16x32xf32>
    %488 = vector.extract_strided_slice %486 {offsets = [0, 32], sizes = [16, 32], strides = [1, 1]} : vector<16x64xf32> to vector<16x32xf32>
    %cst_238 = arith.constant 0.000000e+00 : f32
    %489 = vector.broadcast %cst_238 : f32 to vector<16x32xf32>
    %490 = arith.cmpf ogt, %488, %489 : vector<16x32xf32>
    %cst_239 = arith.constant 1.000000e-30 : f32
    %491 = vector.broadcast %cst_239 : f32 to vector<16x32xf32>
    %492 = arith.maximumf %488, %491 : vector<16x32xf32>
    %cst_240 = arith.constant 1.000000e+00 : f32
    %493 = vector.broadcast %cst_240 : f32 to vector<16x32xf32>
    %494 = arith.divf %493, %492 : vector<16x32xf32>
    %cst_241 = arith.constant 0.000000e+00 : f32
    %495 = vector.broadcast %cst_241 : f32 to vector<16x32xf32>
    %496 = arith.select %490, %494, %495 : vector<16x32xi1>, vector<16x32xf32>
    %497 = arith.mulf %487, %496 : vector<16x32xf32>
    %498 = arith.addf %497, %466 : vector<16x32xf32>
    %499 = arith.truncf %498 : vector<16x32xf32> to vector<16x32xbf16>
    %c4_242 = arith.constant 4 : index
    %c0_243 = arith.constant 0 : index
    %c0_244 = arith.constant 0 : index
    %500 = vector.load %arg13[%c4_242, %c0_243, %c0_244] : memref<8x32x64xbf16, #tpu.memory_space<vmem>>, vector<1x32x64xbf16>
    %501 = vector.shape_cast %500 : vector<1x32x64xbf16> to vector<32x64xbf16>
    %cst_245 = arith.constant dense<0.000000e+00> : vector<16x64xf32>
    %502 = tpu.matmul %499, %501, %cst_245 {dimension_numbers = #tpu.dot_dimension_numbers<[1], [0], [0], [1], [0, 0, 1, 1], [], []>} : vector<16x32xbf16>, vector<32x64xbf16>, vector<16x64xf32> -> vector<16x64xf32>
    %c4_246 = arith.constant 4 : index
    %c0_247 = arith.constant 0 : index
    %c0_248 = arith.constant 0 : index
    %503 = vector.load %arg16[%c4_246, %c0_247, %c0_248] : memref<8x3x64xf32, #tpu.memory_space<vmem>>, vector<1x1x64xf32>
    %504 = vector.shape_cast %503 : vector<1x1x64xf32> to vector<1x64xf32>
    %505 = vector.broadcast %504 : vector<1x64xf32> to vector<16x64xf32>
    %506 = arith.addf %502, %505 : vector<16x64xf32>
    %c4_249 = arith.constant 4 : index
    %c1_250 = arith.constant 1 : index
    %c0_251 = arith.constant 0 : index
    %507 = vector.load %arg16[%c4_249, %c1_250, %c0_251] : memref<8x3x64xf32, #tpu.memory_space<vmem>>, vector<1x1x64xf32>
    %508 = vector.shape_cast %507 : vector<1x1x64xf32> to vector<1x64xf32>
    %c4_252 = arith.constant 4 : index
    %c2_253 = arith.constant 2 : index
    %c0_254 = arith.constant 0 : index
    %509 = vector.load %arg16[%c4_252, %c2_253, %c0_254] : memref<8x3x64xf32, #tpu.memory_space<vmem>>, vector<1x1x64xf32>
    %510 = vector.shape_cast %509 : vector<1x1x64xf32> to vector<1x64xf32>
    %cst_255 = arith.constant dense<0.000000e+00> : vector<16xf32>
    %511 = vector.multi_reduction <add>, %506, %cst_255 [1] : vector<16x64xf32> to vector<16xf32>
    %512 = vector.shape_cast %511 : vector<16xf32> to vector<16x1xf32>
    %cst_256 = arith.constant 6.400000e+01 : f32
    %513 = vector.broadcast %cst_256 : f32 to vector<16x1xf32>
    %514 = arith.divf %512, %513 : vector<16x1xf32>
    %515 = vector.broadcast %514 : vector<16x1xf32> to vector<16x64xf32>
    %516 = arith.subf %506, %515 : vector<16x64xf32>
    %517 = arith.mulf %516, %516 : vector<16x64xf32>
    %cst_257 = arith.constant dense<0.000000e+00> : vector<16xf32>
    %518 = vector.multi_reduction <add>, %517, %cst_257 [1] : vector<16x64xf32> to vector<16xf32>
    %519 = vector.shape_cast %518 : vector<16xf32> to vector<16x1xf32>
    %cst_258 = arith.constant 6.400000e+01 : f32
    %520 = vector.broadcast %cst_258 : f32 to vector<16x1xf32>
    %521 = arith.divf %519, %520 : vector<16x1xf32>
    %cst_259 = arith.constant 9.99999974E-6 : f32
    %522 = vector.broadcast %cst_259 : f32 to vector<16x1xf32>
    %523 = arith.addf %521, %522 : vector<16x1xf32>
    %524 = math.rsqrt %523 : vector<16x1xf32>
    %525 = vector.broadcast %524 : vector<16x1xf32> to vector<16x64xf32>
    %526 = arith.mulf %516, %525 : vector<16x64xf32>
    %527 = vector.broadcast %508 : vector<1x64xf32> to vector<16x64xf32>
    %528 = arith.mulf %526, %527 : vector<16x64xf32>
    %529 = vector.broadcast %510 : vector<1x64xf32> to vector<16x64xf32>
    %530 = arith.addf %528, %529 : vector<16x64xf32>
    %cst_260 = arith.constant 0.000000e+00 : f32
    %531 = vector.broadcast %cst_260 : f32 to vector<16x64xf32>
    %532 = arith.maximumf %530, %531 : vector<16x64xf32>
    %533 = arith.truncf %532 : vector<16x64xf32> to vector<16x64xbf16>
    %c4_261 = arith.constant 4 : index
    %c0_262 = arith.constant 0 : index
    %c0_263 = arith.constant 0 : index
    %534 = vector.load %arg14[%c4_261, %c0_262, %c0_263] : memref<8x64x32xbf16, #tpu.memory_space<vmem>>, vector<1x64x32xbf16>
    %535 = vector.shape_cast %534 : vector<1x64x32xbf16> to vector<64x32xbf16>
    %cst_264 = arith.constant dense<0.000000e+00> : vector<16x32xf32>
    %536 = tpu.matmul %533, %535, %cst_264 {dimension_numbers = #tpu.dot_dimension_numbers<[1], [0], [0], [1], [0, 0, 1, 1], [], []>} : vector<16x64xbf16>, vector<64x32xbf16>, vector<16x32xf32> -> vector<16x32xf32>
    %c4_265 = arith.constant 4 : index
    %c3_266 = arith.constant 3 : index
    %c0_267 = arith.constant 0 : index
    %537 = vector.load %arg15[%c4_265, %c3_266, %c0_267] : memref<8x4x32xf32, #tpu.memory_space<vmem>>, vector<1x1x32xf32>
    %538 = vector.shape_cast %537 : vector<1x1x32xf32> to vector<1x32xf32>
    %539 = vector.broadcast %538 : vector<1x32xf32> to vector<16x32xf32>
    %540 = arith.addf %536, %539 : vector<16x32xf32>
    %541 = arith.addf %440, %540 : vector<16x32xf32>
    %c5 = arith.constant 5 : index
    %c1_268 = arith.constant 1 : index
    %c0_269 = arith.constant 0 : index
    %542 = vector.load %arg15[%c5, %c1_268, %c0_269] : memref<8x4x32xf32, #tpu.memory_space<vmem>>, vector<1x1x32xf32>
    %543 = vector.shape_cast %542 : vector<1x1x32xf32> to vector<1x32xf32>
    %c5_270 = arith.constant 5 : index
    %c2_271 = arith.constant 2 : index
    %c0_272 = arith.constant 0 : index
    %544 = vector.load %arg15[%c5_270, %c2_271, %c0_272] : memref<8x4x32xf32, #tpu.memory_space<vmem>>, vector<1x1x32xf32>
    %545 = vector.shape_cast %544 : vector<1x1x32xf32> to vector<1x32xf32>
    %cst_273 = arith.constant dense<0.000000e+00> : vector<16xf32>
    %546 = vector.multi_reduction <add>, %541, %cst_273 [1] : vector<16x32xf32> to vector<16xf32>
    %547 = vector.shape_cast %546 : vector<16xf32> to vector<16x1xf32>
    %cst_274 = arith.constant 3.200000e+01 : f32
    %548 = vector.broadcast %cst_274 : f32 to vector<16x1xf32>
    %549 = arith.divf %547, %548 : vector<16x1xf32>
    %550 = vector.broadcast %549 : vector<16x1xf32> to vector<16x32xf32>
    %551 = arith.subf %541, %550 : vector<16x32xf32>
    %552 = arith.mulf %551, %551 : vector<16x32xf32>
    %cst_275 = arith.constant dense<0.000000e+00> : vector<16xf32>
    %553 = vector.multi_reduction <add>, %552, %cst_275 [1] : vector<16x32xf32> to vector<16xf32>
    %554 = vector.shape_cast %553 : vector<16xf32> to vector<16x1xf32>
    %cst_276 = arith.constant 3.200000e+01 : f32
    %555 = vector.broadcast %cst_276 : f32 to vector<16x1xf32>
    %556 = arith.divf %554, %555 : vector<16x1xf32>
    %cst_277 = arith.constant 9.99999974E-6 : f32
    %557 = vector.broadcast %cst_277 : f32 to vector<16x1xf32>
    %558 = arith.addf %556, %557 : vector<16x1xf32>
    %559 = math.rsqrt %558 : vector<16x1xf32>
    %560 = vector.broadcast %559 : vector<16x1xf32> to vector<16x32xf32>
    %561 = arith.mulf %551, %560 : vector<16x32xf32>
    %562 = vector.broadcast %543 : vector<1x32xf32> to vector<16x32xf32>
    %563 = arith.mulf %561, %562 : vector<16x32xf32>
    %564 = vector.broadcast %545 : vector<1x32xf32> to vector<16x32xf32>
    %565 = arith.addf %563, %564 : vector<16x32xf32>
    %cst_278 = arith.constant 0.000000e+00 : f32
    %566 = vector.broadcast %cst_278 : f32 to vector<16x32xf32>
    %567 = arith.maximumf %565, %566 : vector<16x32xf32>
    %568 = arith.truncf %567 : vector<16x32xf32> to vector<16x32xbf16>
    %cst_279 = arith.constant dense<0.000000e+00> : vector<32x32xf32>
    %569 = tpu.matmul %62, %568, %cst_279 {dimension_numbers = #tpu.dot_dimension_numbers<[1], [0], [0], [1], [0, 0, 1, 1], [], []>} : vector<32x16xbf16>, vector<16x32xbf16>, vector<32x32xf32> -> vector<32x32xf32>
    %570 = arith.addf %569, %61 : vector<32x32xf32>
    %cst_280 = arith.constant 0.000000e+00 : f32
    %571 = vector.broadcast %cst_280 : f32 to vector<32x32xf32>
    %572 = arith.maximumf %570, %571 : vector<32x32xf32>
    %cst_281 = arith.constant 1.000000e-07 : f32
    %573 = vector.broadcast %cst_281 : f32 to vector<32x32xf32>
    %574 = arith.addf %572, %573 : vector<32x32xf32>
    %c5_282 = arith.constant 5 : index
    %c0_283 = arith.constant 0 : index
    %c0_284 = arith.constant 0 : index
    %575 = vector.load %arg15[%c5_282, %c0_283, %c0_284] : memref<8x4x32xf32, #tpu.memory_space<vmem>>, vector<1x1x32xf32>
    %576 = vector.shape_cast %575 : vector<1x1x32xf32> to vector<1x32xf32>
    %577 = vector.broadcast %576 : vector<1x32xf32> to vector<32x32xf32>
    %578 = arith.mulf %577, %574 : vector<32x32xf32>
    %cst_285 = arith.constant dense<0xFF800000> : vector<32xf32>
    %579 = vector.multi_reduction <maximumf>, %578, %cst_285 [0] : vector<32x32xf32> to vector<32xf32>
    %580 = vector.shape_cast %579 : vector<32xf32> to vector<1x32xf32>
    %581 = vector.broadcast %580 : vector<1x32xf32> to vector<32x32xf32>
    %582 = arith.subf %578, %581 : vector<32x32xf32>
    %583 = math.exp %582 : vector<32x32xf32>
    %584 = arith.mulf %583, %574 : vector<32x32xf32>
    %585 = tpu.concatenate %584, %583 in 1 : vector<32x32xf32>, vector<32x32xf32> -> vector<32x64xf32>
    %586 = arith.truncf %585 : vector<32x64xf32> to vector<32x64xbf16>
    %cst_286 = arith.constant dense<0.000000e+00> : vector<16x64xf32>
    %587 = tpu.matmul %63, %586, %cst_286 {dimension_numbers = #tpu.dot_dimension_numbers<[0], [0], [1], [1], [0, 1, 1, 1], [], []>} : vector<32x16xbf16>, vector<32x64xbf16>, vector<16x64xf32> -> vector<16x64xf32>
    %588 = vector.extract_strided_slice %587 {offsets = [0, 0], sizes = [16, 32], strides = [1, 1]} : vector<16x64xf32> to vector<16x32xf32>
    %589 = vector.extract_strided_slice %587 {offsets = [0, 32], sizes = [16, 32], strides = [1, 1]} : vector<16x64xf32> to vector<16x32xf32>
    %cst_287 = arith.constant 0.000000e+00 : f32
    %590 = vector.broadcast %cst_287 : f32 to vector<16x32xf32>
    %591 = arith.cmpf ogt, %589, %590 : vector<16x32xf32>
    %cst_288 = arith.constant 1.000000e-30 : f32
    %592 = vector.broadcast %cst_288 : f32 to vector<16x32xf32>
    %593 = arith.maximumf %589, %592 : vector<16x32xf32>
    %cst_289 = arith.constant 1.000000e+00 : f32
    %594 = vector.broadcast %cst_289 : f32 to vector<16x32xf32>
    %595 = arith.divf %594, %593 : vector<16x32xf32>
    %cst_290 = arith.constant 0.000000e+00 : f32
    %596 = vector.broadcast %cst_290 : f32 to vector<16x32xf32>
    %597 = arith.select %591, %595, %596 : vector<16x32xi1>, vector<16x32xf32>
    %598 = arith.mulf %588, %597 : vector<16x32xf32>
    %599 = arith.addf %598, %567 : vector<16x32xf32>
    %600 = arith.truncf %599 : vector<16x32xf32> to vector<16x32xbf16>
    %c5_291 = arith.constant 5 : index
    %c0_292 = arith.constant 0 : index
    %c0_293 = arith.constant 0 : index
    %601 = vector.load %arg13[%c5_291, %c0_292, %c0_293] : memref<8x32x64xbf16, #tpu.memory_space<vmem>>, vector<1x32x64xbf16>
    %602 = vector.shape_cast %601 : vector<1x32x64xbf16> to vector<32x64xbf16>
    %cst_294 = arith.constant dense<0.000000e+00> : vector<16x64xf32>
    %603 = tpu.matmul %600, %602, %cst_294 {dimension_numbers = #tpu.dot_dimension_numbers<[1], [0], [0], [1], [0, 0, 1, 1], [], []>} : vector<16x32xbf16>, vector<32x64xbf16>, vector<16x64xf32> -> vector<16x64xf32>
    %c5_295 = arith.constant 5 : index
    %c0_296 = arith.constant 0 : index
    %c0_297 = arith.constant 0 : index
    %604 = vector.load %arg16[%c5_295, %c0_296, %c0_297] : memref<8x3x64xf32, #tpu.memory_space<vmem>>, vector<1x1x64xf32>
    %605 = vector.shape_cast %604 : vector<1x1x64xf32> to vector<1x64xf32>
    %606 = vector.broadcast %605 : vector<1x64xf32> to vector<16x64xf32>
    %607 = arith.addf %603, %606 : vector<16x64xf32>
    %c5_298 = arith.constant 5 : index
    %c1_299 = arith.constant 1 : index
    %c0_300 = arith.constant 0 : index
    %608 = vector.load %arg16[%c5_298, %c1_299, %c0_300] : memref<8x3x64xf32, #tpu.memory_space<vmem>>, vector<1x1x64xf32>
    %609 = vector.shape_cast %608 : vector<1x1x64xf32> to vector<1x64xf32>
    %c5_301 = arith.constant 5 : index
    %c2_302 = arith.constant 2 : index
    %c0_303 = arith.constant 0 : index
    %610 = vector.load %arg16[%c5_301, %c2_302, %c0_303] : memref<8x3x64xf32, #tpu.memory_space<vmem>>, vector<1x1x64xf32>
    %611 = vector.shape_cast %610 : vector<1x1x64xf32> to vector<1x64xf32>
    %cst_304 = arith.constant dense<0.000000e+00> : vector<16xf32>
    %612 = vector.multi_reduction <add>, %607, %cst_304 [1] : vector<16x64xf32> to vector<16xf32>
    %613 = vector.shape_cast %612 : vector<16xf32> to vector<16x1xf32>
    %cst_305 = arith.constant 6.400000e+01 : f32
    %614 = vector.broadcast %cst_305 : f32 to vector<16x1xf32>
    %615 = arith.divf %613, %614 : vector<16x1xf32>
    %616 = vector.broadcast %615 : vector<16x1xf32> to vector<16x64xf32>
    %617 = arith.subf %607, %616 : vector<16x64xf32>
    %618 = arith.mulf %617, %617 : vector<16x64xf32>
    %cst_306 = arith.constant dense<0.000000e+00> : vector<16xf32>
    %619 = vector.multi_reduction <add>, %618, %cst_306 [1] : vector<16x64xf32> to vector<16xf32>
    %620 = vector.shape_cast %619 : vector<16xf32> to vector<16x1xf32>
    %cst_307 = arith.constant 6.400000e+01 : f32
    %621 = vector.broadcast %cst_307 : f32 to vector<16x1xf32>
    %622 = arith.divf %620, %621 : vector<16x1xf32>
    %cst_308 = arith.constant 9.99999974E-6 : f32
    %623 = vector.broadcast %cst_308 : f32 to vector<16x1xf32>
    %624 = arith.addf %622, %623 : vector<16x1xf32>
    %625 = math.rsqrt %624 : vector<16x1xf32>
    %626 = vector.broadcast %625 : vector<16x1xf32> to vector<16x64xf32>
    %627 = arith.mulf %617, %626 : vector<16x64xf32>
    %628 = vector.broadcast %609 : vector<1x64xf32> to vector<16x64xf32>
    %629 = arith.mulf %627, %628 : vector<16x64xf32>
    %630 = vector.broadcast %611 : vector<1x64xf32> to vector<16x64xf32>
    %631 = arith.addf %629, %630 : vector<16x64xf32>
    %cst_309 = arith.constant 0.000000e+00 : f32
    %632 = vector.broadcast %cst_309 : f32 to vector<16x64xf32>
    %633 = arith.maximumf %631, %632 : vector<16x64xf32>
    %634 = arith.truncf %633 : vector<16x64xf32> to vector<16x64xbf16>
    %c5_310 = arith.constant 5 : index
    %c0_311 = arith.constant 0 : index
    %c0_312 = arith.constant 0 : index
    %635 = vector.load %arg14[%c5_310, %c0_311, %c0_312] : memref<8x64x32xbf16, #tpu.memory_space<vmem>>, vector<1x64x32xbf16>
    %636 = vector.shape_cast %635 : vector<1x64x32xbf16> to vector<64x32xbf16>
    %cst_313 = arith.constant dense<0.000000e+00> : vector<16x32xf32>
    %637 = tpu.matmul %634, %636, %cst_313 {dimension_numbers = #tpu.dot_dimension_numbers<[1], [0], [0], [1], [0, 0, 1, 1], [], []>} : vector<16x64xbf16>, vector<64x32xbf16>, vector<16x32xf32> -> vector<16x32xf32>
    %c5_314 = arith.constant 5 : index
    %c3_315 = arith.constant 3 : index
    %c0_316 = arith.constant 0 : index
    %638 = vector.load %arg15[%c5_314, %c3_315, %c0_316] : memref<8x4x32xf32, #tpu.memory_space<vmem>>, vector<1x1x32xf32>
    %639 = vector.shape_cast %638 : vector<1x1x32xf32> to vector<1x32xf32>
    %640 = vector.broadcast %639 : vector<1x32xf32> to vector<16x32xf32>
    %641 = arith.addf %637, %640 : vector<16x32xf32>
    %642 = arith.addf %541, %641 : vector<16x32xf32>
    %c6 = arith.constant 6 : index
    %c1_317 = arith.constant 1 : index
    %c0_318 = arith.constant 0 : index
    %643 = vector.load %arg15[%c6, %c1_317, %c0_318] : memref<8x4x32xf32, #tpu.memory_space<vmem>>, vector<1x1x32xf32>
    %644 = vector.shape_cast %643 : vector<1x1x32xf32> to vector<1x32xf32>
    %c6_319 = arith.constant 6 : index
    %c2_320 = arith.constant 2 : index
    %c0_321 = arith.constant 0 : index
    %645 = vector.load %arg15[%c6_319, %c2_320, %c0_321] : memref<8x4x32xf32, #tpu.memory_space<vmem>>, vector<1x1x32xf32>
    %646 = vector.shape_cast %645 : vector<1x1x32xf32> to vector<1x32xf32>
    %cst_322 = arith.constant dense<0.000000e+00> : vector<16xf32>
    %647 = vector.multi_reduction <add>, %642, %cst_322 [1] : vector<16x32xf32> to vector<16xf32>
    %648 = vector.shape_cast %647 : vector<16xf32> to vector<16x1xf32>
    %cst_323 = arith.constant 3.200000e+01 : f32
    %649 = vector.broadcast %cst_323 : f32 to vector<16x1xf32>
    %650 = arith.divf %648, %649 : vector<16x1xf32>
    %651 = vector.broadcast %650 : vector<16x1xf32> to vector<16x32xf32>
    %652 = arith.subf %642, %651 : vector<16x32xf32>
    %653 = arith.mulf %652, %652 : vector<16x32xf32>
    %cst_324 = arith.constant dense<0.000000e+00> : vector<16xf32>
    %654 = vector.multi_reduction <add>, %653, %cst_324 [1] : vector<16x32xf32> to vector<16xf32>
    %655 = vector.shape_cast %654 : vector<16xf32> to vector<16x1xf32>
    %cst_325 = arith.constant 3.200000e+01 : f32
    %656 = vector.broadcast %cst_325 : f32 to vector<16x1xf32>
    %657 = arith.divf %655, %656 : vector<16x1xf32>
    %cst_326 = arith.constant 9.99999974E-6 : f32
    %658 = vector.broadcast %cst_326 : f32 to vector<16x1xf32>
    %659 = arith.addf %657, %658 : vector<16x1xf32>
    %660 = math.rsqrt %659 : vector<16x1xf32>
    %661 = vector.broadcast %660 : vector<16x1xf32> to vector<16x32xf32>
    %662 = arith.mulf %652, %661 : vector<16x32xf32>
    %663 = vector.broadcast %644 : vector<1x32xf32> to vector<16x32xf32>
    %664 = arith.mulf %662, %663 : vector<16x32xf32>
    %665 = vector.broadcast %646 : vector<1x32xf32> to vector<16x32xf32>
    %666 = arith.addf %664, %665 : vector<16x32xf32>
    %cst_327 = arith.constant 0.000000e+00 : f32
    %667 = vector.broadcast %cst_327 : f32 to vector<16x32xf32>
    %668 = arith.maximumf %666, %667 : vector<16x32xf32>
    %669 = arith.truncf %668 : vector<16x32xf32> to vector<16x32xbf16>
    %cst_328 = arith.constant dense<0.000000e+00> : vector<32x32xf32>
    %670 = tpu.matmul %62, %669, %cst_328 {dimension_numbers = #tpu.dot_dimension_numbers<[1], [0], [0], [1], [0, 0, 1, 1], [], []>} : vector<32x16xbf16>, vector<16x32xbf16>, vector<32x32xf32> -> vector<32x32xf32>
    %671 = arith.addf %670, %61 : vector<32x32xf32>
    %cst_329 = arith.constant 0.000000e+00 : f32
    %672 = vector.broadcast %cst_329 : f32 to vector<32x32xf32>
    %673 = arith.maximumf %671, %672 : vector<32x32xf32>
    %cst_330 = arith.constant 1.000000e-07 : f32
    %674 = vector.broadcast %cst_330 : f32 to vector<32x32xf32>
    %675 = arith.addf %673, %674 : vector<32x32xf32>
    %c6_331 = arith.constant 6 : index
    %c0_332 = arith.constant 0 : index
    %c0_333 = arith.constant 0 : index
    %676 = vector.load %arg15[%c6_331, %c0_332, %c0_333] : memref<8x4x32xf32, #tpu.memory_space<vmem>>, vector<1x1x32xf32>
    %677 = vector.shape_cast %676 : vector<1x1x32xf32> to vector<1x32xf32>
    %678 = vector.broadcast %677 : vector<1x32xf32> to vector<32x32xf32>
    %679 = arith.mulf %678, %675 : vector<32x32xf32>
    %cst_334 = arith.constant dense<0xFF800000> : vector<32xf32>
    %680 = vector.multi_reduction <maximumf>, %679, %cst_334 [0] : vector<32x32xf32> to vector<32xf32>
    %681 = vector.shape_cast %680 : vector<32xf32> to vector<1x32xf32>
    %682 = vector.broadcast %681 : vector<1x32xf32> to vector<32x32xf32>
    %683 = arith.subf %679, %682 : vector<32x32xf32>
    %684 = math.exp %683 : vector<32x32xf32>
    %685 = arith.mulf %684, %675 : vector<32x32xf32>
    %686 = tpu.concatenate %685, %684 in 1 : vector<32x32xf32>, vector<32x32xf32> -> vector<32x64xf32>
    %687 = arith.truncf %686 : vector<32x64xf32> to vector<32x64xbf16>
    %cst_335 = arith.constant dense<0.000000e+00> : vector<16x64xf32>
    %688 = tpu.matmul %63, %687, %cst_335 {dimension_numbers = #tpu.dot_dimension_numbers<[0], [0], [1], [1], [0, 1, 1, 1], [], []>} : vector<32x16xbf16>, vector<32x64xbf16>, vector<16x64xf32> -> vector<16x64xf32>
    %689 = vector.extract_strided_slice %688 {offsets = [0, 0], sizes = [16, 32], strides = [1, 1]} : vector<16x64xf32> to vector<16x32xf32>
    %690 = vector.extract_strided_slice %688 {offsets = [0, 32], sizes = [16, 32], strides = [1, 1]} : vector<16x64xf32> to vector<16x32xf32>
    %cst_336 = arith.constant 0.000000e+00 : f32
    %691 = vector.broadcast %cst_336 : f32 to vector<16x32xf32>
    %692 = arith.cmpf ogt, %690, %691 : vector<16x32xf32>
    %cst_337 = arith.constant 1.000000e-30 : f32
    %693 = vector.broadcast %cst_337 : f32 to vector<16x32xf32>
    %694 = arith.maximumf %690, %693 : vector<16x32xf32>
    %cst_338 = arith.constant 1.000000e+00 : f32
    %695 = vector.broadcast %cst_338 : f32 to vector<16x32xf32>
    %696 = arith.divf %695, %694 : vector<16x32xf32>
    %cst_339 = arith.constant 0.000000e+00 : f32
    %697 = vector.broadcast %cst_339 : f32 to vector<16x32xf32>
    %698 = arith.select %692, %696, %697 : vector<16x32xi1>, vector<16x32xf32>
    %699 = arith.mulf %689, %698 : vector<16x32xf32>
    %700 = arith.addf %699, %668 : vector<16x32xf32>
    %701 = arith.truncf %700 : vector<16x32xf32> to vector<16x32xbf16>
    %c6_340 = arith.constant 6 : index
    %c0_341 = arith.constant 0 : index
    %c0_342 = arith.constant 0 : index
    %702 = vector.load %arg13[%c6_340, %c0_341, %c0_342] : memref<8x32x64xbf16, #tpu.memory_space<vmem>>, vector<1x32x64xbf16>
    %703 = vector.shape_cast %702 : vector<1x32x64xbf16> to vector<32x64xbf16>
    %cst_343 = arith.constant dense<0.000000e+00> : vector<16x64xf32>
    %704 = tpu.matmul %701, %703, %cst_343 {dimension_numbers = #tpu.dot_dimension_numbers<[1], [0], [0], [1], [0, 0, 1, 1], [], []>} : vector<16x32xbf16>, vector<32x64xbf16>, vector<16x64xf32> -> vector<16x64xf32>
    %c6_344 = arith.constant 6 : index
    %c0_345 = arith.constant 0 : index
    %c0_346 = arith.constant 0 : index
    %705 = vector.load %arg16[%c6_344, %c0_345, %c0_346] : memref<8x3x64xf32, #tpu.memory_space<vmem>>, vector<1x1x64xf32>
    %706 = vector.shape_cast %705 : vector<1x1x64xf32> to vector<1x64xf32>
    %707 = vector.broadcast %706 : vector<1x64xf32> to vector<16x64xf32>
    %708 = arith.addf %704, %707 : vector<16x64xf32>
    %c6_347 = arith.constant 6 : index
    %c1_348 = arith.constant 1 : index
    %c0_349 = arith.constant 0 : index
    %709 = vector.load %arg16[%c6_347, %c1_348, %c0_349] : memref<8x3x64xf32, #tpu.memory_space<vmem>>, vector<1x1x64xf32>
    %710 = vector.shape_cast %709 : vector<1x1x64xf32> to vector<1x64xf32>
    %c6_350 = arith.constant 6 : index
    %c2_351 = arith.constant 2 : index
    %c0_352 = arith.constant 0 : index
    %711 = vector.load %arg16[%c6_350, %c2_351, %c0_352] : memref<8x3x64xf32, #tpu.memory_space<vmem>>, vector<1x1x64xf32>
    %712 = vector.shape_cast %711 : vector<1x1x64xf32> to vector<1x64xf32>
    %cst_353 = arith.constant dense<0.000000e+00> : vector<16xf32>
    %713 = vector.multi_reduction <add>, %708, %cst_353 [1] : vector<16x64xf32> to vector<16xf32>
    %714 = vector.shape_cast %713 : vector<16xf32> to vector<16x1xf32>
    %cst_354 = arith.constant 6.400000e+01 : f32
    %715 = vector.broadcast %cst_354 : f32 to vector<16x1xf32>
    %716 = arith.divf %714, %715 : vector<16x1xf32>
    %717 = vector.broadcast %716 : vector<16x1xf32> to vector<16x64xf32>
    %718 = arith.subf %708, %717 : vector<16x64xf32>
    %719 = arith.mulf %718, %718 : vector<16x64xf32>
    %cst_355 = arith.constant dense<0.000000e+00> : vector<16xf32>
    %720 = vector.multi_reduction <add>, %719, %cst_355 [1] : vector<16x64xf32> to vector<16xf32>
    %721 = vector.shape_cast %720 : vector<16xf32> to vector<16x1xf32>
    %cst_356 = arith.constant 6.400000e+01 : f32
    %722 = vector.broadcast %cst_356 : f32 to vector<16x1xf32>
    %723 = arith.divf %721, %722 : vector<16x1xf32>
    %cst_357 = arith.constant 9.99999974E-6 : f32
    %724 = vector.broadcast %cst_357 : f32 to vector<16x1xf32>
    %725 = arith.addf %723, %724 : vector<16x1xf32>
    %726 = math.rsqrt %725 : vector<16x1xf32>
    %727 = vector.broadcast %726 : vector<16x1xf32> to vector<16x64xf32>
    %728 = arith.mulf %718, %727 : vector<16x64xf32>
    %729 = vector.broadcast %710 : vector<1x64xf32> to vector<16x64xf32>
    %730 = arith.mulf %728, %729 : vector<16x64xf32>
    %731 = vector.broadcast %712 : vector<1x64xf32> to vector<16x64xf32>
    %732 = arith.addf %730, %731 : vector<16x64xf32>
    %cst_358 = arith.constant 0.000000e+00 : f32
    %733 = vector.broadcast %cst_358 : f32 to vector<16x64xf32>
    %734 = arith.maximumf %732, %733 : vector<16x64xf32>
    %735 = arith.truncf %734 : vector<16x64xf32> to vector<16x64xbf16>
    %c6_359 = arith.constant 6 : index
    %c0_360 = arith.constant 0 : index
    %c0_361 = arith.constant 0 : index
    %736 = vector.load %arg14[%c6_359, %c0_360, %c0_361] : memref<8x64x32xbf16, #tpu.memory_space<vmem>>, vector<1x64x32xbf16>
    %737 = vector.shape_cast %736 : vector<1x64x32xbf16> to vector<64x32xbf16>
    %cst_362 = arith.constant dense<0.000000e+00> : vector<16x32xf32>
    %738 = tpu.matmul %735, %737, %cst_362 {dimension_numbers = #tpu.dot_dimension_numbers<[1], [0], [0], [1], [0, 0, 1, 1], [], []>} : vector<16x64xbf16>, vector<64x32xbf16>, vector<16x32xf32> -> vector<16x32xf32>
    %c6_363 = arith.constant 6 : index
    %c3_364 = arith.constant 3 : index
    %c0_365 = arith.constant 0 : index
    %739 = vector.load %arg15[%c6_363, %c3_364, %c0_365] : memref<8x4x32xf32, #tpu.memory_space<vmem>>, vector<1x1x32xf32>
    %740 = vector.shape_cast %739 : vector<1x1x32xf32> to vector<1x32xf32>
    %741 = vector.broadcast %740 : vector<1x32xf32> to vector<16x32xf32>
    %742 = arith.addf %738, %741 : vector<16x32xf32>
    %743 = arith.addf %642, %742 : vector<16x32xf32>
    %c7 = arith.constant 7 : index
    %c1_366 = arith.constant 1 : index
    %c0_367 = arith.constant 0 : index
    %744 = vector.load %arg15[%c7, %c1_366, %c0_367] : memref<8x4x32xf32, #tpu.memory_space<vmem>>, vector<1x1x32xf32>
    %745 = vector.shape_cast %744 : vector<1x1x32xf32> to vector<1x32xf32>
    %c7_368 = arith.constant 7 : index
    %c2_369 = arith.constant 2 : index
    %c0_370 = arith.constant 0 : index
    %746 = vector.load %arg15[%c7_368, %c2_369, %c0_370] : memref<8x4x32xf32, #tpu.memory_space<vmem>>, vector<1x1x32xf32>
    %747 = vector.shape_cast %746 : vector<1x1x32xf32> to vector<1x32xf32>
    %cst_371 = arith.constant dense<0.000000e+00> : vector<16xf32>
    %748 = vector.multi_reduction <add>, %743, %cst_371 [1] : vector<16x32xf32> to vector<16xf32>
    %749 = vector.shape_cast %748 : vector<16xf32> to vector<16x1xf32>
    %cst_372 = arith.constant 3.200000e+01 : f32
    %750 = vector.broadcast %cst_372 : f32 to vector<16x1xf32>
    %751 = arith.divf %749, %750 : vector<16x1xf32>
    %752 = vector.broadcast %751 : vector<16x1xf32> to vector<16x32xf32>
    %753 = arith.subf %743, %752 : vector<16x32xf32>
    %754 = arith.mulf %753, %753 : vector<16x32xf32>
    %cst_373 = arith.constant dense<0.000000e+00> : vector<16xf32>
    %755 = vector.multi_reduction <add>, %754, %cst_373 [1] : vector<16x32xf32> to vector<16xf32>
    %756 = vector.shape_cast %755 : vector<16xf32> to vector<16x1xf32>
    %cst_374 = arith.constant 3.200000e+01 : f32
    %757 = vector.broadcast %cst_374 : f32 to vector<16x1xf32>
    %758 = arith.divf %756, %757 : vector<16x1xf32>
    %cst_375 = arith.constant 9.99999974E-6 : f32
    %759 = vector.broadcast %cst_375 : f32 to vector<16x1xf32>
    %760 = arith.addf %758, %759 : vector<16x1xf32>
    %761 = math.rsqrt %760 : vector<16x1xf32>
    %762 = vector.broadcast %761 : vector<16x1xf32> to vector<16x32xf32>
    %763 = arith.mulf %753, %762 : vector<16x32xf32>
    %764 = vector.broadcast %745 : vector<1x32xf32> to vector<16x32xf32>
    %765 = arith.mulf %763, %764 : vector<16x32xf32>
    %766 = vector.broadcast %747 : vector<1x32xf32> to vector<16x32xf32>
    %767 = arith.addf %765, %766 : vector<16x32xf32>
    %cst_376 = arith.constant 0.000000e+00 : f32
    %768 = vector.broadcast %cst_376 : f32 to vector<16x32xf32>
    %769 = arith.maximumf %767, %768 : vector<16x32xf32>
    %770 = arith.truncf %769 : vector<16x32xf32> to vector<16x32xbf16>
    %cst_377 = arith.constant dense<0.000000e+00> : vector<32x32xf32>
    %771 = tpu.matmul %62, %770, %cst_377 {dimension_numbers = #tpu.dot_dimension_numbers<[1], [0], [0], [1], [0, 0, 1, 1], [], []>} : vector<32x16xbf16>, vector<16x32xbf16>, vector<32x32xf32> -> vector<32x32xf32>
    %772 = arith.addf %771, %61 : vector<32x32xf32>
    %cst_378 = arith.constant 0.000000e+00 : f32
    %773 = vector.broadcast %cst_378 : f32 to vector<32x32xf32>
    %774 = arith.maximumf %772, %773 : vector<32x32xf32>
    %cst_379 = arith.constant 1.000000e-07 : f32
    %775 = vector.broadcast %cst_379 : f32 to vector<32x32xf32>
    %776 = arith.addf %774, %775 : vector<32x32xf32>
    %c7_380 = arith.constant 7 : index
    %c0_381 = arith.constant 0 : index
    %c0_382 = arith.constant 0 : index
    %777 = vector.load %arg15[%c7_380, %c0_381, %c0_382] : memref<8x4x32xf32, #tpu.memory_space<vmem>>, vector<1x1x32xf32>
    %778 = vector.shape_cast %777 : vector<1x1x32xf32> to vector<1x32xf32>
    %779 = vector.broadcast %778 : vector<1x32xf32> to vector<32x32xf32>
    %780 = arith.mulf %779, %776 : vector<32x32xf32>
    %cst_383 = arith.constant dense<0xFF800000> : vector<32xf32>
    %781 = vector.multi_reduction <maximumf>, %780, %cst_383 [0] : vector<32x32xf32> to vector<32xf32>
    %782 = vector.shape_cast %781 : vector<32xf32> to vector<1x32xf32>
    %783 = vector.broadcast %782 : vector<1x32xf32> to vector<32x32xf32>
    %784 = arith.subf %780, %783 : vector<32x32xf32>
    %785 = math.exp %784 : vector<32x32xf32>
    %786 = arith.mulf %785, %776 : vector<32x32xf32>
    %787 = tpu.concatenate %786, %785 in 1 : vector<32x32xf32>, vector<32x32xf32> -> vector<32x64xf32>
    %788 = arith.truncf %787 : vector<32x64xf32> to vector<32x64xbf16>
    %cst_384 = arith.constant dense<0.000000e+00> : vector<16x64xf32>
    %789 = tpu.matmul %63, %788, %cst_384 {dimension_numbers = #tpu.dot_dimension_numbers<[0], [0], [1], [1], [0, 1, 1, 1], [], []>} : vector<32x16xbf16>, vector<32x64xbf16>, vector<16x64xf32> -> vector<16x64xf32>
    %790 = vector.extract_strided_slice %789 {offsets = [0, 0], sizes = [16, 32], strides = [1, 1]} : vector<16x64xf32> to vector<16x32xf32>
    %791 = vector.extract_strided_slice %789 {offsets = [0, 32], sizes = [16, 32], strides = [1, 1]} : vector<16x64xf32> to vector<16x32xf32>
    %cst_385 = arith.constant 0.000000e+00 : f32
    %792 = vector.broadcast %cst_385 : f32 to vector<16x32xf32>
    %793 = arith.cmpf ogt, %791, %792 : vector<16x32xf32>
    %cst_386 = arith.constant 1.000000e-30 : f32
    %794 = vector.broadcast %cst_386 : f32 to vector<16x32xf32>
    %795 = arith.maximumf %791, %794 : vector<16x32xf32>
    %cst_387 = arith.constant 1.000000e+00 : f32
    %796 = vector.broadcast %cst_387 : f32 to vector<16x32xf32>
    %797 = arith.divf %796, %795 : vector<16x32xf32>
    %cst_388 = arith.constant 0.000000e+00 : f32
    %798 = vector.broadcast %cst_388 : f32 to vector<16x32xf32>
    %799 = arith.select %793, %797, %798 : vector<16x32xi1>, vector<16x32xf32>
    %800 = arith.mulf %790, %799 : vector<16x32xf32>
    %801 = arith.addf %800, %769 : vector<16x32xf32>
    %802 = arith.truncf %801 : vector<16x32xf32> to vector<16x32xbf16>
    %c7_389 = arith.constant 7 : index
    %c0_390 = arith.constant 0 : index
    %c0_391 = arith.constant 0 : index
    %803 = vector.load %arg13[%c7_389, %c0_390, %c0_391] : memref<8x32x64xbf16, #tpu.memory_space<vmem>>, vector<1x32x64xbf16>
    %804 = vector.shape_cast %803 : vector<1x32x64xbf16> to vector<32x64xbf16>
    %cst_392 = arith.constant dense<0.000000e+00> : vector<16x64xf32>
    %805 = tpu.matmul %802, %804, %cst_392 {dimension_numbers = #tpu.dot_dimension_numbers<[1], [0], [0], [1], [0, 0, 1, 1], [], []>} : vector<16x32xbf16>, vector<32x64xbf16>, vector<16x64xf32> -> vector<16x64xf32>
    %c7_393 = arith.constant 7 : index
    %c0_394 = arith.constant 0 : index
    %c0_395 = arith.constant 0 : index
    %806 = vector.load %arg16[%c7_393, %c0_394, %c0_395] : memref<8x3x64xf32, #tpu.memory_space<vmem>>, vector<1x1x64xf32>
    %807 = vector.shape_cast %806 : vector<1x1x64xf32> to vector<1x64xf32>
    %808 = vector.broadcast %807 : vector<1x64xf32> to vector<16x64xf32>
    %809 = arith.addf %805, %808 : vector<16x64xf32>
    %c7_396 = arith.constant 7 : index
    %c1_397 = arith.constant 1 : index
    %c0_398 = arith.constant 0 : index
    %810 = vector.load %arg16[%c7_396, %c1_397, %c0_398] : memref<8x3x64xf32, #tpu.memory_space<vmem>>, vector<1x1x64xf32>
    %811 = vector.shape_cast %810 : vector<1x1x64xf32> to vector<1x64xf32>
    %c7_399 = arith.constant 7 : index
    %c2_400 = arith.constant 2 : index
    %c0_401 = arith.constant 0 : index
    %812 = vector.load %arg16[%c7_399, %c2_400, %c0_401] : memref<8x3x64xf32, #tpu.memory_space<vmem>>, vector<1x1x64xf32>
    %813 = vector.shape_cast %812 : vector<1x1x64xf32> to vector<1x64xf32>
    %cst_402 = arith.constant dense<0.000000e+00> : vector<16xf32>
    %814 = vector.multi_reduction <add>, %809, %cst_402 [1] : vector<16x64xf32> to vector<16xf32>
    %815 = vector.shape_cast %814 : vector<16xf32> to vector<16x1xf32>
    %cst_403 = arith.constant 6.400000e+01 : f32
    %816 = vector.broadcast %cst_403 : f32 to vector<16x1xf32>
    %817 = arith.divf %815, %816 : vector<16x1xf32>
    %818 = vector.broadcast %817 : vector<16x1xf32> to vector<16x64xf32>
    %819 = arith.subf %809, %818 : vector<16x64xf32>
    %820 = arith.mulf %819, %819 : vector<16x64xf32>
    %cst_404 = arith.constant dense<0.000000e+00> : vector<16xf32>
    %821 = vector.multi_reduction <add>, %820, %cst_404 [1] : vector<16x64xf32> to vector<16xf32>
    %822 = vector.shape_cast %821 : vector<16xf32> to vector<16x1xf32>
    %cst_405 = arith.constant 6.400000e+01 : f32
    %823 = vector.broadcast %cst_405 : f32 to vector<16x1xf32>
    %824 = arith.divf %822, %823 : vector<16x1xf32>
    %cst_406 = arith.constant 9.99999974E-6 : f32
    %825 = vector.broadcast %cst_406 : f32 to vector<16x1xf32>
    %826 = arith.addf %824, %825 : vector<16x1xf32>
    %827 = math.rsqrt %826 : vector<16x1xf32>
    %828 = vector.broadcast %827 : vector<16x1xf32> to vector<16x64xf32>
    %829 = arith.mulf %819, %828 : vector<16x64xf32>
    %830 = vector.broadcast %811 : vector<1x64xf32> to vector<16x64xf32>
    %831 = arith.mulf %829, %830 : vector<16x64xf32>
    %832 = vector.broadcast %813 : vector<1x64xf32> to vector<16x64xf32>
    %833 = arith.addf %831, %832 : vector<16x64xf32>
    %cst_407 = arith.constant 0.000000e+00 : f32
    %834 = vector.broadcast %cst_407 : f32 to vector<16x64xf32>
    %835 = arith.maximumf %833, %834 : vector<16x64xf32>
    %836 = arith.truncf %835 : vector<16x64xf32> to vector<16x64xbf16>
    %c7_408 = arith.constant 7 : index
    %c0_409 = arith.constant 0 : index
    %c0_410 = arith.constant 0 : index
    %837 = vector.load %arg14[%c7_408, %c0_409, %c0_410] : memref<8x64x32xbf16, #tpu.memory_space<vmem>>, vector<1x64x32xbf16>
    %838 = vector.shape_cast %837 : vector<1x64x32xbf16> to vector<64x32xbf16>
    %cst_411 = arith.constant dense<0.000000e+00> : vector<16x32xf32>
    %839 = tpu.matmul %836, %838, %cst_411 {dimension_numbers = #tpu.dot_dimension_numbers<[1], [0], [0], [1], [0, 0, 1, 1], [], []>} : vector<16x64xbf16>, vector<64x32xbf16>, vector<16x32xf32> -> vector<16x32xf32>
    %c7_412 = arith.constant 7 : index
    %c3_413 = arith.constant 3 : index
    %c0_414 = arith.constant 0 : index
    %840 = vector.load %arg15[%c7_412, %c3_413, %c0_414] : memref<8x4x32xf32, #tpu.memory_space<vmem>>, vector<1x1x32xf32>
    %841 = vector.shape_cast %840 : vector<1x1x32xf32> to vector<1x32xf32>
    %842 = vector.broadcast %841 : vector<1x32xf32> to vector<16x32xf32>
    %843 = arith.addf %839, %842 : vector<16x32xf32>
    %844 = arith.addf %743, %843 : vector<16x32xf32>
    %c0_415 = arith.constant 0 : index
    %c1_416 = arith.constant 1 : index
    %c0_417 = arith.constant 0 : index
    %845 = vector.load %arg15[%c0_415, %c1_416, %c0_417] : memref<8x4x32xf32, #tpu.memory_space<vmem>>, vector<1x1x32xf32>
    %846 = vector.shape_cast %845 : vector<1x1x32xf32> to vector<1x32xf32>
    %c0_418 = arith.constant 0 : index
    %c2_419 = arith.constant 2 : index
    %c0_420 = arith.constant 0 : index
    %847 = vector.load %arg15[%c0_418, %c2_419, %c0_420] : memref<8x4x32xf32, #tpu.memory_space<vmem>>, vector<1x1x32xf32>
    %848 = vector.shape_cast %847 : vector<1x1x32xf32> to vector<1x32xf32>
    %cst_421 = arith.constant dense<0.000000e+00> : vector<16xf32>
    %849 = vector.multi_reduction <add>, %844, %cst_421 [1] : vector<16x32xf32> to vector<16xf32>
    %850 = vector.shape_cast %849 : vector<16xf32> to vector<16x1xf32>
    %cst_422 = arith.constant 3.200000e+01 : f32
    %851 = vector.broadcast %cst_422 : f32 to vector<16x1xf32>
    %852 = arith.divf %850, %851 : vector<16x1xf32>
    %853 = vector.broadcast %852 : vector<16x1xf32> to vector<16x32xf32>
    %854 = arith.subf %844, %853 : vector<16x32xf32>
    %855 = arith.mulf %854, %854 : vector<16x32xf32>
    %cst_423 = arith.constant dense<0.000000e+00> : vector<16xf32>
    %856 = vector.multi_reduction <add>, %855, %cst_423 [1] : vector<16x32xf32> to vector<16xf32>
    %857 = vector.shape_cast %856 : vector<16xf32> to vector<16x1xf32>
    %cst_424 = arith.constant 3.200000e+01 : f32
    %858 = vector.broadcast %cst_424 : f32 to vector<16x1xf32>
    %859 = arith.divf %857, %858 : vector<16x1xf32>
    %cst_425 = arith.constant 9.99999974E-6 : f32
    %860 = vector.broadcast %cst_425 : f32 to vector<16x1xf32>
    %861 = arith.addf %859, %860 : vector<16x1xf32>
    %862 = math.rsqrt %861 : vector<16x1xf32>
    %863 = vector.broadcast %862 : vector<16x1xf32> to vector<16x32xf32>
    %864 = arith.mulf %854, %863 : vector<16x32xf32>
    %865 = vector.broadcast %846 : vector<1x32xf32> to vector<16x32xf32>
    %866 = arith.mulf %864, %865 : vector<16x32xf32>
    %867 = vector.broadcast %848 : vector<1x32xf32> to vector<16x32xf32>
    %868 = arith.addf %866, %867 : vector<16x32xf32>
    %cst_426 = arith.constant 0.000000e+00 : f32
    %869 = vector.broadcast %cst_426 : f32 to vector<16x32xf32>
    %870 = arith.maximumf %868, %869 : vector<16x32xf32>
    %871 = arith.truncf %870 : vector<16x32xf32> to vector<16x32xbf16>
    %c0_427 = arith.constant 0 : index
    %c0_428 = arith.constant 0 : index
    %872 = vector.load %arg17[%c0_427, %c0_428] : memref<32x5xbf16, #tpu.memory_space<vmem>>, vector<32x5xbf16>
    %cst_429 = arith.constant dense<0.000000e+00> : vector<16x5xf32>
    %873 = tpu.matmul %871, %872, %cst_429 {dimension_numbers = #tpu.dot_dimension_numbers<[1], [0], [0], [1], [0, 0, 1, 1], [], []>} : vector<16x32xbf16>, vector<32x5xbf16>, vector<16x5xf32> -> vector<16x5xf32>
    %c0_430 = arith.constant 0 : index
    %c0_431 = arith.constant 0 : index
    %874 = vector.load %arg18[%c0_430, %c0_431] : memref<1x5xf32, #tpu.memory_space<vmem>>, vector<1x5xf32>
    %875 = vector.broadcast %874 : vector<1x5xf32> to vector<16x5xf32>
    %876 = arith.addf %873, %875 : vector<16x5xf32>
    %c0_432 = arith.constant 0 : index
    %c0_433 = arith.constant 0 : index
    %877 = vector.load %arg4[%c0_432, %c0_433] : memref<16x2xf32, #tpu.memory_space<vmem>>, vector<16x2xf32>
    %cst_434 = arith.constant 1.000000e+00 : f32
    %878 = vector.broadcast %cst_434 : f32 to vector<16x2xf32>
    %879 = arith.subf %877, %878 : vector<16x2xf32>
    %cst_435 = arith.constant 3.000000e+38 : f32
    %880 = vector.broadcast %cst_435 : f32 to vector<16x2xf32>
    %881 = arith.mulf %879, %880 : vector<16x2xf32>
    %882 = vector.extract_strided_slice %881 {offsets = [0, 0], sizes = [16, 1], strides = [1, 1]} : vector<16x2xf32> to vector<16x1xf32>
    %883 = vector.broadcast %882 : vector<16x1xf32> to vector<16x5xf32>
    %884 = arith.addf %876, %883 : vector<16x5xf32>
    %cst_436 = arith.constant dense<0xFF800000> : vector<5xf32>
    %885 = vector.multi_reduction <maximumf>, %884, %cst_436 [0] : vector<16x5xf32> to vector<5xf32>
    %886 = vector.shape_cast %885 : vector<5xf32> to vector<1x5xf32>
    %887 = vector.extract_strided_slice %881 {offsets = [0, 1], sizes = [16, 1], strides = [1, 1]} : vector<16x2xf32> to vector<16x1xf32>
    %888 = vector.broadcast %887 : vector<16x1xf32> to vector<16x5xf32>
    %889 = arith.addf %876, %888 : vector<16x5xf32>
    %cst_437 = arith.constant dense<0xFF800000> : vector<5xf32>
    %890 = vector.multi_reduction <maximumf>, %889, %cst_437 [0] : vector<16x5xf32> to vector<5xf32>
    %891 = vector.shape_cast %890 : vector<5xf32> to vector<1x5xf32>
    %892 = tpu.concatenate %886, %891 in 0 : vector<1x5xf32>, vector<1x5xf32> -> vector<2x5xf32>
    %c0_438 = arith.constant 0 : index
    %c0_439 = arith.constant 0 : index
    %893 = vector.load %arg19[%c0_438, %c0_439] : memref<2x5xf32, #tpu.memory_space<vmem>>, vector<2x5xf32>
    tpu.vector_store %arg19[%c0_438, %c0_439], %892 {strides = array<i32>} : memref<2x5xf32, #tpu.memory_space<vmem>>, vector<2x5xf32>,
    return
  }
}

</mosaic_0001>

<llo_original>
// kernel: deeper_gcn_forward.1
$region0: #{deeper_gcn_forward.1}
  #allocation0 [shape = 'u32[]', space=smem, size = 0x4, offset = 0x4, fixed_abs, tag = 'smem constant byte address 0x4 - core index']
  #allocation1 [shape = 'u32[72,128]{1,0:T(1,128)}', space=vmem, size = 0x9000, scoped, tag = 'internal scratch']
  %s0 = inlined_call_operand.vmem [shape: f32[16,5], index: 0, kind: input, shape index: {}]
  %s1 = inlined_call_operand.vmem [shape: f32[32,4], index: 1, kind: input, shape index: {}]
  %s2 = inlined_call_operand.vmem [shape: bf16[32,16], index: 2, kind: input, shape index: {}]
  %s3 = inlined_call_operand.vmem [shape: bf16[32,16], index: 3, kind: input, shape index: {}]
  %s4 = inlined_call_operand.vmem [shape: f32[16,2], index: 4, kind: input, shape index: {}]
  %s5 = inlined_call_operand.vmem [shape: bf16[5,32], index: 5, kind: input, shape index: {}]
  %s6 = inlined_call_operand.vmem [shape: f32[32,32], index: 6, kind: input, shape index: {}]
  %s7 = inlined_call_operand.vmem [shape: bf16[32,32], index: 7, kind: input, shape index: {}]
  %s8 = inlined_call_operand.vmem [shape: f32[4,32], index: 8, kind: input, shape index: {}]
  %s9 = inlined_call_operand.vmem [shape: bf16[4,32], index: 9, kind: input, shape index: {}]
  %s10 = inlined_call_operand.vmem [shape: f32[32,32], index: 10, kind: input, shape index: {}]
  %s11 = inlined_call_operand.vmem [shape: bf16[32,32], index: 11, kind: input, shape index: {}]
  %s12 = inlined_call_operand.vmem [shape: f32[4,32], index: 12, kind: input, shape index: {}]
  %s13 = inlined_call_operand.vmem [shape: bf16[8,32,64], index: 13, kind: input, shape index: {}]
  %s14 = inlined_call_operand.vmem [shape: bf16[8,64,32], index: 14, kind: input, shape index: {}]
  %s15 = inlined_call_operand.vmem [shape: f32[8,4,32], index: 15, kind: input, shape index: {}]
  %s16 = inlined_call_operand.vmem [shape: f32[8,3,64], index: 16, kind: input, shape index: {}]
  %s17 = inlined_call_operand.vmem [shape: bf16[32,5], index: 17, kind: input, shape index: {}]
  %s18 = inlined_call_operand.vmem [shape: f32[1,5], index: 18, kind: input, shape index: {}]
  %s19 = inlined_call_operand.hbm [shape: f32[2,5], index: 19, kind: output, shape index: {}]
  %s20 = sld [smem:[#allocation0]]
  $region86: #{deeper_gcn_forward.1} parent=0
    _
  %s22 = ssub.s32 1, %s20
  %s23 = scalar_select 0, %s22, %s20
  $region1: #{deeper_gcn_forward.1} parent=0
    #allocation2 [shape = 'u8[1024]{0}', space=vmem, size = 0x400, scoped, tag = 'output window, operand 0, single buffered']
    #allocation3 [shape = 's32[1]{0}', space=sflag, size = 0x4, scoped, tag = 'scoped memory for deeper_gcn_forward.1']
    %24 = vsyncpa [#allocation3], 0
    // Predicated region
    $region2: #{deeper_gcn_forward.1} parent=1 // pred_check
      _
    $region3: #{deeper_gcn_forward.1} parent=1 // pred_check_branch
      %26 = sbr.rel (0) target = $region5
    $region4: #{deeper_gcn_forward.1} parent=1 // pred_region
      _
    $region5: #{deeper_gcn_forward.1} parent=1 // pred_fallthru
      _
    // Predicated region
    $region6: #{deeper_gcn_forward.1} parent=1 // pred_check
      _
    $region7: #{deeper_gcn_forward.1} parent=1 // pred_check_branch
      %28 = sbr.rel (0) target = $region9
    $region8: #{deeper_gcn_forward.1} parent=1 // pred_region
      _
    $region9: #{deeper_gcn_forward.1} parent=1 // pred_fallthru
      _
    // Predicated region
    $region10: #{deeper_gcn_forward.1} parent=1 // pred_check
      _
    $region11: #{deeper_gcn_forward.1} parent=1 // pred_check_branch
      %30 = sbr.rel (0) target = $region13
    $region12: #{deeper_gcn_forward.1} parent=1 // pred_region
      _
    $region13: #{deeper_gcn_forward.1} parent=1 // pred_fallthru
      _
    // Predicated region
    $region14: #{deeper_gcn_forward.1} parent=1 // pred_check
      _
    $region15: #{deeper_gcn_forward.1} parent=1 // pred_check_branch
      %32 = sbr.rel (0) target = $region17
    $region16: #{deeper_gcn_forward.1} parent=1 // pred_region
      _
    $region17: #{deeper_gcn_forward.1} parent=1 // pred_fallthru
      _
    // Predicated region
    $region18: #{deeper_gcn_forward.1} parent=1 // pred_check
      _
    $region19: #{deeper_gcn_forward.1} parent=1 // pred_check_branch
      %34 = sbr.rel (0) target = $region21
    $region20: #{deeper_gcn_forward.1} parent=1 // pred_region
      _
    $region21: #{deeper_gcn_forward.1} parent=1 // pred_fallthru
      _
    // Predicated region
    $region22: #{deeper_gcn_forward.1} parent=1 // pred_check
      _
    $region23: #{deeper_gcn_forward.1} parent=1 // pred_check_branch
      %36 = sbr.rel (0) target = $region25
    $region24: #{deeper_gcn_forward.1} parent=1 // pred_region
      _
    $region25: #{deeper_gcn_forward.1} parent=1 // pred_fallthru
      _
    // Predicated region
    $region26: #{deeper_gcn_forward.1} parent=1 // pred_check
      _
    $region27: #{deeper_gcn_forward.1} parent=1 // pred_check_branch
      %38 = sbr.rel (0) target = $region29
    $region28: #{deeper_gcn_forward.1} parent=1 // pred_region
      _
    $region29: #{deeper_gcn_forward.1} parent=1 // pred_fallthru
      _
    // Predicated region
    $region30: #{deeper_gcn_forward.1} parent=1 // pred_check
      _
    $region31: #{deeper_gcn_forward.1} parent=1 // pred_check_branch
      %40 = sbr.rel (0) target = $region33
    $region32: #{deeper_gcn_forward.1} parent=1 // pred_region
      _
    $region33: #{deeper_gcn_forward.1} parent=1 // pred_fallthru
      _
    // Predicated region
    $region34: #{deeper_gcn_forward.1} parent=1 // pred_check
      _
    $region35: #{deeper_gcn_forward.1} parent=1 // pred_check_branch
      %42 = sbr.rel (0) target = $region37
    $region36: #{deeper_gcn_forward.1} parent=1 // pred_region
      _
    $region37: #{deeper_gcn_forward.1} parent=1 // pred_fallthru
      _
    // Predicated region
    $region38: #{deeper_gcn_forward.1} parent=1 // pred_check
      _
    $region39: #{deeper_gcn_forward.1} parent=1 // pred_check_branch
      %44 = sbr.rel (0) target = $region41
    $region40: #{deeper_gcn_forward.1} parent=1 // pred_region
      _
    $region41: #{deeper_gcn_forward.1} parent=1 // pred_fallthru
      _
    // Predicated region
    $region42: #{deeper_gcn_forward.1} parent=1 // pred_check
      _
    $region43: #{deeper_gcn_forward.1} parent=1 // pred_check_branch
      %46 = sbr.rel (0) target = $region45
    $region44: #{deeper_gcn_forward.1} parent=1 // pred_region
      _
    $region45: #{deeper_gcn_forward.1} parent=1 // pred_fallthru
      _
    // Predicated region
    $region46: #{deeper_gcn_forward.1} parent=1 // pred_check
      _
    $region47: #{deeper_gcn_forward.1} parent=1 // pred_check_branch
      %48 = sbr.rel (0) target = $region49
    $region48: #{deeper_gcn_forward.1} parent=1 // pred_region
      _
    $region49: #{deeper_gcn_forward.1} parent=1 // pred_fallthru
      _
    // Predicated region
    $region50: #{deeper_gcn_forward.1} parent=1 // pred_check
      _
    $region51: #{deeper_gcn_forward.1} parent=1 // pred_check_branch
      %50 = sbr.rel (0) target = $region53
    $region52: #{deeper_gcn_forward.1} parent=1 // pred_region
      _
    $region53: #{deeper_gcn_forward.1} parent=1 // pred_fallthru
      _
    // Predicated region
    $region54: #{deeper_gcn_forward.1} parent=1 // pred_check
      _
    $region55: #{deeper_gcn_forward.1} parent=1 // pred_check_branch
      %52 = sbr.rel (0) target = $region57
    $region56: #{deeper_gcn_forward.1} parent=1 // pred_region
      _
    $region57: #{deeper_gcn_forward.1} parent=1 // pred_fallthru
      _
    // Predicated region
    $region58: #{deeper_gcn_forward.1} parent=1 // pred_check
      _
    $region59: #{deeper_gcn_forward.1} parent=1 // pred_check_branch
      %54 = sbr.rel (0) target = $region61
    $region60: #{deeper_gcn_forward.1} parent=1 // pred_region
      _
    $region61: #{deeper_gcn_forward.1} parent=1 // pred_fallthru
      _
    // Predicated region
    $region62: #{deeper_gcn_forward.1} parent=1 // pred_check
      _
    $region63: #{deeper_gcn_forward.1} parent=1 // pred_check_branch
      %56 = sbr.rel (0) target = $region65
    $region64: #{deeper_gcn_forward.1} parent=1 // pred_region
      _
    $region65: #{deeper_gcn_forward.1} parent=1 // pred_fallthru
      _
    // Predicated region
    $region66: #{deeper_gcn_forward.1} parent=1 // pred_check
      _
    $region67: #{deeper_gcn_forward.1} parent=1 // pred_check_branch
      %58 = sbr.rel (0) target = $region69
    $region68: #{deeper_gcn_forward.1} parent=1 // pred_region
      _
    $region69: #{deeper_gcn_forward.1} parent=1 // pred_fallthru
      _
    // Predicated region
    $region70: #{deeper_gcn_forward.1} parent=1 // pred_check
      _
    $region71: #{deeper_gcn_forward.1} parent=1 // pred_check_branch
      %60 = sbr.rel (0) target = $region73
    $region72: #{deeper_gcn_forward.1} parent=1 // pred_region
      _
    $region73: #{deeper_gcn_forward.1} parent=1 // pred_fallthru
      _
    // Predicated region
    $region74: #{deeper_gcn_forward.1} parent=1 // pred_check
      _
    $region75: #{deeper_gcn_forward.1} parent=1 // pred_check_branch
      %62 = sbr.rel (0) target = $region77
    $region76: #{deeper_gcn_forward.1} parent=1 // pred_region
      _
    $region77: #{deeper_gcn_forward.1} parent=1 // pred_fallthru
      _
    %v64 = vld [vmem:[%s0] sm:$0xff]
    %v65 = vld [vmem:[%s0 + $0x8] sm:$0xff]
    %v66 = vld [vmem:[%s5] sm:$0x7]
    %v67 = vld [vmem:[%s8] sm:$0xf]
    %v68 = vld [vmem:[%s6] sm:$0xff]
    %v69 = vld [vmem:[%s6 + $0x8] sm:$0xff]
    %v70 = vld [vmem:[%s6 + $0x10] sm:$0xff]
    %v71 = vld [vmem:[%s6 + $0x18] sm:$0xff]
    %v72 = vld [vmem:[%s7] sm:$0xf]
    %v73 = vld [vmem:[%s7 + $0x4] sm:$0xf]
    %v74 = vld [vmem:[%s7 + $0x8] sm:$0xf]
    %v75 = vld [vmem:[%s7 + $0xc] sm:$0xf]
    %v76 = vpack.c.bf16 %v65, %v64
    %v77 = vperm.slane %v67, 0
    %vm78 = vcmask 39936
    %v80 = vsel %vm78, %v76, 0
    %vm82 = vcmask 1041408
    %vm83 = vcmask 1042432
    %v84 = vsel %vm82, 4294967295, 65535
    %v85 = vsel %vm83, %v84, 0
    %v87 = vand.u32 %v66, %v85
    %89 = vmatpush.bf16.msra.mxu0 0
    %90 = vmatpush.bf16.msra.mxu0 0
    %91 = vmatpush.bf16.msra.mxu0 0
    %92 = vmatpush.bf16.msra.mxu0 0
    %93 = vmatpush.bf16.msra.mxu0 0
    %94 = vmatpush.bf16.msra.mxu0 0
    %95 = vmatpush.bf16.msra.mxu0 0
    %96 = vmatpush.bf16.msra.mxu0 %v87
    %97 = vmatmul.bf16.gmra.mxu0 %v80
    %v98 = vpop.f32.mrf.mxu0
    %v99 = vadd.f32 %v77, %v98
    %v100 = vpop.f32.mrf.mxu0
    %v101 = vadd.f32 %v77, %v100
    %102 = vdwg.mxu0
    %vm103 = vcmask 261120
    %v105 = vsel %vm103, %v99, 0
    %v108 = vsel %vm103, %v101, 0
    %110 = vmatpush.msra.mxu0 0.0
    %111 = vmatpush.msra.mxu0 0.0
    %112 = vmatpush.msra.mxu0 0.0
    %113 = vmatpush.msra.mxu0 0.0
    %114 = vmatpush.msra.mxu0 0.0
    %115 = vmatpush.msra.mxu0 0.0
    %116 = vmatpush.msra.mxu0 0.0
    %117 = vmatpush.msra.mxu0 0.0
    %118 = vmatpush.msra.mxu0 0.0
    %119 = vmatpush.msra.mxu0 0.0
    %120 = vmatpush.msra.mxu0 0.0
    %121 = vmatpush.msra.mxu0 0.0
    %122 = vmatpush.msra.mxu0 %v71
    %123 = vmatpush.msra.mxu0 %v70
    %124 = vmatpush.msra.mxu0 %v69
    %125 = vmatpush.msra.mxu0 %v68
    %126 = vmatmul.f32.gmra.mxu0 %v105
    %v127 = vpop.f32.mrf.mxu0
    %v128 = vadd.f32 0.0, %v127
    %129 = vmatmul.f32.gmra.mxu0 %v108
    %v130 = vpop.f32.mrf.mxu0
    %v131 = vadd.f32 0.0, %v130
    %132 = vdwg.mxu0
    %v133 = vsub.f32 %v99, %v128
    %v134 = vsub.f32 %v101, %v131
    %v135 = vmul.f32 %v133, %v133
    %v136 = vmul.f32 %v134, %v134
    %v138 = vsel %vm103, %v135, 0
    %v141 = vsel %vm103, %v136, 0
    %143 = vmatpush.msra.mxu0 0.0
    %144 = vmatpush.msra.mxu0 0.0
    %145 = vmatpush.msra.mxu0 0.0
    %146 = vmatpush.msra.mxu0 0.0
    %147 = vmatpush.msra.mxu0 0.0
    %148 = vmatpush.msra.mxu0 0.0
    %149 = vmatpush.msra.mxu0 0.0
    %150 = vmatpush.msra.mxu0 0.0
    %151 = vmatpush.msra.mxu0 0.0
    %152 = vmatpush.msra.mxu0 0.0
    %153 = vmatpush.msra.mxu0 0.0
    %154 = vmatpush.msra.mxu0 0.0
    %155 = vmatpush.msra.mxu0 %v71
    %156 = vmatpush.msra.mxu0 %v70
    %157 = vmatpush.msra.mxu0 %v69
    %158 = vmatpush.msra.mxu0 %v68
    %159 = vmatmul.f32.gmra.mxu0 %v138
    %v160 = vpop.f32.mrf.mxu0
    %v161 = vadd.f32 1e-05, %v160
    %162 = vmatmul.f32.gmra.mxu0 %v141
    %v163 = vpop.f32.mrf.mxu0
    %v164 = vadd.f32 1e-05, %v163
    %165 = vdwg.mxu0
    %v166 = vrsqrt.pop %v161
    %v167 = vmul.f32 %v166, %v161
    %v168 = vmul.f32 %v167, %v166
    %v169 = vmul.f32 0.5, %v168
    %v170 = vsub.f32 1.5, %v169
    %v171 = vmul.f32 %v166, %v170
    %vm172 = vweird.f32 %v161
    %vm173 = vweird.f32 %v166
    %vm174 = vmor %vm172, %vm173
    %v175 = vsel %vm174, %v166, %v171
    %v176 = vrsqrt.pop %v164
    %v177 = vmul.f32 %v176, %v164
    %v178 = vmul.f32 %v177, %v176
    %v179 = vmul.f32 0.5, %v178
    %v180 = vsub.f32 1.5, %v179
    %v181 = vmul.f32 %v176, %v180
    %vm182 = vweird.f32 %v164
    %vm183 = vweird.f32 %v176
    %vm184 = vmor %vm182, %vm183
    %v185 = vsel %vm184, %v176, %v181
    %v186 = vmul.f32 %v133, %v175
    %v187 = vmul.f32 %v134, %v185
    %v188 = vperm.slane %v67, 1
    %v189 = vmul.f32 %v186, %v188
    %v190 = vmul.f32 %v187, %v188
    %v191 = vperm.slane %v67, 2
    %v192 = vadd.f32 %v189, %v191
    %v193 = vadd.f32 %v190, %v191
    %v194 = vmax.f32 %v192, 0.0
    %v195 = vmax.f32 %v193, 0.0
    %v196 = vpack.c.bf16 %v195, %v194
    %v197 = vperm.slane %v67, 3
    %v202 = vunpack.c.l.b16 %v72
    %v203 = vunpack.c.l.b16 %v73
    %v204 = vunpack.c.l.b16 %v74
    %v205 = vunpack.c.l.b16 %v75
    %v206 = vpack.c.b16 %v203, %v202
    %v207 = vpack.c.b16 %v205, %v204
    %v211 = vsel %vm103, %v196, 0
    %213 = vmatpush.bf16.msra.mxu0 0
    %214 = vmatpush.bf16.msra.mxu0 0
    %215 = vmatpush.bf16.msra.mxu0 0
    %216 = vmatpush.bf16.msra.mxu0 0
    %217 = vmatpush.bf16.msra.mxu0 0
    %218 = vmatpush.bf16.msra.mxu0 0
    %219 = vmatpush.bf16.msra.mxu0 %v207
    %220 = vmatpush.bf16.msra.mxu0 %v206
    %221 = vmatmul.bf16.gmra.mxu0 %v211
    %v222 = vpop.f32.mrf.mxu0
    %v223 = vadd.f32 %v197, %v222
    %v224 = vpop.f32.mrf.mxu0
    %v225 = vadd.f32 %v197, %v224
    %226 = vdwg.mxu0
    %v227 = vld [vmem:[%s1] sm:$0xff]
    %v228 = vld [vmem:[%s1 + $0x8] sm:$0xff]
    %v229 = vld [vmem:[%s1 + $0x10] sm:$0xff]
    %v230 = vld [vmem:[%s1 + $0x18] sm:$0xff]
    %v231 = vld [vmem:[%s9] sm:$0x3]
    %v232 = vld [vmem:[%s12] sm:$0xf]
    %v233 = vld [vmem:[%s10] sm:$0xff]
    %v234 = vld [vmem:[%s10 + $0x8] sm:$0xff]
    %v235 = vld [vmem:[%s10 + $0x10] sm:$0xff]
    %v236 = vld [vmem:[%s10 + $0x18] sm:$0xff]
    %v237 = vld [vmem:[%s11] sm:$0xf]
    %v238 = vld [vmem:[%s11 + $0x4] sm:$0xf]
    %v239 = vld [vmem:[%s11 + $0x8] sm:$0xf]
    %v240 = vld [vmem:[%s11 + $0xc] sm:$0xf]
    %v241 = vpack.c.bf16 %v228, %v227
    %v242 = vpack.c.bf16 %v230, %v229
    %v243 = vperm.slane %v232, 0
    %vm244 = vcmask 31744
    %v246 = vsel %vm244, %v241, 0
    %v249 = vsel %vm244, %v242, 0
    %v252 = vsel %vm82, %v231, 0
    %254 = vmatpush.bf16.msra.mxu0 0
    %255 = vmatpush.bf16.msra.mxu0 0
    %256 = vmatpush.bf16.msra.mxu0 0
    %257 = vmatpush.bf16.msra.mxu0 0
    %258 = vmatpush.bf16.msra.mxu0 0
    %259 = vmatpush.bf16.msra.mxu0 0
    %260 = vmatpush.bf16.msra.mxu0 0
    %261 = vmatpush.bf16.msra.mxu0 %v252
    %262 = vmatmul.bf16.gmra.mxu0 %v246
    %v263 = vpop.f32.mrf.mxu0
    %v264 = vadd.f32 %v243, %v263
    %v265 = vpop.f32.mrf.mxu0
    %v266 = vadd.f32 %v243, %v265
    %267 = vmatmul.bf16.gmra.mxu0 %v249
    %v268 = vpop.f32.mrf.mxu0
    %v269 = vadd.f32 %v243, %v268
    %v270 = vpop.f32.mrf.mxu0
    %v271 = vadd.f32 %v243, %v270
    %272 = vdwg.mxu0
    %v274 = vsel %vm103, %v264, 0
    %v277 = vsel %vm103, %v266, 0
    %v280 = vsel %vm103, %v269, 0
    %v283 = vsel %vm103, %v271, 0
    %285 = vmatpush.msra.mxu0 0.0
    %286 = vmatpush.msra.mxu0 0.0
    %287 = vmatpush.msra.mxu0 0.0
    %288 = vmatpush.msra.mxu0 0.0
    %289 = vmatpush.msra.mxu0 0.0
    %290 = vmatpush.msra.mxu0 0.0
    %291 = vmatpush.msra.mxu0 0.0
    %292 = vmatpush.msra.mxu0 0.0
    %293 = vmatpush.msra.mxu0 0.0
    %294 = vmatpush.msra.mxu0 0.0
    %295 = vmatpush.msra.mxu0 0.0
    %296 = vmatpush.msra.mxu0 0.0
    %297 = vmatpush.msra.mxu0 %v236
    %298 = vmatpush.msra.mxu0 %v235
    %299 = vmatpush.msra.mxu0 %v234
    %300 = vmatpush.msra.mxu0 %v233
    %301 = vmatmul.f32.gmra.mxu0 %v274
    %v302 = vpop.f32.mrf.mxu0
    %v303 = vadd.f32 0.0, %v302
    %304 = vmatmul.f32.gmra.mxu0 %v277
    %v305 = vpop.f32.mrf.mxu0
    %v306 = vadd.f32 0.0, %v305
    %307 = vmatmul.f32.gmra.mxu0 %v280
    %v308 = vpop.f32.mrf.mxu0
    %v309 = vadd.f32 0.0, %v308
    %310 = vmatmul.f32.gmra.mxu0 %v283
    %v311 = vpop.f32.mrf.mxu0
    %v312 = vadd.f32 0.0, %v311
    %313 = vdwg.mxu0
    %v314 = vsub.f32 %v264, %v303
    %v315 = vsub.f32 %v266, %v306
    %v316 = vsub.f32 %v269, %v309
    %v317 = vsub.f32 %v271, %v312
    %v318 = vmul.f32 %v314, %v314
    %v319 = vmul.f32 %v315, %v315
    %v320 = vmul.f32 %v316, %v316
    %v321 = vmul.f32 %v317, %v317
    %v323 = vsel %vm103, %v318, 0
    %v326 = vsel %vm103, %v319, 0
    %v329 = vsel %vm103, %v320, 0
    %v332 = vsel %vm103, %v321, 0
    %334 = vmatpush.msra.mxu0 0.0
    %335 = vmatpush.msra.mxu0 0.0
    %336 = vmatpush.msra.mxu0 0.0
    %337 = vmatpush.msra.mxu0 0.0
    %338 = vmatpush.msra.mxu0 0.0
    %339 = vmatpush.msra.mxu0 0.0
    %340 = vmatpush.msra.mxu0 0.0
    %341 = vmatpush.msra.mxu0 0.0
    %342 = vmatpush.msra.mxu0 0.0
    %343 = vmatpush.msra.mxu0 0.0
    %344 = vmatpush.msra.mxu0 0.0
    %345 = vmatpush.msra.mxu0 0.0
    %346 = vmatpush.msra.mxu0 %v236
    %347 = vmatpush.msra.mxu0 %v235
    %348 = vmatpush.msra.mxu0 %v234
    %349 = vmatpush.msra.mxu0 %v233
    %350 = vmatmul.f32.gmra.mxu0 %v323
    %v351 = vpop.f32.mrf.mxu0
    %v352 = vadd.f32 1e-05, %v351
    %353 = vmatmul.f32.gmra.mxu0 %v326
    %v354 = vpop.f32.mrf.mxu0
    %v355 = vadd.f32 1e-05, %v354
    %356 = vmatmul.f32.gmra.mxu0 %v329
    %v357 = vpop.f32.mrf.mxu0
    %v358 = vadd.f32 1e-05, %v357
    %359 = vmatmul.f32.gmra.mxu0 %v332
    %v360 = vpop.f32.mrf.mxu0
    %v361 = vadd.f32 1e-05, %v360
    %362 = vdwg.mxu0
    %v363 = vrsqrt.pop %v352
    %v364 = vmul.f32 %v363, %v352
    %v365 = vmul.f32 %v364, %v363
    %v366 = vmul.f32 0.5, %v365
    %v367 = vsub.f32 1.5, %v366
    %v368 = vmul.f32 %v363, %v367
    %vm369 = vweird.f32 %v352
    %vm370 = vweird.f32 %v363
    %vm371 = vmor %vm369, %vm370
    %v372 = vsel %vm371, %v363, %v368
    %v373 = vrsqrt.pop %v355
    %v374 = vmul.f32 %v373, %v355
    %v375 = vmul.f32 %v374, %v373
    %v376 = vmul.f32 0.5, %v375
    %v377 = vsub.f32 1.5, %v376
    %v378 = vmul.f32 %v373, %v377
    %vm379 = vweird.f32 %v355
    %vm380 = vweird.f32 %v373
    %vm381 = vmor %vm379, %vm380
    %v382 = vsel %vm381, %v373, %v378
    %v383 = vrsqrt.pop %v358
    %v384 = vmul.f32 %v383, %v358
    %v385 = vmul.f32 %v384, %v383
    %v386 = vmul.f32 0.5, %v385
    %v387 = vsub.f32 1.5, %v386
    %v388 = vmul.f32 %v383, %v387
    %vm389 = vweird.f32 %v358
    %vm390 = vweird.f32 %v383
    %vm391 = vmor %vm389, %vm390
    %v392 = vsel %vm391, %v383, %v388
    %v393 = vrsqrt.pop %v361
    %v394 = vmul.f32 %v393, %v361
    %v395 = vmul.f32 %v394, %v393
    %v396 = vmul.f32 0.5, %v395
    %v397 = vsub.f32 1.5, %v396
    %v398 = vmul.f32 %v393, %v397
    %vm399 = vweird.f32 %v361
    %vm400 = vweird.f32 %v393
    %vm401 = vmor %vm399, %vm400
    %v402 = vsel %vm401, %v393, %v398
    %v403 = vmul.f32 %v314, %v372
    %v404 = vmul.f32 %v315, %v382
    %v405 = vmul.f32 %v316, %v392
    %v406 = vmul.f32 %v317, %v402
    %v407 = vperm.slane %v232, 1
    %v408 = vmul.f32 %v403, %v407
    %v409 = vmul.f32 %v404, %v407
    %v410 = vmul.f32 %v405, %v407
    %v411 = vmul.f32 %v406, %v407
    %v412 = vperm.slane %v232, 2
    %v413 = vadd.f32 %v408, %v412
    %v414 = vadd.f32 %v409, %v412
    %v415 = vadd.f32 %v410, %v412
    %v416 = vadd.f32 %v411, %v412
    %v417 = vmax.f32 %v413, 0.0
    %v418 = vmax.f32 %v414, 0.0
    %v419 = vmax.f32 %v415, 0.0
    %v420 = vmax.f32 %v416, 0.0
    %v421 = vpack.c.bf16 %v418, %v417
    %v422 = vpack.c.bf16 %v420, %v419
    %v423 = vperm.slane %v232, 3
    %v428 = vunpack.c.l.b16 %v237
    %v429 = vunpack.c.l.b16 %v238
    %v430 = vunpack.c.l.b16 %v239
    %v431 = vunpack.c.l.b16 %v240
    %v432 = vpack.c.b16 %v429, %v428
    %v433 = vpack.c.b16 %v431, %v430
    %v437 = vsel %vm103, %v421, 0
    %v440 = vsel %vm103, %v422, 0
    %442 = vmatpush.bf16.msra.mxu0 0
    %443 = vmatpush.bf16.msra.mxu0 0
    %444 = vmatpush.bf16.msra.mxu0 0
    %445 = vmatpush.bf16.msra.mxu0 0
    %446 = vmatpush.bf16.msra.mxu0 0
    %447 = vmatpush.bf16.msra.mxu0 0
    %448 = vmatpush.bf16.msra.mxu0 %v433
    %449 = vmatpush.bf16.msra.mxu0 %v432
    %450 = vmatmul.bf16.gmra.mxu0 %v437
    %v451 = vpop.f32.mrf.mxu0
    %v452 = vadd.f32 %v423, %v451
    %v453 = vpop.f32.mrf.mxu0
    %v454 = vadd.f32 %v423, %v453
    %455 = vmatmul.bf16.gmra.mxu0 %v440
    %v456 = vpop.f32.mrf.mxu0
    %v457 = vadd.f32 %v423, %v456
    %v458 = vpop.f32.mrf.mxu0
    %v459 = vadd.f32 %v423, %v458
    %460 = vdwg.mxu0
    %v461 = vld [vmem:[%s2] sm:$0xf]
    %v462 = vld [vmem:[%s2 + $0x4] sm:$0xf]
    %v463 = vld [vmem:[%s2 + $0x8] sm:$0xf]
    %v464 = vld [vmem:[%s2 + $0xc] sm:$0xf]
    %v465 = vld [vmem:[%s3] sm:$0xf]
    %v466 = vld [vmem:[%s3 + $0x4] sm:$0xf]
    %v467 = vld [vmem:[%s3 + $0x8] sm:$0xf]
    %v468 = vld [vmem:[%s3 + $0xc] sm:$0xf]
    %v469 = vpack.c.bf16 %v225, %v223
    %v474 = vunpack.c.l.b16 %v461
    %v475 = vunpack.c.l.b16 %v462
    %v476 = vunpack.c.l.b16 %v463
    %v477 = vunpack.c.l.b16 %v464
    %v478 = vpack.c.b16 %v475, %v474
    %v479 = vpack.c.b16 %v477, %v476
    %vm480 = vcmask 130048
    %v482 = vsel %vm480, %v478, 0
    %v485 = vsel %vm480, %v479, 0
    %487 = vmatpush.bf16.msra.mxu0 0
    %488 = vmatpush.bf16.msra.mxu0 0
    %489 = vmatpush.bf16.msra.mxu0 0
    %490 = vmatpush.bf16.msra.mxu0 0
    %491 = vmatpush.bf16.msra.mxu0 0
    %492 = vmatpush.bf16.msra.mxu0 0
    %493 = vmatpush.bf16.msra.mxu0 0
    %494 = vmatpush.bf16.msra.mxu0 %v469
    %495 = vmatmul.bf16.gmra.mxu0 %v482
    %v496 = vpop.f32.mrf.mxu0
    %v497 = vadd.f32 %v452, %v496
    %v498 = vpop.f32.mrf.mxu0
    %v499 = vadd.f32 %v454, %v498
    %500 = vmatmul.bf16.gmra.mxu0 %v485
    %v501 = vpop.f32.mrf.mxu0
    %v502 = vadd.f32 %v457, %v501
    %v503 = vpop.f32.mrf.mxu0
    %v504 = vadd.f32 %v459, %v503
    %505 = vdwg.mxu0
    %v506 = vmax.f32 %v497, 0.0
    %v507 = vmax.f32 %v499, 0.0
    %v508 = vmax.f32 %v502, 0.0
    %v509 = vmax.f32 %v504, 0.0
    %v510 = vadd.f32 %v506, 1e-07
    %v511 = vadd.f32 %v507, 1e-07
    %v512 = vadd.f32 %v508, 1e-07
    %v513 = vadd.f32 %v509, 1e-07
    %v514 = vld [vmem:[%s15] sm:$0x1]
    %v515 = vperm.slane %v514, 0
    %v516 = vmul.f32 %v515, %v510
    %v517 = vmul.f32 %v515, %v511
    %v518 = vmul.f32 %v515, %v512
    %v519 = vmul.f32 %v515, %v513
    %v520 = vsel %vm103, %v516, -inf
    %v521 = vsel %vm103, %v517, -inf
    %v522 = vsel %vm103, %v518, -inf
    %v523 = vsel %vm103, %v519, -inf
    %v524 = vmax.f32 %v520, %v521
    %v525 = vmax.f32 %v522, %v523
    %v526 = vmax.f32 %v524, %v525
    %v527 = vrot.slane %v526, 4
    %v528 = vmax.f32 %v526, %v527
    %v529 = vrot.slane %v528, 2
    %v530 = vmax.f32 %v528, %v529
    %v531 = vrot.slane %v530, 1
    %v532 = vmax.f32 %v530, %v531
    %v533 = vsub.f32 %v516, %v532
    %v534 = vsub.f32 %v517, %v532
    %v535 = vsub.f32 %v518, %v532
    %v536 = vsub.f32 %v519, %v532
    %v537 = vmul.f32 %v533, 1.442695
    %v538 = vpow.pop %v537
    %v539 = vmul.f32 %v534, 1.442695
    %v540 = vpow.pop %v539
    %v541 = vmul.f32 %v535, 1.442695
    %v542 = vpow.pop %v541
    %v543 = vmul.f32 %v536, 1.442695
    %v544 = vpow.pop %v543
    %v545 = vmul.f32 %v538, %v510
    %v546 = vmul.f32 %v540, %v511
    %v547 = vmul.f32 %v542, %v512
    %v548 = vmul.f32 %v544, %v513
    %553 = vrot.lane.b32.xlu0 %v538, 32
    %v554 = vpop.permute.xlu0 %553
    %555 = vrot.lane.b32.xlu0 %v540, 32
    %v556 = vpop.permute.xlu0 %555
    %557 = vrot.lane.b32.xlu0 %v542, 32
    %v558 = vpop.permute.xlu0 %557
    %559 = vrot.lane.b32.xlu0 %v544, 32
    %v560 = vpop.permute.xlu0 %559
    %v565 = vsel %vm103, %v545, %v554
    %v566 = vsel %vm103, %v546, %v556
    %v567 = vsel %vm103, %v547, %v558
    %v568 = vsel %vm103, %v548, %v560
    %v569 = vpack.c.bf16 %v566, %v565
    %v570 = vpack.c.bf16 %v568, %v567
    %v575 = vunpack.c.l.b16 %v465
    %v576 = vunpack.c.l.b16 %v466
    %v577 = vunpack.c.l.b16 %v467
    %v578 = vunpack.c.l.b16 %v468
    %v579 = vpack.c.b16 %v576, %v575
    %v580 = vpack.c.b16 %v578, %v577
    %583 = vxpose.xlu0.c.b16.start [1/8] %v579, 128
    %584 = vxpose.xlu0.c.b16.cont [2/8] %v580, 128
    %585 = vxpose.xlu0.c.b16.cont [3/8] 0, 128
    %586 = vxpose.xlu0.c.b16.cont [4/8] 0, 128
    %587 = vxpose.xlu0.c.b16.cont [5/8] 0, 128
    %588 = vxpose.xlu0.c.b16.cont [6/8] 0, 128
    %589 = vxpose.xlu0.c.b16.cont [7/8] 0, 128
    %590 = vxpose.xlu0.c.b16.end [8/8] 0, 128
    %v591 = vpop.trf.xlu0
    %v592 = vpop.trf.xlu0
    %v593 = vpop.trf.xlu0
    %v594 = vpop.trf.xlu0
    %v595 = vpop.trf.xlu0
    %v596 = vpop.trf.xlu0
    %v597 = vpop.trf.xlu0
    %v598 = vpop.trf.xlu0
    %v600 = vsel %vm103, %v591, 0
    %602 = vmatpush.bf16.msra.mxu0 0
    %603 = vmatpush.bf16.msra.mxu0 0
    %604 = vmatpush.bf16.msra.mxu0 0
    %605 = vmatpush.bf16.msra.mxu0 0
    %606 = vmatpush.bf16.msra.mxu0 0
    %607 = vmatpush.bf16.msra.mxu0 0
    %608 = vmatpush.bf16.msra.mxu0 %v570
    %609 = vmatpush.bf16.msra.mxu0 %v569
    %610 = vmatmul.bf16.gmra.mxu0 %v600
    %v611 = vpop.f32.mrf.mxu0
    %v612 = vadd.f32 0.0, %v611
    %v613 = vpop.f32.mrf.mxu0
    %v614 = vadd.f32 0.0, %v613
    %615 = vdwg.mxu0
    %vm616 = vcmp.gt.f32.partialorder %v612, 0.0
    %vm617 = vcmp.gt.f32.partialorder %v614, 0.0
    %v618 = vmax.f32 %v612, 1e-30
    %v619 = vmax.f32 %v614, 1e-30
    %v620 = vrcp.pop %v618
    %v621 = vmul.f32 %v618, %v620
    %v622 = vsub.f32 1.0, %v621
    %v623 = vmul.f32 %v620, %v622
    %v624 = vadd.f32 %v620, %v623
    %vm625 = vweird.f32 %v618
    %vm626 = vweird.f32 %v620
    %vm627 = vmor %vm625, %vm626
    %v628 = vsel %vm627, %v620, %v624
    %v629 = vand.u32 2147483647, %v618
    %vm630 = vcmp.eq.f32.partialorder %v629, 8.507059e+37
    %v631 = vand.u32 %v618, 2147483648
    %v632 = vor.u32 1.1754944e-38, %v631
    %v633 = vsel %vm630, %v632, %v628
    %v634 = vmul.f32 1.0, %v633
    %v635 = vrcp.pop %v619
    %v636 = vmul.f32 %v619, %v635
    %v637 = vsub.f32 1.0, %v636
    %v638 = vmul.f32 %v635, %v637
    %v639 = vadd.f32 %v635, %v638
    %vm640 = vweird.f32 %v619
    %vm641 = vweird.f32 %v635
    %vm642 = vmor %vm640, %vm641
    %v643 = vsel %vm642, %v635, %v639
    %v644 = vand.u32 2147483647, %v619
    %vm645 = vcmp.eq.f32.partialorder %v644, 8.507059e+37
    %v646 = vand.u32 %v619, 2147483648
    %v647 = vor.u32 1.1754944e-38, %v646
    %v648 = vsel %vm645, %v647, %v643
    %v649 = vmul.f32 1.0, %v648
    %v650 = vsel %vm616, %v634, 0.0
    %v651 = vsel %vm617, %v649, 0.0
    %654 = vrot.lane.b32.xlu0 %v650, 96
    %v655 = vpop.permute.xlu0 %654
    %656 = vrot.lane.b32.xlu0 %v651, 96
    %v657 = vpop.permute.xlu0 %656
    %v660 = vmul.f32 %v612, %v655
    %v661 = vmul.f32 %v614, %v657
    %v662 = vadd.f32 %v660, %v223
    %v663 = vadd.f32 %v661, %v225
    %v664 = vpack.c.bf16 %v663, %v662
    %v665 = vld [vmem:[%s13] sm:$0xf]
    %v666 = vld [vmem:[%s13 + $0x4] sm:$0xf]
    %v667 = vld [vmem:[%s13 + $0x8] sm:$0xf]
    %v668 = vld [vmem:[%s13 + $0xc] sm:$0xf]
    %v669 = vld [vmem:[%s16] sm:$0x1]
    %v670 = vperm.slane %v669, 0
    %v675 = vunpack.c.l.b16 %v665
    %v676 = vunpack.c.l.b16 %v666
    %v677 = vunpack.c.l.b16 %v667
    %v678 = vunpack.c.l.b16 %v668
    %v679 = vpack.c.b16 %v676, %v675
    %v680 = vpack.c.b16 %v678, %v677
    %v684 = vsel %vm103, %v664, 0
    %686 = vmatpush.bf16.msra.mxu0 0
    %687 = vmatpush.bf16.msra.mxu0 0
    %688 = vmatpush.bf16.msra.mxu0 0
    %689 = vmatpush.bf16.msra.mxu0 0
    %690 = vmatpush.bf16.msra.mxu0 0
    %691 = vmatpush.bf16.msra.mxu0 0
    %692 = vmatpush.bf16.msra.mxu0 %v680
    %693 = vmatpush.bf16.msra.mxu0 %v679
    %694 = vmatmul.bf16.gmra.mxu0 %v684
    %v695 = vpop.f32.mrf.mxu0
    %v696 = vadd.f32 %v670, %v695
    %v697 = vpop.f32.mrf.mxu0
    %v698 = vadd.f32 %v670, %v697
    %699 = vdwg.mxu0
    %v700 = vld [vmem:[%s16 + $0x1] sm:$0x1]
    %v701 = vld [vmem:[%s16 + $0x2] sm:$0x1]
    %vm702 = vcmask 523264
    %v703 = vsel %vm702, %v696, 0.0
    %704 = vadd.xlane.f32.xlu0 %v703
    %v705 = vpop.xlane.xlu0 %704
    %v706 = vsel %vm702, %v698, 0.0
    %707 = vadd.xlane.f32.xlu0 %v706
    %v708 = vpop.xlane.xlu0 %707
    %v709 = vrcp.pop 64.0
    %v710 = vmul.f32 64.0, %v709
    %v711 = vsub.f32 1.0, %v710
    %v712 = vmul.f32 %v709, %v711
    %v713 = vadd.f32 %v709, %v712
    %vm714 = vweird.f32 %v709
    %v715 = vsel %vm714, %v709, %v713
    %v716 = vmul.f32 %v705, %v715
    %v717 = vmul.f32 %v708, %v715
    %v718 = vsub.f32 %v696, %v716
    %v719 = vsub.f32 %v698, %v717
    %v720 = vmul.f32 %v718, %v718
    %v721 = vmul.f32 %v719, %v719
    %v722 = vsel %vm702, %v720, 0.0
    %723 = vadd.xlane.f32.xlu0 %v722
    %v724 = vpop.xlane.xlu0 %723
    %v725 = vsel %vm702, %v721, 0.0
    %726 = vadd.xlane.f32.xlu0 %v725
    %v727 = vpop.xlane.xlu0 %726
    %v728 = vmul.f32 %v724, %v715
    %v729 = vmul.f32 %v727, %v715
    %v730 = vadd.f32 %v728, 1e-05
    %v731 = vadd.f32 %v729, 1e-05
    %v732 = vrsqrt.pop %v730
    %v733 = vmul.f32 %v732, %v730
    %v734 = vmul.f32 %v733, %v732
    %v735 = vmul.f32 0.5, %v734
    %v736 = vsub.f32 1.5, %v735
    %v737 = vmul.f32 %v732, %v736
    %vm738 = vweird.f32 %v730
    %vm739 = vweird.f32 %v732
    %vm740 = vmor %vm738, %vm739
    %v741 = vsel %vm740, %v732, %v737
    %v742 = vrsqrt.pop %v731
    %v743 = vmul.f32 %v742, %v731
    %v744 = vmul.f32 %v743, %v742
    %v745 = vmul.f32 0.5, %v744
    %v746 = vsub.f32 1.5, %v745
    %v747 = vmul.f32 %v742, %v746
    %vm748 = vweird.f32 %v731
    %vm749 = vweird.f32 %v742
    %vm750 = vmor %vm748, %vm749
    %v751 = vsel %vm750, %v742, %v747
    %v752 = vmul.f32 %v718, %v741
    %v753 = vmul.f32 %v719, %v751
    %v754 = vperm.slane %v700, 0
    %v755 = vmul.f32 %v752, %v754
    %v756 = vmul.f32 %v753, %v754
    %v757 = vperm.slane %v701, 0
    %v758 = vadd.f32 %v755, %v757
    %v759 = vadd.f32 %v756, %v757
    %v760 = vmax.f32 %v758, 0.0
    %v761 = vmax.f32 %v759, 0.0
    %v762 = vpack.c.bf16 %v761, %v760
    %v763 = vld [vmem:[%s14] sm:$0xf]
    %v764 = vld [vmem:[%s14 + $0x4] sm:$0xf]
    %v765 = vld [vmem:[%s14 + $0x8] sm:$0xf]
    %v766 = vld [vmem:[%s14 + $0xc] sm:$0xf]
    %v767 = vld [vmem:[%s14 + $0x10] sm:$0xf]
    %v768 = vld [vmem:[%s14 + $0x14] sm:$0xf]
    %v769 = vld [vmem:[%s14 + $0x18] sm:$0xf]
    %v770 = vld [vmem:[%s14 + $0x1c] sm:$0xf]
    %v771 = vld [vmem:[%s15 + $0x3] sm:$0x1]
    %v772 = vperm.slane %v771, 0
    %v781 = vunpack.c.l.b16 %v763
    %v782 = vunpack.c.l.b16 %v764
    %v783 = vunpack.c.l.b16 %v765
    %v784 = vunpack.c.l.b16 %v766
    %v785 = vunpack.c.l.b16 %v767
    %v786 = vunpack.c.l.b16 %v768
    %v787 = vunpack.c.l.b16 %v769
    %v788 = vunpack.c.l.b16 %v770
    %v789 = vpack.c.b16 %v782, %v781
    %v790 = vpack.c.b16 %v784, %v783
    %v791 = vpack.c.b16 %v786, %v785
    %v792 = vpack.c.b16 %v788, %v787
    %v798 = vsel %vm702, %v762, 0
    %800 = vmatpush.bf16.msra.mxu0 0
    %801 = vmatpush.bf16.msra.mxu0 0
    %802 = vmatpush.bf16.msra.mxu0 0
    %803 = vmatpush.bf16.msra.mxu0 0
    %804 = vmatpush.bf16.msra.mxu0 %v792
    %805 = vmatpush.bf16.msra.mxu0 %v791
    %806 = vmatpush.bf16.msra.mxu0 %v790
    %807 = vmatpush.bf16.msra.mxu0 %v789
    %808 = vmatmul.bf16.gmra.mxu0 %v798
    %v809 = vpop.f32.mrf.mxu0
    %v810 = vadd.f32 %v772, %v809
    %v811 = vpop.f32.mrf.mxu0
    %v812 = vadd.f32 %v772, %v811
    %813 = vdwg.mxu0
    %s814 = scalar_lea.vmem %s15, 4
    %v815 = vld [vmem:[%s814 + $0x1] sm:$0x1]
    %v816 = vld [vmem:[%s814 + $0x2] sm:$0x1]
    %v817 = vsel %vm103, %v810, 0.0
    %818 = vadd.xlane.f32.xlu0 %v817
    %v819 = vpop.xlane.xlu0 %818
    %v820 = vsel %vm103, %v812, 0.0
    %821 = vadd.xlane.f32.xlu0 %v820
    %v822 = vpop.xlane.xlu0 %821
    %v823 = vrcp.pop 32.0
    %v824 = vmul.f32 32.0, %v823
    %v825 = vsub.f32 1.0, %v824
    %v826 = vmul.f32 %v823, %v825
    %v827 = vadd.f32 %v823, %v826
    %vm828 = vweird.f32 %v823
    %v829 = vsel %vm828, %v823, %v827
    %v830 = vmul.f32 %v819, %v829
    %v831 = vmul.f32 %v822, %v829
    %v832 = vsub.f32 %v810, %v830
    %v833 = vsub.f32 %v812, %v831
    %v834 = vmul.f32 %v832, %v832
    %v835 = vmul.f32 %v833, %v833
    %v836 = vsel %vm103, %v834, 0.0
    %837 = vadd.xlane.f32.xlu0 %v836
    %v838 = vpop.xlane.xlu0 %837
    %v839 = vsel %vm103, %v835, 0.0
    %840 = vadd.xlane.f32.xlu0 %v839
    %v841 = vpop.xlane.xlu0 %840
    %v842 = vmul.f32 %v838, %v829
    %v843 = vmul.f32 %v841, %v829
    %v844 = vadd.f32 %v842, 1e-05
    %v845 = vadd.f32 %v843, 1e-05
    %v846 = vrsqrt.pop %v844
    %v847 = vmul.f32 %v846, %v844
    %v848 = vmul.f32 %v847, %v846
    %v849 = vmul.f32 0.5, %v848
    %v850 = vsub.f32 1.5, %v849
    %v851 = vmul.f32 %v846, %v850
    %vm852 = vweird.f32 %v844
    %vm853 = vweird.f32 %v846
    %vm854 = vmor %vm852, %vm853
    %v855 = vsel %vm854, %v846, %v851
    %v856 = vrsqrt.pop %v845
    %v857 = vmul.f32 %v856, %v845
    %v858 = vmul.f32 %v857, %v856
    %v859 = vmul.f32 0.5, %v858
    %v860 = vsub.f32 1.5, %v859
    %v861 = vmul.f32 %v856, %v860
    %vm862 = vweird.f32 %v845
    %vm863 = vweird.f32 %v856
    %vm864 = vmor %vm862, %vm863
    %v865 = vsel %vm864, %v856, %v861
    %v866 = vmul.f32 %v832, %v855
    %v867 = vmul.f32 %v833, %v865
    %v868 = vperm.slane %v815, 0
    %v869 = vmul.f32 %v866, %v868
    %v870 = vmul.f32 %v867, %v868
    %v871 = vperm.slane %v816, 0
    %v872 = vadd.f32 %v869, %v871
    %v873 = vadd.f32 %v870, %v871
    %v874 = vmax.f32 %v872, 0.0
    %v875 = vmax.f32 %v873, 0.0
    %v876 = vpack.c.bf16 %v875, %v874
    %877 = vmatpush.bf16.msra.mxu0 0
    %878 = vmatpush.bf16.msra.mxu0 0
    %879 = vmatpush.bf16.msra.mxu0 0
    %880 = vmatpush.bf16.msra.mxu0 0
    %881 = vmatpush.bf16.msra.mxu0 0
    %882 = vmatpush.bf16.msra.mxu0 0
    %883 = vmatpush.bf16.msra.mxu0 0
    %884 = vmatpush.bf16.msra.mxu0 %v876
    %885 = vmatmul.bf16.gmra.mxu0 %v482
    %v886 = vpop.f32.mrf.mxu0
    %v887 = vadd.f32 %v452, %v886
    %v888 = vpop.f32.mrf.mxu0
    %v889 = vadd.f32 %v454, %v888
    %890 = vmatmul.bf16.gmra.mxu0 %v485
    %v891 = vpop.f32.mrf.mxu0
    %v892 = vadd.f32 %v457, %v891
    %v893 = vpop.f32.mrf.mxu0
    %v894 = vadd.f32 %v459, %v893
    %895 = vdwg.mxu0
    %v896 = vmax.f32 %v887, 0.0
    %v897 = vmax.f32 %v889, 0.0
    %v898 = vmax.f32 %v892, 0.0
    %v899 = vmax.f32 %v894, 0.0
    %v900 = vadd.f32 %v896, 1e-07
    %v901 = vadd.f32 %v897, 1e-07
    %v902 = vadd.f32 %v898, 1e-07
    %v903 = vadd.f32 %v899, 1e-07
    %v904 = vld [vmem:[%s814] sm:$0x1]
    %v905 = vperm.slane %v904, 0
    %v906 = vmul.f32 %v905, %v900
    %v907 = vmul.f32 %v905, %v901
    %v908 = vmul.f32 %v905, %v902
    %v909 = vmul.f32 %v905, %v903
    %v910 = vsel %vm103, %v906, -inf
    %v911 = vsel %vm103, %v907, -inf
    %v912 = vsel %vm103, %v908, -inf
    %v913 = vsel %vm103, %v909, -inf
    %v914 = vmax.f32 %v910, %v911
    %v915 = vmax.f32 %v912, %v913
    %v916 = vmax.f32 %v914, %v915
    %v917 = vrot.slane %v916, 4
    %v918 = vmax.f32 %v916, %v917
    %v919 = vrot.slane %v918, 2
    %v920 = vmax.f32 %v918, %v919
    %v921 = vrot.slane %v920, 1
    %v922 = vmax.f32 %v920, %v921
    %v923 = vsub.f32 %v906, %v922
    %v924 = vsub.f32 %v907, %v922
    %v925 = vsub.f32 %v908, %v922
    %v926 = vsub.f32 %v909, %v922
    %v927 = vmul.f32 %v923, 1.442695
    %v928 = vpow.pop %v927
    %v929 = vmul.f32 %v924, 1.442695
    %v930 = vpow.pop %v929
    %v931 = vmul.f32 %v925, 1.442695
    %v932 = vpow.pop %v931
    %v933 = vmul.f32 %v926, 1.442695
    %v934 = vpow.pop %v933
    %v935 = vmul.f32 %v928, %v900
    %v936 = vmul.f32 %v930, %v901
    %v937 = vmul.f32 %v932, %v902
    %v938 = vmul.f32 %v934, %v903
    %943 = vrot.lane.b32.xlu0 %v928, 32
    %v944 = vpop.permute.xlu0 %943
    %945 = vrot.lane.b32.xlu0 %v930, 32
    %v946 = vpop.permute.xlu0 %945
    %947 = vrot.lane.b32.xlu0 %v932, 32
    %v948 = vpop.permute.xlu0 %947
    %949 = vrot.lane.b32.xlu0 %v934, 32
    %v950 = vpop.permute.xlu0 %949
    %v955 = vsel %vm103, %v935, %v944
    %v956 = vsel %vm103, %v936, %v946
    %v957 = vsel %vm103, %v937, %v948
    %v958 = vsel %vm103, %v938, %v950
    %v959 = vpack.c.bf16 %v956, %v955
    %v960 = vpack.c.bf16 %v958, %v957
    %961 = vmatpush.bf16.msra.mxu0 0
    %962 = vmatpush.bf16.msra.mxu0 0
    %963 = vmatpush.bf16.msra.mxu0 0
    %964 = vmatpush.bf16.msra.mxu0 0
    %965 = vmatpush.bf16.msra.mxu0 0
    %966 = vmatpush.bf16.msra.mxu0 0
    %967 = vmatpush.bf16.msra.mxu0 %v960
    %968 = vmatpush.bf16.msra.mxu0 %v959
    %969 = vmatmul.bf16.gmra.mxu0 %v600
    %v970 = vpop.f32.mrf.mxu0
    %v971 = vadd.f32 0.0, %v970
    %v972 = vpop.f32.mrf.mxu0
    %v973 = vadd.f32 0.0, %v972
    %974 = vdwg.mxu0
    %vm975 = vcmp.gt.f32.partialorder %v971, 0.0
    %vm976 = vcmp.gt.f32.partialorder %v973, 0.0
    %v977 = vmax.f32 %v971, 1e-30
    %v978 = vmax.f32 %v973, 1e-30
    %v979 = vrcp.pop %v977
    %v980 = vmul.f32 %v977, %v979
    %v981 = vsub.f32 1.0, %v980
    %v982 = vmul.f32 %v979, %v981
    %v983 = vadd.f32 %v979, %v982
    %vm984 = vweird.f32 %v977
    %vm985 = vweird.f32 %v979
    %vm986 = vmor %vm984, %vm985
    %v987 = vsel %vm986, %v979, %v983
    %v988 = vand.u32 2147483647, %v977
    %vm989 = vcmp.eq.f32.partialorder %v988, 8.507059e+37
    %v990 = vand.u32 %v977, 2147483648
    %v991 = vor.u32 1.1754944e-38, %v990
    %v992 = vsel %vm989, %v991, %v987
    %v993 = vmul.f32 1.0, %v992
    %v994 = vrcp.pop %v978
    %v995 = vmul.f32 %v978, %v994
    %v996 = vsub.f32 1.0, %v995
    %v997 = vmul.f32 %v994, %v996
    %v998 = vadd.f32 %v994, %v997
    %vm999 = vweird.f32 %v978
    %vm1000 = vweird.f32 %v994
    %vm1001 = vmor %vm999, %vm1000
    %v1002 = vsel %vm1001, %v994, %v998
    %v1003 = vand.u32 2147483647, %v978
    %vm1004 = vcmp.eq.f32.partialorder %v1003, 8.507059e+37
    %v1005 = vand.u32 %v978, 2147483648
    %v1006 = vor.u32 1.1754944e-38, %v1005
    %v1007 = vsel %vm1004, %v1006, %v1002
    %v1008 = vmul.f32 1.0, %v1007
    %v1009 = vsel %vm975, %v993, 0.0
    %v1010 = vsel %vm976, %v1008, 0.0
    %1013 = vrot.lane.b32.xlu0 %v1009, 96
    %v1014 = vpop.permute.xlu0 %1013
    %1015 = vrot.lane.b32.xlu0 %v1010, 96
    %v1016 = vpop.permute.xlu0 %1015
    %v1019 = vmul.f32 %v971, %v1014
    %v1020 = vmul.f32 %v973, %v1016
    %v1021 = vadd.f32 %v1019, %v874
    %v1022 = vadd.f32 %v1020, %v875
    %v1023 = vpack.c.bf16 %v1022, %v1021
    %s1024 = scalar_lea.vmem %s13, 16
    %v1025 = vld [vmem:[%s1024] sm:$0xf]
    %v1026 = vld [vmem:[%s1024 + $0x4] sm:$0xf]
    %v1027 = vld [vmem:[%s1024 + $0x8] sm:$0xf]
    %v1028 = vld [vmem:[%s1024 + $0xc] sm:$0xf]
    %s1029 = scalar_lea.vmem %s16, 4
    %v1030 = vld [vmem:[%s1029] sm:$0x1]
    %v1031 = vperm.slane %v1030, 0
    %v1036 = vunpack.c.l.b16 %v1025
    %v1037 = vunpack.c.l.b16 %v1026
    %v1038 = vunpack.c.l.b16 %v1027
    %v1039 = vunpack.c.l.b16 %v1028
    %v1040 = vpack.c.b16 %v1037, %v1036
    %v1041 = vpack.c.b16 %v1039, %v1038
    %v1045 = vsel %vm103, %v1023, 0
    %1047 = vmatpush.bf16.msra.mxu0 0
    %1048 = vmatpush.bf16.msra.mxu0 0
    %1049 = vmatpush.bf16.msra.mxu0 0
    %1050 = vmatpush.bf16.msra.mxu0 0
    %1051 = vmatpush.bf16.msra.mxu0 0
    %1052 = vmatpush.bf16.msra.mxu0 0
    %1053 = vmatpush.bf16.msra.mxu0 %v1041
    %1054 = vmatpush.bf16.msra.mxu0 %v1040
    %1055 = vmatmul.bf16.gmra.mxu0 %v1045
    %v1056 = vpop.f32.mrf.mxu0
    %v1057 = vadd.f32 %v1031, %v1056
    %v1058 = vpop.f32.mrf.mxu0
    %v1059 = vadd.f32 %v1031, %v1058
    %1060 = vdwg.mxu0
    %v1061 = vld [vmem:[%s1029 + $0x1] sm:$0x1]
    %v1062 = vld [vmem:[%s1029 + $0x2] sm:$0x1]
    %v1063 = vsel %vm702, %v1057, 0.0
    %1064 = vadd.xlane.f32.xlu0 %v1063
    %v1065 = vpop.xlane.xlu0 %1064
    %v1066 = vsel %vm702, %v1059, 0.0
    %1067 = vadd.xlane.f32.xlu0 %v1066
    %v1068 = vpop.xlane.xlu0 %1067
    %v1069 = vmul.f32 %v1065, %v715
    %v1070 = vmul.f32 %v1068, %v715
    %v1071 = vsub.f32 %v1057, %v1069
    %v1072 = vsub.f32 %v1059, %v1070
    %v1073 = vmul.f32 %v1071, %v1071
    %v1074 = vmul.f32 %v1072, %v1072
    %v1075 = vsel %vm702, %v1073, 0.0
    %1076 = vadd.xlane.f32.xlu0 %v1075
    %v1077 = vpop.xlane.xlu0 %1076
    %v1078 = vsel %vm702, %v1074, 0.0
    %1079 = vadd.xlane.f32.xlu0 %v1078
    %v1080 = vpop.xlane.xlu0 %1079
    %v1081 = vmul.f32 %v1077, %v715
    %v1082 = vmul.f32 %v1080, %v715
    %v1083 = vadd.f32 %v1081, 1e-05
    %v1084 = vadd.f32 %v1082, 1e-05
    %v1085 = vrsqrt.pop %v1083
    %v1086 = vmul.f32 %v1085, %v1083
    %v1087 = vmul.f32 %v1086, %v1085
    %v1088 = vmul.f32 0.5, %v1087
    %v1089 = vsub.f32 1.5, %v1088
    %v1090 = vmul.f32 %v1085, %v1089
    %vm1091 = vweird.f32 %v1083
    %vm1092 = vweird.f32 %v1085
    %vm1093 = vmor %vm1091, %vm1092
    %v1094 = vsel %vm1093, %v1085, %v1090
    %v1095 = vrsqrt.pop %v1084
    %v1096 = vmul.f32 %v1095, %v1084
    %v1097 = vmul.f32 %v1096, %v1095
    %v1098 = vmul.f32 0.5, %v1097
    %v1099 = vsub.f32 1.5, %v1098
    %v1100 = vmul.f32 %v1095, %v1099
    %vm1101 = vweird.f32 %v1084
    %vm1102 = vweird.f32 %v1095
    %vm1103 = vmor %vm1101, %vm1102
    %v1104 = vsel %vm1103, %v1095, %v1100
    %v1105 = vmul.f32 %v1071, %v1094
    %v1106 = vmul.f32 %v1072, %v1104
    %v1107 = vperm.slane %v1061, 0
    %v1108 = vmul.f32 %v1105, %v1107
    %v1109 = vmul.f32 %v1106, %v1107
    %v1110 = vperm.slane %v1062, 0
    %v1111 = vadd.f32 %v1108, %v1110
    %v1112 = vadd.f32 %v1109, %v1110
    %v1113 = vmax.f32 %v1111, 0.0
    %v1114 = vmax.f32 %v1112, 0.0
    %v1115 = vpack.c.bf16 %v1114, %v1113
    %s1116 = scalar_lea.vmem %s14, 32
    %v1117 = vld [vmem:[%s1116] sm:$0xf]
    %v1118 = vld [vmem:[%s1116 + $0x4] sm:$0xf]
    %v1119 = vld [vmem:[%s1116 + $0x8] sm:$0xf]
    %v1120 = vld [vmem:[%s1116 + $0xc] sm:$0xf]
    %v1121 = vld [vmem:[%s1116 + $0x10] sm:$0xf]
    %v1122 = vld [vmem:[%s1116 + $0x14] sm:$0xf]
    %v1123 = vld [vmem:[%s1116 + $0x18] sm:$0xf]
    %v1124 = vld [vmem:[%s1116 + $0x1c] sm:$0xf]
    %v1125 = vld [vmem:[%s814 + $0x3] sm:$0x1]
    %v1126 = vperm.slane %v1125, 0
    %v1135 = vunpack.c.l.b16 %v1117
    %v1136 = vunpack.c.l.b16 %v1118
    %v1137 = vunpack.c.l.b16 %v1119
    %v1138 = vunpack.c.l.b16 %v1120
    %v1139 = vunpack.c.l.b16 %v1121
    %v1140 = vunpack.c.l.b16 %v1122
    %v1141 = vunpack.c.l.b16 %v1123
    %v1142 = vunpack.c.l.b16 %v1124
    %v1143 = vpack.c.b16 %v1136, %v1135
    %v1144 = vpack.c.b16 %v1138, %v1137
    %v1145 = vpack.c.b16 %v1140, %v1139
    %v1146 = vpack.c.b16 %v1142, %v1141
    %v1152 = vsel %vm702, %v1115, 0
    %1154 = vmatpush.bf16.msra.mxu0 0
    %1155 = vmatpush.bf16.msra.mxu0 0
    %1156 = vmatpush.bf16.msra.mxu0 0
    %1157 = vmatpush.bf16.msra.mxu0 0
    %1158 = vmatpush.bf16.msra.mxu0 %v1146
    %1159 = vmatpush.bf16.msra.mxu0 %v1145
    %1160 = vmatpush.bf16.msra.mxu0 %v1144
    %1161 = vmatpush.bf16.msra.mxu0 %v1143
    %1162 = vmatmul.bf16.gmra.mxu0 %v1152
    %v1163 = vpop.f32.mrf.mxu0
    %v1164 = vadd.f32 %v1126, %v1163
    %v1165 = vpop.f32.mrf.mxu0
    %v1166 = vadd.f32 %v1126, %v1165
    %1167 = vdwg.mxu0
    %v1168 = vadd.f32 %v810, %v1164
    %v1169 = vadd.f32 %v812, %v1166
    %s1170 = scalar_lea.vmem %s15, 8
    %v1171 = vld [vmem:[%s1170 + $0x1] sm:$0x1]
    %v1172 = vld [vmem:[%s1170 + $0x2] sm:$0x1]
    %v1173 = vsel %vm103, %v1168, 0.0
    %1174 = vadd.xlane.f32.xlu0 %v1173
    %v1175 = vpop.xlane.xlu0 %1174
    %v1176 = vsel %vm103, %v1169, 0.0
    %1177 = vadd.xlane.f32.xlu0 %v1176
    %v1178 = vpop.xlane.xlu0 %1177
    %v1179 = vmul.f32 %v1175, %v829
    %v1180 = vmul.f32 %v1178, %v829
    %v1181 = vsub.f32 %v1168, %v1179
    %v1182 = vsub.f32 %v1169, %v1180
    %v1183 = vmul.f32 %v1181, %v1181
    %v1184 = vmul.f32 %v1182, %v1182
    %v1185 = vsel %vm103, %v1183, 0.0
    %1186 = vadd.xlane.f32.xlu0 %v1185
    %v1187 = vpop.xlane.xlu0 %1186
    %v1188 = vsel %vm103, %v1184, 0.0
    %1189 = vadd.xlane.f32.xlu0 %v1188
    %v1190 = vpop.xlane.xlu0 %1189
    %v1191 = vmul.f32 %v1187, %v829
    %v1192 = vmul.f32 %v1190, %v829
    %v1193 = vadd.f32 %v1191, 1e-05
    %v1194 = vadd.f32 %v1192, 1e-05
    %v1195 = vrsqrt.pop %v1193
    %v1196 = vmul.f32 %v1195, %v1193
    %v1197 = vmul.f32 %v1196, %v1195
    %v1198 = vmul.f32 0.5, %v1197
    %v1199 = vsub.f32 1.5, %v1198
    %v1200 = vmul.f32 %v1195, %v1199
    %vm1201 = vweird.f32 %v1193
    %vm1202 = vweird.f32 %v1195
    %vm1203 = vmor %vm1201, %vm1202
    %v1204 = vsel %vm1203, %v1195, %v1200
    %v1205 = vrsqrt.pop %v1194
    %v1206 = vmul.f32 %v1205, %v1194
    %v1207 = vmul.f32 %v1206, %v1205
    %v1208 = vmul.f32 0.5, %v1207
    %v1209 = vsub.f32 1.5, %v1208
    %v1210 = vmul.f32 %v1205, %v1209
    %vm1211 = vweird.f32 %v1194
    %vm1212 = vweird.f32 %v1205
    %vm1213 = vmor %vm1211, %vm1212
    %v1214 = vsel %vm1213, %v1205, %v1210
    %v1215 = vmul.f32 %v1181, %v1204
    %v1216 = vmul.f32 %v1182, %v1214
    %v1217 = vperm.slane %v1171, 0
    %v1218 = vmul.f32 %v1215, %v1217
    %v1219 = vmul.f32 %v1216, %v1217
    %v1220 = vperm.slane %v1172, 0
    %v1221 = vadd.f32 %v1218, %v1220
    %v1222 = vadd.f32 %v1219, %v1220
    %v1223 = vmax.f32 %v1221, 0.0
    %v1224 = vmax.f32 %v1222, 0.0
    %v1225 = vpack.c.bf16 %v1224, %v1223
    %1226 = vmatpush.bf16.msra.mxu0 0
    %1227 = vmatpush.bf16.msra.mxu0 0
    %1228 = vmatpush.bf16.msra.mxu0 0
    %1229 = vmatpush.bf16.msra.mxu0 0
    %1230 = vmatpush.bf16.msra.mxu0 0
    %1231 = vmatpush.bf16.msra.mxu0 0
    %1232 = vmatpush.bf16.msra.mxu0 0
    %1233 = vmatpush.bf16.msra.mxu0 %v1225
    %1234 = vmatmul.bf16.gmra.mxu0 %v482
    %v1235 = vpop.f32.mrf.mxu0
    %v1236 = vadd.f32 %v452, %v1235
    %v1237 = vpop.f32.mrf.mxu0
    %v1238 = vadd.f32 %v454, %v1237
    %1239 = vmatmul.bf16.gmra.mxu0 %v485
    %v1240 = vpop.f32.mrf.mxu0
    %v1241 = vadd.f32 %v457, %v1240
    %v1242 = vpop.f32.mrf.mxu0
    %v1243 = vadd.f32 %v459, %v1242
    %1244 = vdwg.mxu0
    %v1245 = vmax.f32 %v1236, 0.0
    %v1246 = vmax.f32 %v1238, 0.0
    %v1247 = vmax.f32 %v1241, 0.0
    %v1248 = vmax.f32 %v1243, 0.0
    %v1249 = vadd.f32 %v1245, 1e-07
    %v1250 = vadd.f32 %v1246, 1e-07
    %v1251 = vadd.f32 %v1247, 1e-07
    %v1252 = vadd.f32 %v1248, 1e-07
    %v1253 = vld [vmem:[%s1170] sm:$0x1]
    %v1254 = vperm.slane %v1253, 0
    %v1255 = vmul.f32 %v1254, %v1249
    %v1256 = vmul.f32 %v1254, %v1250
    %v1257 = vmul.f32 %v1254, %v1251
    %v1258 = vmul.f32 %v1254, %v1252
    %v1259 = vsel %vm103, %v1255, -inf
    %v1260 = vsel %vm103, %v1256, -inf
    %v1261 = vsel %vm103, %v1257, -inf
    %v1262 = vsel %vm103, %v1258, -inf
    %v1263 = vmax.f32 %v1259, %v1260
    %v1264 = vmax.f32 %v1261, %v1262
    %v1265 = vmax.f32 %v1263, %v1264
    %v1266 = vrot.slane %v1265, 4
    %v1267 = vmax.f32 %v1265, %v1266
    %v1268 = vrot.slane %v1267, 2
    %v1269 = vmax.f32 %v1267, %v1268
    %v1270 = vrot.slane %v1269, 1
    %v1271 = vmax.f32 %v1269, %v1270
    %v1272 = vsub.f32 %v1255, %v1271
    %v1273 = vsub.f32 %v1256, %v1271
    %v1274 = vsub.f32 %v1257, %v1271
    %v1275 = vsub.f32 %v1258, %v1271
    %v1276 = vmul.f32 %v1272, 1.442695
    %v1277 = vpow.pop %v1276
    %v1278 = vmul.f32 %v1273, 1.442695
    %v1279 = vpow.pop %v1278
    %v1280 = vmul.f32 %v1274, 1.442695
    %v1281 = vpow.pop %v1280
    %v1282 = vmul.f32 %v1275, 1.442695
    %v1283 = vpow.pop %v1282
    %v1284 = vmul.f32 %v1277, %v1249
    %v1285 = vmul.f32 %v1279, %v1250
    %v1286 = vmul.f32 %v1281, %v1251
    %v1287 = vmul.f32 %v1283, %v1252
    %1292 = vrot.lane.b32.xlu0 %v1277, 32
    %v1293 = vpop.permute.xlu0 %1292
    %1294 = vrot.lane.b32.xlu0 %v1279, 32
    %v1295 = vpop.permute.xlu0 %1294
    %1296 = vrot.lane.b32.xlu0 %v1281, 32
    %v1297 = vpop.permute.xlu0 %1296
    %1298 = vrot.lane.b32.xlu0 %v1283, 32
    %v1299 = vpop.permute.xlu0 %1298
    %v1304 = vsel %vm103, %v1284, %v1293
    %v1305 = vsel %vm103, %v1285, %v1295
    %v1306 = vsel %vm103, %v1286, %v1297
    %v1307 = vsel %vm103, %v1287, %v1299
    %v1308 = vpack.c.bf16 %v1305, %v1304
    %v1309 = vpack.c.bf16 %v1307, %v1306
    %1310 = vmatpush.bf16.msra.mxu0 0
    %1311 = vmatpush.bf16.msra.mxu0 0
    %1312 = vmatpush.bf16.msra.mxu0 0
    %1313 = vmatpush.bf16.msra.mxu0 0
    %1314 = vmatpush.bf16.msra.mxu0 0
    %1315 = vmatpush.bf16.msra.mxu0 0
    %1316 = vmatpush.bf16.msra.mxu0 %v1309
    %1317 = vmatpush.bf16.msra.mxu0 %v1308
    %1318 = vmatmul.bf16.gmra.mxu0 %v600
    %v1319 = vpop.f32.mrf.mxu0
    %v1320 = vadd.f32 0.0, %v1319
    %v1321 = vpop.f32.mrf.mxu0
    %v1322 = vadd.f32 0.0, %v1321
    %1323 = vdwg.mxu0
    %vm1324 = vcmp.gt.f32.partialorder %v1320, 0.0
    %vm1325 = vcmp.gt.f32.partialorder %v1322, 0.0
    %v1326 = vmax.f32 %v1320, 1e-30
    %v1327 = vmax.f32 %v1322, 1e-30
    %v1328 = vrcp.pop %v1326
    %v1329 = vmul.f32 %v1326, %v1328
    %v1330 = vsub.f32 1.0, %v1329
    %v1331 = vmul.f32 %v1328, %v1330
    %v1332 = vadd.f32 %v1328, %v1331
    %vm1333 = vweird.f32 %v1326
    %vm1334 = vweird.f32 %v1328
    %vm1335 = vmor %vm1333, %vm1334
    %v1336 = vsel %vm1335, %v1328, %v1332
    %v1337 = vand.u32 2147483647, %v1326
    %vm1338 = vcmp.eq.f32.partialorder %v1337, 8.507059e+37
    %v1339 = vand.u32 %v1326, 2147483648
    %v1340 = vor.u32 1.1754944e-38, %v1339
    %v1341 = vsel %vm1338, %v1340, %v1336
    %v1342 = vmul.f32 1.0, %v1341
    %v1343 = vrcp.pop %v1327
    %v1344 = vmul.f32 %v1327, %v1343
    %v1345 = vsub.f32 1.0, %v1344
    %v1346 = vmul.f32 %v1343, %v1345
    %v1347 = vadd.f32 %v1343, %v1346
    %vm1348 = vweird.f32 %v1327
    %vm1349 = vweird.f32 %v1343
    %vm1350 = vmor %vm1348, %vm1349
    %v1351 = vsel %vm1350, %v1343, %v1347
    %v1352 = vand.u32 2147483647, %v1327
    %vm1353 = vcmp.eq.f32.partialorder %v1352, 8.507059e+37
    %v1354 = vand.u32 %v1327, 2147483648
    %v1355 = vor.u32 1.1754944e-38, %v1354
    %v1356 = vsel %vm1353, %v1355, %v1351
    %v1357 = vmul.f32 1.0, %v1356
    %v1358 = vsel %vm1324, %v1342, 0.0
    %v1359 = vsel %vm1325, %v1357, 0.0
    %1362 = vrot.lane.b32.xlu0 %v1358, 96
    %v1363 = vpop.permute.xlu0 %1362
    %1364 = vrot.lane.b32.xlu0 %v1359, 96
    %v1365 = vpop.permute.xlu0 %1364
    %v1368 = vmul.f32 %v1320, %v1363
    %v1369 = vmul.f32 %v1322, %v1365
    %v1370 = vadd.f32 %v1368, %v1223
    %v1371 = vadd.f32 %v1369, %v1224
    %v1372 = vpack.c.bf16 %v1371, %v1370
    %s1373 = scalar_lea.vmem %s13, 32
    %v1374 = vld [vmem:[%s1373] sm:$0xf]
    %v1375 = vld [vmem:[%s1373 + $0x4] sm:$0xf]
    %v1376 = vld [vmem:[%s1373 + $0x8] sm:$0xf]
    %v1377 = vld [vmem:[%s1373 + $0xc] sm:$0xf]
    %s1378 = scalar_lea.vmem %s16, 8
    %v1379 = vld [vmem:[%s1378] sm:$0x1]
    %v1380 = vperm.slane %v1379, 0
    %v1385 = vunpack.c.l.b16 %v1374
    %v1386 = vunpack.c.l.b16 %v1375
    %v1387 = vunpack.c.l.b16 %v1376
    %v1388 = vunpack.c.l.b16 %v1377
    %v1389 = vpack.c.b16 %v1386, %v1385
    %v1390 = vpack.c.b16 %v1388, %v1387
    %v1394 = vsel %vm103, %v1372, 0
    %1396 = vmatpush.bf16.msra.mxu0 0
    %1397 = vmatpush.bf16.msra.mxu0 0
    %1398 = vmatpush.bf16.msra.mxu0 0
    %1399 = vmatpush.bf16.msra.mxu0 0
    %1400 = vmatpush.bf16.msra.mxu0 0
    %1401 = vmatpush.bf16.msra.mxu0 0
    %1402 = vmatpush.bf16.msra.mxu0 %v1390
    %1403 = vmatpush.bf16.msra.mxu0 %v1389
    %1404 = vmatmul.bf16.gmra.mxu0 %v1394
    %v1405 = vpop.f32.mrf.mxu0
    %v1406 = vadd.f32 %v1380, %v1405
    %v1407 = vpop.f32.mrf.mxu0
    %v1408 = vadd.f32 %v1380, %v1407
    %1409 = vdwg.mxu0
    %v1410 = vld [vmem:[%s1378 + $0x1] sm:$0x1]
    %v1411 = vld [vmem:[%s1378 + $0x2] sm:$0x1]
    %v1412 = vsel %vm702, %v1406, 0.0
    %1413 = vadd.xlane.f32.xlu0 %v1412
    %v1414 = vpop.xlane.xlu0 %1413
    %v1415 = vsel %vm702, %v1408, 0.0
    %1416 = vadd.xlane.f32.xlu0 %v1415
    %v1417 = vpop.xlane.xlu0 %1416
    %v1418 = vmul.f32 %v1414, %v715
    %v1419 = vmul.f32 %v1417, %v715
    %v1420 = vsub.f32 %v1406, %v1418
    %v1421 = vsub.f32 %v1408, %v1419
    %v1422 = vmul.f32 %v1420, %v1420
    %v1423 = vmul.f32 %v1421, %v1421
    %v1424 = vsel %vm702, %v1422, 0.0
    %1425 = vadd.xlane.f32.xlu0 %v1424
    %v1426 = vpop.xlane.xlu0 %1425
    %v1427 = vsel %vm702, %v1423, 0.0
    %1428 = vadd.xlane.f32.xlu0 %v1427
    %v1429 = vpop.xlane.xlu0 %1428
    %v1430 = vmul.f32 %v1426, %v715
    %v1431 = vmul.f32 %v1429, %v715
    %v1432 = vadd.f32 %v1430, 1e-05
    %v1433 = vadd.f32 %v1431, 1e-05
    %v1434 = vrsqrt.pop %v1432
    %v1435 = vmul.f32 %v1434, %v1432
    %v1436 = vmul.f32 %v1435, %v1434
    %v1437 = vmul.f32 0.5, %v1436
    %v1438 = vsub.f32 1.5, %v1437
    %v1439 = vmul.f32 %v1434, %v1438
    %vm1440 = vweird.f32 %v1432
    %vm1441 = vweird.f32 %v1434
    %vm1442 = vmor %vm1440, %vm1441
    %v1443 = vsel %vm1442, %v1434, %v1439
    %v1444 = vrsqrt.pop %v1433
    %v1445 = vmul.f32 %v1444, %v1433
    %v1446 = vmul.f32 %v1445, %v1444
    %v1447 = vmul.f32 0.5, %v1446
    %v1448 = vsub.f32 1.5, %v1447
    %v1449 = vmul.f32 %v1444, %v1448
    %vm1450 = vweird.f32 %v1433
    %vm1451 = vweird.f32 %v1444
    %vm1452 = vmor %vm1450, %vm1451
    %v1453 = vsel %vm1452, %v1444, %v1449
    %v1454 = vmul.f32 %v1420, %v1443
    %v1455 = vmul.f32 %v1421, %v1453
    %v1456 = vperm.slane %v1410, 0
    %v1457 = vmul.f32 %v1454, %v1456
    %v1458 = vmul.f32 %v1455, %v1456
    %v1459 = vperm.slane %v1411, 0
    %v1460 = vadd.f32 %v1457, %v1459
    %v1461 = vadd.f32 %v1458, %v1459
    %v1462 = vmax.f32 %v1460, 0.0
    %v1463 = vmax.f32 %v1461, 0.0
    %v1464 = vpack.c.bf16 %v1463, %v1462
    %s1465 = scalar_lea.vmem %s14, 64
    %v1466 = vld [vmem:[%s1465] sm:$0xf]
    %v1467 = vld [vmem:[%s1465 + $0x4] sm:$0xf]
    %v1468 = vld [vmem:[%s1465 + $0x8] sm:$0xf]
    %v1469 = vld [vmem:[%s1465 + $0xc] sm:$0xf]
    %v1470 = vld [vmem:[%s1465 + $0x10] sm:$0xf]
    %v1471 = vld [vmem:[%s1465 + $0x14] sm:$0xf]
    %v1472 = vld [vmem:[%s1465 + $0x18] sm:$0xf]
    %v1473 = vld [vmem:[%s1465 + $0x1c] sm:$0xf]
    %v1474 = vld [vmem:[%s1170 + $0x3] sm:$0x1]
    %v1475 = vperm.slane %v1474, 0
    %v1484 = vunpack.c.l.b16 %v1466
    %v1485 = vunpack.c.l.b16 %v1467
    %v1486 = vunpack.c.l.b16 %v1468
    %v1487 = vunpack.c.l.b16 %v1469
    %v1488 = vunpack.c.l.b16 %v1470
    %v1489 = vunpack.c.l.b16 %v1471
    %v1490 = vunpack.c.l.b16 %v1472
    %v1491 = vunpack.c.l.b16 %v1473
    %v1492 = vpack.c.b16 %v1485, %v1484
    %v1493 = vpack.c.b16 %v1487, %v1486
    %v1494 = vpack.c.b16 %v1489, %v1488
    %v1495 = vpack.c.b16 %v1491, %v1490
    %v1501 = vsel %vm702, %v1464, 0
    %1503 = vmatpush.bf16.msra.mxu0 0
    %1504 = vmatpush.bf16.msra.mxu0 0
    %1505 = vmatpush.bf16.msra.mxu0 0
    %1506 = vmatpush.bf16.msra.mxu0 0
    %1507 = vmatpush.bf16.msra.mxu0 %v1495
    %1508 = vmatpush.bf16.msra.mxu0 %v1494
    %1509 = vmatpush.bf16.msra.mxu0 %v1493
    %1510 = vmatpush.bf16.msra.mxu0 %v1492
    %1511 = vmatmul.bf16.gmra.mxu0 %v1501
    %v1512 = vpop.f32.mrf.mxu0
    %v1513 = vadd.f32 %v1475, %v1512
    %v1514 = vpop.f32.mrf.mxu0
    %v1515 = vadd.f32 %v1475, %v1514
    %1516 = vdwg.mxu0
    %v1517 = vadd.f32 %v1168, %v1513
    %v1518 = vadd.f32 %v1169, %v1515
    %s1519 = scalar_lea.vmem %s15, 12
    %v1520 = vld [vmem:[%s1519 + $0x1] sm:$0x1]
    %v1521 = vld [vmem:[%s1519 + $0x2] sm:$0x1]
    %v1522 = vsel %vm103, %v1517, 0.0
    %1523 = vadd.xlane.f32.xlu0 %v1522
    %v1524 = vpop.xlane.xlu0 %1523
    %v1525 = vsel %vm103, %v1518, 0.0
    %1526 = vadd.xlane.f32.xlu0 %v1525
    %v1527 = vpop.xlane.xlu0 %1526
    %v1528 = vmul.f32 %v1524, %v829
    %v1529 = vmul.f32 %v1527, %v829
    %v1530 = vsub.f32 %v1517, %v1528
    %v1531 = vsub.f32 %v1518, %v1529
    %v1532 = vmul.f32 %v1530, %v1530
    %v1533 = vmul.f32 %v1531, %v1531
    %v1534 = vsel %vm103, %v1532, 0.0
    %1535 = vadd.xlane.f32.xlu0 %v1534
    %v1536 = vpop.xlane.xlu0 %1535
    %v1537 = vsel %vm103, %v1533, 0.0
    %1538 = vadd.xlane.f32.xlu0 %v1537
    %v1539 = vpop.xlane.xlu0 %1538
    %v1540 = vmul.f32 %v1536, %v829
    %v1541 = vmul.f32 %v1539, %v829
    %v1542 = vadd.f32 %v1540, 1e-05
    %v1543 = vadd.f32 %v1541, 1e-05
    %v1544 = vrsqrt.pop %v1542
    %v1545 = vmul.f32 %v1544, %v1542
    %v1546 = vmul.f32 %v1545, %v1544
    %v1547 = vmul.f32 0.5, %v1546
    %v1548 = vsub.f32 1.5, %v1547
    %v1549 = vmul.f32 %v1544, %v1548
    %vm1550 = vweird.f32 %v1542
    %vm1551 = vweird.f32 %v1544
    %vm1552 = vmor %vm1550, %vm1551
    %v1553 = vsel %vm1552, %v1544, %v1549
    %v1554 = vrsqrt.pop %v1543
    %v1555 = vmul.f32 %v1554, %v1543
    %v1556 = vmul.f32 %v1555, %v1554
    %v1557 = vmul.f32 0.5, %v1556
    %v1558 = vsub.f32 1.5, %v1557
    %v1559 = vmul.f32 %v1554, %v1558
    %vm1560 = vweird.f32 %v1543
    %vm1561 = vweird.f32 %v1554
    %vm1562 = vmor %vm1560, %vm1561
    %v1563 = vsel %vm1562, %v1554, %v1559
    %v1564 = vmul.f32 %v1530, %v1553
    %v1565 = vmul.f32 %v1531, %v1563
    %v1566 = vperm.slane %v1520, 0
    %v1567 = vmul.f32 %v1564, %v1566
    %v1568 = vmul.f32 %v1565, %v1566
    %v1569 = vperm.slane %v1521, 0
    %v1570 = vadd.f32 %v1567, %v1569
    %v1571 = vadd.f32 %v1568, %v1569
    %v1572 = vmax.f32 %v1570, 0.0
    %v1573 = vmax.f32 %v1571, 0.0
    %v1574 = vpack.c.bf16 %v1573, %v1572
    %1575 = vmatpush.bf16.msra.mxu0 0
    %1576 = vmatpush.bf16.msra.mxu0 0
    %1577 = vmatpush.bf16.msra.mxu0 0
    %1578 = vmatpush.bf16.msra.mxu0 0
    %1579 = vmatpush.bf16.msra.mxu0 0
    %1580 = vmatpush.bf16.msra.mxu0 0
    %1581 = vmatpush.bf16.msra.mxu0 0
    %1582 = vmatpush.bf16.msra.mxu0 %v1574
    %1583 = vmatmul.bf16.gmra.mxu0 %v482
    %v1584 = vpop.f32.mrf.mxu0
    %v1585 = vadd.f32 %v452, %v1584
    %v1586 = vpop.f32.mrf.mxu0
    %v1587 = vadd.f32 %v454, %v1586
    %1588 = vmatmul.bf16.gmra.mxu0 %v485
    %v1589 = vpop.f32.mrf.mxu0
    %v1590 = vadd.f32 %v457, %v1589
    %v1591 = vpop.f32.mrf.mxu0
    %v1592 = vadd.f32 %v459, %v1591
    %1593 = vdwg.mxu0
    %v1594 = vmax.f32 %v1585, 0.0
    %v1595 = vmax.f32 %v1587, 0.0
    %v1596 = vmax.f32 %v1590, 0.0
    %v1597 = vmax.f32 %v1592, 0.0
    %v1598 = vadd.f32 %v1594, 1e-07
    %v1599 = vadd.f32 %v1595, 1e-07
    %v1600 = vadd.f32 %v1596, 1e-07
    %v1601 = vadd.f32 %v1597, 1e-07
    %v1602 = vld [vmem:[%s1519] sm:$0x1]
    %v1603 = vperm.slane %v1602, 0
    %v1604 = vmul.f32 %v1603, %v1598
    %v1605 = vmul.f32 %v1603, %v1599
    %v1606 = vmul.f32 %v1603, %v1600
    %v1607 = vmul.f32 %v1603, %v1601
    %v1608 = vsel %vm103, %v1604, -inf
    %v1609 = vsel %vm103, %v1605, -inf
    %v1610 = vsel %vm103, %v1606, -inf
    %v1611 = vsel %vm103, %v1607, -inf
    %v1612 = vmax.f32 %v1608, %v1609
    %v1613 = vmax.f32 %v1610, %v1611
    %v1614 = vmax.f32 %v1612, %v1613
    %v1615 = vrot.slane %v1614, 4
    %v1616 = vmax.f32 %v1614, %v1615
    %v1617 = vrot.slane %v1616, 2
    %v1618 = vmax.f32 %v1616, %v1617
    %v1619 = vrot.slane %v1618, 1
    %v1620 = vmax.f32 %v1618, %v1619
    %v1621 = vsub.f32 %v1604, %v1620
    %v1622 = vsub.f32 %v1605, %v1620
    %v1623 = vsub.f32 %v1606, %v1620
    %v1624 = vsub.f32 %v1607, %v1620
    %v1625 = vmul.f32 %v1621, 1.442695
    %v1626 = vpow.pop %v1625
    %v1627 = vmul.f32 %v1622, 1.442695
    %v1628 = vpow.pop %v1627
    %v1629 = vmul.f32 %v1623, 1.442695
    %v1630 = vpow.pop %v1629
    %v1631 = vmul.f32 %v1624, 1.442695
    %v1632 = vpow.pop %v1631
    %v1633 = vmul.f32 %v1626, %v1598
    %v1634 = vmul.f32 %v1628, %v1599
    %v1635 = vmul.f32 %v1630, %v1600
    %v1636 = vmul.f32 %v1632, %v1601
    %1641 = vrot.lane.b32.xlu0 %v1626, 32
    %v1642 = vpop.permute.xlu0 %1641
    %1643 = vrot.lane.b32.xlu0 %v1628, 32
    %v1644 = vpop.permute.xlu0 %1643
    %1645 = vrot.lane.b32.xlu0 %v1630, 32
    %v1646 = vpop.permute.xlu0 %1645
    %1647 = vrot.lane.b32.xlu0 %v1632, 32
    %v1648 = vpop.permute.xlu0 %1647
    %v1653 = vsel %vm103, %v1633, %v1642
    %v1654 = vsel %vm103, %v1634, %v1644
    %v1655 = vsel %vm103, %v1635, %v1646
    %v1656 = vsel %vm103, %v1636, %v1648
    %v1657 = vpack.c.bf16 %v1654, %v1653
    %v1658 = vpack.c.bf16 %v1656, %v1655
    %1659 = vmatpush.bf16.msra.mxu0 0
    %1660 = vmatpush.bf16.msra.mxu0 0
    %1661 = vmatpush.bf16.msra.mxu0 0
    %1662 = vmatpush.bf16.msra.mxu0 0
    %1663 = vmatpush.bf16.msra.mxu0 0
    %1664 = vmatpush.bf16.msra.mxu0 0
    %1665 = vmatpush.bf16.msra.mxu0 %v1658
    %1666 = vmatpush.bf16.msra.mxu0 %v1657
    %1667 = vmatmul.bf16.gmra.mxu0 %v600
    %v1668 = vpop.f32.mrf.mxu0
    %v1669 = vadd.f32 0.0, %v1668
    %v1670 = vpop.f32.mrf.mxu0
    %v1671 = vadd.f32 0.0, %v1670
    %1672 = vdwg.mxu0
    %vm1673 = vcmp.gt.f32.partialorder %v1669, 0.0
    %vm1674 = vcmp.gt.f32.partialorder %v1671, 0.0
    %v1675 = vmax.f32 %v1669, 1e-30
    %v1676 = vmax.f32 %v1671, 1e-30
    %v1677 = vrcp.pop %v1675
    %v1678 = vmul.f32 %v1675, %v1677
    %v1679 = vsub.f32 1.0, %v1678
    %v1680 = vmul.f32 %v1677, %v1679
    %v1681 = vadd.f32 %v1677, %v1680
    %vm1682 = vweird.f32 %v1675
    %vm1683 = vweird.f32 %v1677
    %vm1684 = vmor %vm1682, %vm1683
    %v1685 = vsel %vm1684, %v1677, %v1681
    %v1686 = vand.u32 2147483647, %v1675
    %vm1687 = vcmp.eq.f32.partialorder %v1686, 8.507059e+37
    %v1688 = vand.u32 %v1675, 2147483648
    %v1689 = vor.u32 1.1754944e-38, %v1688
    %v1690 = vsel %vm1687, %v1689, %v1685
    %v1691 = vmul.f32 1.0, %v1690
    %v1692 = vrcp.pop %v1676
    %v1693 = vmul.f32 %v1676, %v1692
    %v1694 = vsub.f32 1.0, %v1693
    %v1695 = vmul.f32 %v1692, %v1694
    %v1696 = vadd.f32 %v1692, %v1695
    %vm1697 = vweird.f32 %v1676
    %vm1698 = vweird.f32 %v1692
    %vm1699 = vmor %vm1697, %vm1698
    %v1700 = vsel %vm1699, %v1692, %v1696
    %v1701 = vand.u32 2147483647, %v1676
    %vm1702 = vcmp.eq.f32.partialorder %v1701, 8.507059e+37
    %v1703 = vand.u32 %v1676, 2147483648
    %v1704 = vor.u32 1.1754944e-38, %v1703
    %v1705 = vsel %vm1702, %v1704, %v1700
    %v1706 = vmul.f32 1.0, %v1705
    %v1707 = vsel %vm1673, %v1691, 0.0
    %v1708 = vsel %vm1674, %v1706, 0.0
    %1711 = vrot.lane.b32.xlu0 %v1707, 96
    %v1712 = vpop.permute.xlu0 %1711
    %1713 = vrot.lane.b32.xlu0 %v1708, 96
    %v1714 = vpop.permute.xlu0 %1713
    %v1717 = vmul.f32 %v1669, %v1712
    %v1718 = vmul.f32 %v1671, %v1714
    %v1719 = vadd.f32 %v1717, %v1572
    %v1720 = vadd.f32 %v1718, %v1573
    %v1721 = vpack.c.bf16 %v1720, %v1719
    %s1722 = scalar_lea.vmem %s13, 48
    %v1723 = vld [vmem:[%s1722] sm:$0xf]
    %v1724 = vld [vmem:[%s1722 + $0x4] sm:$0xf]
    %v1725 = vld [vmem:[%s1722 + $0x8] sm:$0xf]
    %v1726 = vld [vmem:[%s1722 + $0xc] sm:$0xf]
    %s1727 = scalar_lea.vmem %s16, 12
    %v1728 = vld [vmem:[%s1727] sm:$0x1]
    %v1729 = vperm.slane %v1728, 0
    %v1734 = vunpack.c.l.b16 %v1723
    %v1735 = vunpack.c.l.b16 %v1724
    %v1736 = vunpack.c.l.b16 %v1725
    %v1737 = vunpack.c.l.b16 %v1726
    %v1738 = vpack.c.b16 %v1735, %v1734
    %v1739 = vpack.c.b16 %v1737, %v1736
    %v1743 = vsel %vm103, %v1721, 0
    %1745 = vmatpush.bf16.msra.mxu0 0
    %1746 = vmatpush.bf16.msra.mxu0 0
    %1747 = vmatpush.bf16.msra.mxu0 0
    %1748 = vmatpush.bf16.msra.mxu0 0
    %1749 = vmatpush.bf16.msra.mxu0 0
    %1750 = vmatpush.bf16.msra.mxu0 0
    %1751 = vmatpush.bf16.msra.mxu0 %v1739
    %1752 = vmatpush.bf16.msra.mxu0 %v1738
    %1753 = vmatmul.bf16.gmra.mxu0 %v1743
    %v1754 = vpop.f32.mrf.mxu0
    %v1755 = vadd.f32 %v1729, %v1754
    %v1756 = vpop.f32.mrf.mxu0
    %v1757 = vadd.f32 %v1729, %v1756
    %1758 = vdwg.mxu0
    %v1759 = vld [vmem:[%s1727 + $0x1] sm:$0x1]
    %v1760 = vld [vmem:[%s1727 + $0x2] sm:$0x1]
    %v1761 = vsel %vm702, %v1755, 0.0
    %1762 = vadd.xlane.f32.xlu0 %v1761
    %v1763 = vpop.xlane.xlu0 %1762
    %v1764 = vsel %vm702, %v1757, 0.0
    %1765 = vadd.xlane.f32.xlu0 %v1764
    %v1766 = vpop.xlane.xlu0 %1765
    %v1767 = vmul.f32 %v1763, %v715
    %v1768 = vmul.f32 %v1766, %v715
    %v1769 = vsub.f32 %v1755, %v1767
    %v1770 = vsub.f32 %v1757, %v1768
    %v1771 = vmul.f32 %v1769, %v1769
    %v1772 = vmul.f32 %v1770, %v1770
    %v1773 = vsel %vm702, %v1771, 0.0
    %1774 = vadd.xlane.f32.xlu0 %v1773
    %v1775 = vpop.xlane.xlu0 %1774
    %v1776 = vsel %vm702, %v1772, 0.0
    %1777 = vadd.xlane.f32.xlu0 %v1776
    %v1778 = vpop.xlane.xlu0 %1777
    %v1779 = vmul.f32 %v1775, %v715
    %v1780 = vmul.f32 %v1778, %v715
    %v1781 = vadd.f32 %v1779, 1e-05
    %v1782 = vadd.f32 %v1780, 1e-05
    %v1783 = vrsqrt.pop %v1781
    %v1784 = vmul.f32 %v1783, %v1781
    %v1785 = vmul.f32 %v1784, %v1783
    %v1786 = vmul.f32 0.5, %v1785
    %v1787 = vsub.f32 1.5, %v1786
    %v1788 = vmul.f32 %v1783, %v1787
    %vm1789 = vweird.f32 %v1781
    %vm1790 = vweird.f32 %v1783
    %vm1791 = vmor %vm1789, %vm1790
    %v1792 = vsel %vm1791, %v1783, %v1788
    %v1793 = vrsqrt.pop %v1782
    %v1794 = vmul.f32 %v1793, %v1782
    %v1795 = vmul.f32 %v1794, %v1793
    %v1796 = vmul.f32 0.5, %v1795
    %v1797 = vsub.f32 1.5, %v1796
    %v1798 = vmul.f32 %v1793, %v1797
    %vm1799 = vweird.f32 %v1782
    %vm1800 = vweird.f32 %v1793
    %vm1801 = vmor %vm1799, %vm1800
    %v1802 = vsel %vm1801, %v1793, %v1798
    %v1803 = vmul.f32 %v1769, %v1792
    %v1804 = vmul.f32 %v1770, %v1802
    %v1805 = vperm.slane %v1759, 0
    %v1806 = vmul.f32 %v1803, %v1805
    %v1807 = vmul.f32 %v1804, %v1805
    %v1808 = vperm.slane %v1760, 0
    %v1809 = vadd.f32 %v1806, %v1808
    %v1810 = vadd.f32 %v1807, %v1808
    %v1811 = vmax.f32 %v1809, 0.0
    %v1812 = vmax.f32 %v1810, 0.0
    %v1813 = vpack.c.bf16 %v1812, %v1811
    %s1814 = scalar_lea.vmem %s14, 96
    %v1815 = vld [vmem:[%s1814] sm:$0xf]
    %v1816 = vld [vmem:[%s1814 + $0x4] sm:$0xf]
    %v1817 = vld [vmem:[%s1814 + $0x8] sm:$0xf]
    %v1818 = vld [vmem:[%s1814 + $0xc] sm:$0xf]
    %v1819 = vld [vmem:[%s1814 + $0x10] sm:$0xf]
    %v1820 = vld [vmem:[%s1814 + $0x14] sm:$0xf]
    %v1821 = vld [vmem:[%s1814 + $0x18] sm:$0xf]
    %v1822 = vld [vmem:[%s1814 + $0x1c] sm:$0xf]
    %v1823 = vld [vmem:[%s1519 + $0x3] sm:$0x1]
    %v1824 = vperm.slane %v1823, 0
    %v1833 = vunpack.c.l.b16 %v1815
    %v1834 = vunpack.c.l.b16 %v1816
    %v1835 = vunpack.c.l.b16 %v1817
    %v1836 = vunpack.c.l.b16 %v1818
    %v1837 = vunpack.c.l.b16 %v1819
    %v1838 = vunpack.c.l.b16 %v1820
    %v1839 = vunpack.c.l.b16 %v1821
    %v1840 = vunpack.c.l.b16 %v1822
    %v1841 = vpack.c.b16 %v1834, %v1833
    %v1842 = vpack.c.b16 %v1836, %v1835
    %v1843 = vpack.c.b16 %v1838, %v1837
    %v1844 = vpack.c.b16 %v1840, %v1839
    %v1850 = vsel %vm702, %v1813, 0
    %1852 = vmatpush.bf16.msra.mxu0 0
    %1853 = vmatpush.bf16.msra.mxu0 0
    %1854 = vmatpush.bf16.msra.mxu0 0
    %1855 = vmatpush.bf16.msra.mxu0 0
    %1856 = vmatpush.bf16.msra.mxu0 %v1844
    %1857 = vmatpush.bf16.msra.mxu0 %v1843
    %1858 = vmatpush.bf16.msra.mxu0 %v1842
    %1859 = vmatpush.bf16.msra.mxu0 %v1841
    %1860 = vmatmul.bf16.gmra.mxu0 %v1850
    %v1861 = vpop.f32.mrf.mxu0
    %v1862 = vadd.f32 %v1824, %v1861
    %v1863 = vpop.f32.mrf.mxu0
    %v1864 = vadd.f32 %v1824, %v1863
    %1865 = vdwg.mxu0
    %v1866 = vadd.f32 %v1517, %v1862
    %v1867 = vadd.f32 %v1518, %v1864
    %s1868 = scalar_lea.vmem %s15, 16
    %v1869 = vld [vmem:[%s1868 + $0x1] sm:$0x1]
    %v1870 = vld [vmem:[%s1868 + $0x2] sm:$0x1]
    %v1871 = vsel %vm103, %v1866, 0.0
    %1872 = vadd.xlane.f32.xlu0 %v1871
    %v1873 = vpop.xlane.xlu0 %1872
    %v1874 = vsel %vm103, %v1867, 0.0
    %1875 = vadd.xlane.f32.xlu0 %v1874
    %v1876 = vpop.xlane.xlu0 %1875
    %v1877 = vmul.f32 %v1873, %v829
    %v1878 = vmul.f32 %v1876, %v829
    %v1879 = vsub.f32 %v1866, %v1877
    %v1880 = vsub.f32 %v1867, %v1878
    %v1881 = vmul.f32 %v1879, %v1879
    %v1882 = vmul.f32 %v1880, %v1880
    %v1883 = vsel %vm103, %v1881, 0.0
    %1884 = vadd.xlane.f32.xlu0 %v1883
    %v1885 = vpop.xlane.xlu0 %1884
    %v1886 = vsel %vm103, %v1882, 0.0
    %1887 = vadd.xlane.f32.xlu0 %v1886
    %v1888 = vpop.xlane.xlu0 %1887
    %v1889 = vmul.f32 %v1885, %v829
    %v1890 = vmul.f32 %v1888, %v829
    %v1891 = vadd.f32 %v1889, 1e-05
    %v1892 = vadd.f32 %v1890, 1e-05
    %v1893 = vrsqrt.pop %v1891
    %v1894 = vmul.f32 %v1893, %v1891
    %v1895 = vmul.f32 %v1894, %v1893
    %v1896 = vmul.f32 0.5, %v1895
    %v1897 = vsub.f32 1.5, %v1896
    %v1898 = vmul.f32 %v1893, %v1897
    %vm1899 = vweird.f32 %v1891
    %vm1900 = vweird.f32 %v1893
    %vm1901 = vmor %vm1899, %vm1900
    %v1902 = vsel %vm1901, %v1893, %v1898
    %v1903 = vrsqrt.pop %v1892
    %v1904 = vmul.f32 %v1903, %v1892
    %v1905 = vmul.f32 %v1904, %v1903
    %v1906 = vmul.f32 0.5, %v1905
    %v1907 = vsub.f32 1.5, %v1906
    %v1908 = vmul.f32 %v1903, %v1907
    %vm1909 = vweird.f32 %v1892
    %vm1910 = vweird.f32 %v1903
    %vm1911 = vmor %vm1909, %vm1910
    %v1912 = vsel %vm1911, %v1903, %v1908
    %v1913 = vmul.f32 %v1879, %v1902
    %v1914 = vmul.f32 %v1880, %v1912
    %v1915 = vperm.slane %v1869, 0
    %v1916 = vmul.f32 %v1913, %v1915
    %v1917 = vmul.f32 %v1914, %v1915
    %v1918 = vperm.slane %v1870, 0
    %v1919 = vadd.f32 %v1916, %v1918
    %v1920 = vadd.f32 %v1917, %v1918
    %v1921 = vmax.f32 %v1919, 0.0
    %v1922 = vmax.f32 %v1920, 0.0
    %v1923 = vpack.c.bf16 %v1922, %v1921
    %1924 = vmatpush.bf16.msra.mxu0 0
    %1925 = vmatpush.bf16.msra.mxu0 0
    %1926 = vmatpush.bf16.msra.mxu0 0
    %1927 = vmatpush.bf16.msra.mxu0 0
    %1928 = vmatpush.bf16.msra.mxu0 0
    %1929 = vmatpush.bf16.msra.mxu0 0
    %1930 = vmatpush.bf16.msra.mxu0 0
    %1931 = vmatpush.bf16.msra.mxu0 %v1923
    %1932 = vmatmul.bf16.gmra.mxu0 %v482
    %v1933 = vpop.f32.mrf.mxu0
    %v1934 = vadd.f32 %v452, %v1933
    %v1935 = vpop.f32.mrf.mxu0
    %v1936 = vadd.f32 %v454, %v1935
    %1937 = vmatmul.bf16.gmra.mxu0 %v485
    %v1938 = vpop.f32.mrf.mxu0
    %v1939 = vadd.f32 %v457, %v1938
    %v1940 = vpop.f32.mrf.mxu0
    %v1941 = vadd.f32 %v459, %v1940
    %1942 = vdwg.mxu0
    %v1943 = vmax.f32 %v1934, 0.0
    %v1944 = vmax.f32 %v1936, 0.0
    %v1945 = vmax.f32 %v1939, 0.0
    %v1946 = vmax.f32 %v1941, 0.0
    %v1947 = vadd.f32 %v1943, 1e-07
    %v1948 = vadd.f32 %v1944, 1e-07
    %v1949 = vadd.f32 %v1945, 1e-07
    %v1950 = vadd.f32 %v1946, 1e-07
    %v1951 = vld [vmem:[%s1868] sm:$0x1]
    %v1952 = vperm.slane %v1951, 0
    %v1953 = vmul.f32 %v1952, %v1947
    %v1954 = vmul.f32 %v1952, %v1948
    %v1955 = vmul.f32 %v1952, %v1949
    %v1956 = vmul.f32 %v1952, %v1950
    %v1957 = vsel %vm103, %v1953, -inf
    %v1958 = vsel %vm103, %v1954, -inf
    %v1959 = vsel %vm103, %v1955, -inf
    %v1960 = vsel %vm103, %v1956, -inf
    %v1961 = vmax.f32 %v1957, %v1958
    %v1962 = vmax.f32 %v1959, %v1960
    %v1963 = vmax.f32 %v1961, %v1962
    %v1964 = vrot.slane %v1963, 4
    %v1965 = vmax.f32 %v1963, %v1964
    %v1966 = vrot.slane %v1965, 2
    %v1967 = vmax.f32 %v1965, %v1966
    %v1968 = vrot.slane %v1967, 1
    %v1969 = vmax.f32 %v1967, %v1968
    %v1970 = vsub.f32 %v1953, %v1969
    %v1971 = vsub.f32 %v1954, %v1969
    %v1972 = vsub.f32 %v1955, %v1969
    %v1973 = vsub.f32 %v1956, %v1969
    %v1974 = vmul.f32 %v1970, 1.442695
    %v1975 = vpow.pop %v1974
    %v1976 = vmul.f32 %v1971, 1.442695
    %v1977 = vpow.pop %v1976
    %v1978 = vmul.f32 %v1972, 1.442695
    %v1979 = vpow.pop %v1978
    %v1980 = vmul.f32 %v1973, 1.442695
    %v1981 = vpow.pop %v1980
    %v1982 = vmul.f32 %v1975, %v1947
    %v1983 = vmul.f32 %v1977, %v1948
    %v1984 = vmul.f32 %v1979, %v1949
    %v1985 = vmul.f32 %v1981, %v1950
    %1990 = vrot.lane.b32.xlu0 %v1975, 32
    %v1991 = vpop.permute.xlu0 %1990
    %1992 = vrot.lane.b32.xlu0 %v1977, 32
    %v1993 = vpop.permute.xlu0 %1992
    %1994 = vrot.lane.b32.xlu0 %v1979, 32
    %v1995 = vpop.permute.xlu0 %1994
    %1996 = vrot.lane.b32.xlu0 %v1981, 32
    %v1997 = vpop.permute.xlu0 %1996
    %v2002 = vsel %vm103, %v1982, %v1991
    %v2003 = vsel %vm103, %v1983, %v1993
    %v2004 = vsel %vm103, %v1984, %v1995
    %v2005 = vsel %vm103, %v1985, %v1997
    %v2006 = vpack.c.bf16 %v2003, %v2002
    %v2007 = vpack.c.bf16 %v2005, %v2004
    %2008 = vmatpush.bf16.msra.mxu0 0
    %2009 = vmatpush.bf16.msra.mxu0 0
    %2010 = vmatpush.bf16.msra.mxu0 0
    %2011 = vmatpush.bf16.msra.mxu0 0
    %2012 = vmatpush.bf16.msra.mxu0 0
    %2013 = vmatpush.bf16.msra.mxu0 0
    %2014 = vmatpush.bf16.msra.mxu0 %v2007
    %2015 = vmatpush.bf16.msra.mxu0 %v2006
    %2016 = vmatmul.bf16.gmra.mxu0 %v600
    %v2017 = vpop.f32.mrf.mxu0
    %v2018 = vadd.f32 0.0, %v2017
    %v2019 = vpop.f32.mrf.mxu0
    %v2020 = vadd.f32 0.0, %v2019
    %2021 = vdwg.mxu0
    %vm2022 = vcmp.gt.f32.partialorder %v2018, 0.0
    %vm2023 = vcmp.gt.f32.partialorder %v2020, 0.0
    %v2024 = vmax.f32 %v2018, 1e-30
    %v2025 = vmax.f32 %v2020, 1e-30
    %v2026 = vrcp.pop %v2024
    %v2027 = vmul.f32 %v2024, %v2026
    %v2028 = vsub.f32 1.0, %v2027
    %v2029 = vmul.f32 %v2026, %v2028
    %v2030 = vadd.f32 %v2026, %v2029
    %vm2031 = vweird.f32 %v2024
    %vm2032 = vweird.f32 %v2026
    %vm2033 = vmor %vm2031, %vm2032
    %v2034 = vsel %vm2033, %v2026, %v2030
    %v2035 = vand.u32 2147483647, %v2024
    %vm2036 = vcmp.eq.f32.partialorder %v2035, 8.507059e+37
    %v2037 = vand.u32 %v2024, 2147483648
    %v2038 = vor.u32 1.1754944e-38, %v2037
    %v2039 = vsel %vm2036, %v2038, %v2034
    %v2040 = vmul.f32 1.0, %v2039
    %v2041 = vrcp.pop %v2025
    %v2042 = vmul.f32 %v2025, %v2041
    %v2043 = vsub.f32 1.0, %v2042
    %v2044 = vmul.f32 %v2041, %v2043
    %v2045 = vadd.f32 %v2041, %v2044
    %vm2046 = vweird.f32 %v2025
    %vm2047 = vweird.f32 %v2041
    %vm2048 = vmor %vm2046, %vm2047
    %v2049 = vsel %vm2048, %v2041, %v2045
    %v2050 = vand.u32 2147483647, %v2025
    %vm2051 = vcmp.eq.f32.partialorder %v2050, 8.507059e+37
    %v2052 = vand.u32 %v2025, 2147483648
    %v2053 = vor.u32 1.1754944e-38, %v2052
    %v2054 = vsel %vm2051, %v2053, %v2049
    %v2055 = vmul.f32 1.0, %v2054
    %v2056 = vsel %vm2022, %v2040, 0.0
    %v2057 = vsel %vm2023, %v2055, 0.0
    %2060 = vrot.lane.b32.xlu0 %v2056, 96
    %v2061 = vpop.permute.xlu0 %2060
    %2062 = vrot.lane.b32.xlu0 %v2057, 96
    %v2063 = vpop.permute.xlu0 %2062
    %v2066 = vmul.f32 %v2018, %v2061
    %v2067 = vmul.f32 %v2020, %v2063
    %v2068 = vadd.f32 %v2066, %v1921
    %v2069 = vadd.f32 %v2067, %v1922
    %v2070 = vpack.c.bf16 %v2069, %v2068
    %s2071 = scalar_lea.vmem %s13, 64
    %v2072 = vld [vmem:[%s2071] sm:$0xf]
    %v2073 = vld [vmem:[%s2071 + $0x4] sm:$0xf]
    %v2074 = vld [vmem:[%s2071 + $0x8] sm:$0xf]
    %v2075 = vld [vmem:[%s2071 + $0xc] sm:$0xf]
    %s2076 = scalar_lea.vmem %s16, 16
    %v2077 = vld [vmem:[%s2076] sm:$0x1]
    %v2078 = vperm.slane %v2077, 0
    %v2083 = vunpack.c.l.b16 %v2072
    %v2084 = vunpack.c.l.b16 %v2073
    %v2085 = vunpack.c.l.b16 %v2074
    %v2086 = vunpack.c.l.b16 %v2075
    %v2087 = vpack.c.b16 %v2084, %v2083
    %v2088 = vpack.c.b16 %v2086, %v2085
    %v2092 = vsel %vm103, %v2070, 0
    %2094 = vmatpush.bf16.msra.mxu0 0
    %2095 = vmatpush.bf16.msra.mxu0 0
    %2096 = vmatpush.bf16.msra.mxu0 0
    %2097 = vmatpush.bf16.msra.mxu0 0
    %2098 = vmatpush.bf16.msra.mxu0 0
    %2099 = vmatpush.bf16.msra.mxu0 0
    %2100 = vmatpush.bf16.msra.mxu0 %v2088
    %2101 = vmatpush.bf16.msra.mxu0 %v2087
    %2102 = vmatmul.bf16.gmra.mxu0 %v2092
    %v2103 = vpop.f32.mrf.mxu0
    %v2104 = vadd.f32 %v2078, %v2103
    %v2105 = vpop.f32.mrf.mxu0
    %v2106 = vadd.f32 %v2078, %v2105
    %2107 = vdwg.mxu0
    %v2108 = vld [vmem:[%s2076 + $0x1] sm:$0x1]
    %v2109 = vld [vmem:[%s2076 + $0x2] sm:$0x1]
    %v2110 = vsel %vm702, %v2104, 0.0
    %2111 = vadd.xlane.f32.xlu0 %v2110
    %v2112 = vpop.xlane.xlu0 %2111
    %v2113 = vsel %vm702, %v2106, 0.0
    %2114 = vadd.xlane.f32.xlu0 %v2113
    %v2115 = vpop.xlane.xlu0 %2114
    %v2116 = vmul.f32 %v2112, %v715
    %v2117 = vmul.f32 %v2115, %v715
    %v2118 = vsub.f32 %v2104, %v2116
    %v2119 = vsub.f32 %v2106, %v2117
    %v2120 = vmul.f32 %v2118, %v2118
    %v2121 = vmul.f32 %v2119, %v2119
    %v2122 = vsel %vm702, %v2120, 0.0
    %2123 = vadd.xlane.f32.xlu0 %v2122
    %v2124 = vpop.xlane.xlu0 %2123
    %v2125 = vsel %vm702, %v2121, 0.0
    %2126 = vadd.xlane.f32.xlu0 %v2125
    %v2127 = vpop.xlane.xlu0 %2126
    %v2128 = vmul.f32 %v2124, %v715
    %v2129 = vmul.f32 %v2127, %v715
    %v2130 = vadd.f32 %v2128, 1e-05
    %v2131 = vadd.f32 %v2129, 1e-05
    %v2132 = vrsqrt.pop %v2130
    %v2133 = vmul.f32 %v2132, %v2130
    %v2134 = vmul.f32 %v2133, %v2132
    %v2135 = vmul.f32 0.5, %v2134
    %v2136 = vsub.f32 1.5, %v2135
    %v2137 = vmul.f32 %v2132, %v2136
    %vm2138 = vweird.f32 %v2130
    %vm2139 = vweird.f32 %v2132
    %vm2140 = vmor %vm2138, %vm2139
    %v2141 = vsel %vm2140, %v2132, %v2137
    %v2142 = vrsqrt.pop %v2131
    %v2143 = vmul.f32 %v2142, %v2131
    %v2144 = vmul.f32 %v2143, %v2142
    %v2145 = vmul.f32 0.5, %v2144
    %v2146 = vsub.f32 1.5, %v2145
    %v2147 = vmul.f32 %v2142, %v2146
    %vm2148 = vweird.f32 %v2131
    %vm2149 = vweird.f32 %v2142
    %vm2150 = vmor %vm2148, %vm2149
    %v2151 = vsel %vm2150, %v2142, %v2147
    %v2152 = vmul.f32 %v2118, %v2141
    %v2153 = vmul.f32 %v2119, %v2151
    %v2154 = vperm.slane %v2108, 0
    %v2155 = vmul.f32 %v2152, %v2154
    %v2156 = vmul.f32 %v2153, %v2154
    %v2157 = vperm.slane %v2109, 0
    %v2158 = vadd.f32 %v2155, %v2157
    %v2159 = vadd.f32 %v2156, %v2157
    %v2160 = vmax.f32 %v2158, 0.0
    %v2161 = vmax.f32 %v2159, 0.0
    %v2162 = vpack.c.bf16 %v2161, %v2160
    %s2163 = scalar_lea.vmem %s14, 128
    %v2164 = vld [vmem:[%s2163] sm:$0xf]
    %v2165 = vld [vmem:[%s2163 + $0x4] sm:$0xf]
    %v2166 = vld [vmem:[%s2163 + $0x8] sm:$0xf]
    %v2167 = vld [vmem:[%s2163 + $0xc] sm:$0xf]
    %v2168 = vld [vmem:[%s2163 + $0x10] sm:$0xf]
    %v2169 = vld [vmem:[%s2163 + $0x14] sm:$0xf]
    %v2170 = vld [vmem:[%s2163 + $0x18] sm:$0xf]
    %v2171 = vld [vmem:[%s2163 + $0x1c] sm:$0xf]
    %v2172 = vld [vmem:[%s1868 + $0x3] sm:$0x1]
    %v2173 = vperm.slane %v2172, 0
    %v2182 = vunpack.c.l.b16 %v2164
    %v2183 = vunpack.c.l.b16 %v2165
    %v2184 = vunpack.c.l.b16 %v2166
    %v2185 = vunpack.c.l.b16 %v2167
    %v2186 = vunpack.c.l.b16 %v2168
    %v2187 = vunpack.c.l.b16 %v2169
    %v2188 = vunpack.c.l.b16 %v2170
    %v2189 = vunpack.c.l.b16 %v2171
    %v2190 = vpack.c.b16 %v2183, %v2182
    %v2191 = vpack.c.b16 %v2185, %v2184
    %v2192 = vpack.c.b16 %v2187, %v2186
    %v2193 = vpack.c.b16 %v2189, %v2188
    %v2199 = vsel %vm702, %v2162, 0
    %2201 = vmatpush.bf16.msra.mxu0 0
    %2202 = vmatpush.bf16.msra.mxu0 0
    %2203 = vmatpush.bf16.msra.mxu0 0
    %2204 = vmatpush.bf16.msra.mxu0 0
    %2205 = vmatpush.bf16.msra.mxu0 %v2193
    %2206 = vmatpush.bf16.msra.mxu0 %v2192
    %2207 = vmatpush.bf16.msra.mxu0 %v2191
    %2208 = vmatpush.bf16.msra.mxu0 %v2190
    %2209 = vmatmul.bf16.gmra.mxu0 %v2199
    %v2210 = vpop.f32.mrf.mxu0
    %v2211 = vadd.f32 %v2173, %v2210
    %v2212 = vpop.f32.mrf.mxu0
    %v2213 = vadd.f32 %v2173, %v2212
    %2214 = vdwg.mxu0
    %v2215 = vadd.f32 %v1866, %v2211
    %v2216 = vadd.f32 %v1867, %v2213
    %s2217 = scalar_lea.vmem %s15, 20
    %v2218 = vld [vmem:[%s2217 + $0x1] sm:$0x1]
    %v2219 = vld [vmem:[%s2217 + $0x2] sm:$0x1]
    %v2220 = vsel %vm103, %v2215, 0.0
    %2221 = vadd.xlane.f32.xlu0 %v2220
    %v2222 = vpop.xlane.xlu0 %2221
    %v2223 = vsel %vm103, %v2216, 0.0
    %2224 = vadd.xlane.f32.xlu0 %v2223
    %v2225 = vpop.xlane.xlu0 %2224
    %v2226 = vmul.f32 %v2222, %v829
    %v2227 = vmul.f32 %v2225, %v829
    %v2228 = vsub.f32 %v2215, %v2226
    %v2229 = vsub.f32 %v2216, %v2227
    %v2230 = vmul.f32 %v2228, %v2228
    %v2231 = vmul.f32 %v2229, %v2229
    %v2232 = vsel %vm103, %v2230, 0.0
    %2233 = vadd.xlane.f32.xlu0 %v2232
    %v2234 = vpop.xlane.xlu0 %2233
    %v2235 = vsel %vm103, %v2231, 0.0
    %2236 = vadd.xlane.f32.xlu0 %v2235
    %v2237 = vpop.xlane.xlu0 %2236
    %v2238 = vmul.f32 %v2234, %v829
    %v2239 = vmul.f32 %v2237, %v829
    %v2240 = vadd.f32 %v2238, 1e-05
    %v2241 = vadd.f32 %v2239, 1e-05
    %v2242 = vrsqrt.pop %v2240
    %v2243 = vmul.f32 %v2242, %v2240
    %v2244 = vmul.f32 %v2243, %v2242
    %v2245 = vmul.f32 0.5, %v2244
    %v2246 = vsub.f32 1.5, %v2245
    %v2247 = vmul.f32 %v2242, %v2246
    %vm2248 = vweird.f32 %v2240
    %vm2249 = vweird.f32 %v2242
    %vm2250 = vmor %vm2248, %vm2249
    %v2251 = vsel %vm2250, %v2242, %v2247
    %v2252 = vrsqrt.pop %v2241
    %v2253 = vmul.f32 %v2252, %v2241
    %v2254 = vmul.f32 %v2253, %v2252
    %v2255 = vmul.f32 0.5, %v2254
    %v2256 = vsub.f32 1.5, %v2255
    %v2257 = vmul.f32 %v2252, %v2256
    %vm2258 = vweird.f32 %v2241
    %vm2259 = vweird.f32 %v2252
    %vm2260 = vmor %vm2258, %vm2259
    %v2261 = vsel %vm2260, %v2252, %v2257
    %v2262 = vmul.f32 %v2228, %v2251
    %v2263 = vmul.f32 %v2229, %v2261
    %v2264 = vperm.slane %v2218, 0
    %v2265 = vmul.f32 %v2262, %v2264
    %v2266 = vmul.f32 %v2263, %v2264
    %v2267 = vperm.slane %v2219, 0
    %v2268 = vadd.f32 %v2265, %v2267
    %v2269 = vadd.f32 %v2266, %v2267
    %v2270 = vmax.f32 %v2268, 0.0
    %v2271 = vmax.f32 %v2269, 0.0
    %v2272 = vpack.c.bf16 %v2271, %v2270
    %2273 = vmatpush.bf16.msra.mxu0 0
    %2274 = vmatpush.bf16.msra.mxu0 0
    %2275 = vmatpush.bf16.msra.mxu0 0
    %2276 = vmatpush.bf16.msra.mxu0 0
    %2277 = vmatpush.bf16.msra.mxu0 0
    %2278 = vmatpush.bf16.msra.mxu0 0
    %2279 = vmatpush.bf16.msra.mxu0 0
    %2280 = vmatpush.bf16.msra.mxu0 %v2272
    %2281 = vmatmul.bf16.gmra.mxu0 %v482
    %v2282 = vpop.f32.mrf.mxu0
    %v2283 = vadd.f32 %v452, %v2282
    %v2284 = vpop.f32.mrf.mxu0
    %v2285 = vadd.f32 %v454, %v2284
    %2286 = vmatmul.bf16.gmra.mxu0 %v485
    %v2287 = vpop.f32.mrf.mxu0
    %v2288 = vadd.f32 %v457, %v2287
    %v2289 = vpop.f32.mrf.mxu0
    %v2290 = vadd.f32 %v459, %v2289
    %2291 = vdwg.mxu0
    %v2292 = vmax.f32 %v2283, 0.0
    %v2293 = vmax.f32 %v2285, 0.0
    %v2294 = vmax.f32 %v2288, 0.0
    %v2295 = vmax.f32 %v2290, 0.0
    %v2296 = vadd.f32 %v2292, 1e-07
    %v2297 = vadd.f32 %v2293, 1e-07
    %v2298 = vadd.f32 %v2294, 1e-07
    %v2299 = vadd.f32 %v2295, 1e-07
    %v2300 = vld [vmem:[%s2217] sm:$0x1]
    %v2301 = vperm.slane %v2300, 0
    %v2302 = vmul.f32 %v2301, %v2296
    %v2303 = vmul.f32 %v2301, %v2297
    %v2304 = vmul.f32 %v2301, %v2298
    %v2305 = vmul.f32 %v2301, %v2299
    %v2306 = vsel %vm103, %v2302, -inf
    %v2307 = vsel %vm103, %v2303, -inf
    %v2308 = vsel %vm103, %v2304, -inf
    %v2309 = vsel %vm103, %v2305, -inf
    %v2310 = vmax.f32 %v2306, %v2307
    %v2311 = vmax.f32 %v2308, %v2309
    %v2312 = vmax.f32 %v2310, %v2311
    %v2313 = vrot.slane %v2312, 4
    %v2314 = vmax.f32 %v2312, %v2313
    %v2315 = vrot.slane %v2314, 2
    %v2316 = vmax.f32 %v2314, %v2315
    %v2317 = vrot.slane %v2316, 1
    %v2318 = vmax.f32 %v2316, %v2317
    %v2319 = vsub.f32 %v2302, %v2318
    %v2320 = vsub.f32 %v2303, %v2318
    %v2321 = vsub.f32 %v2304, %v2318
    %v2322 = vsub.f32 %v2305, %v2318
    %v2323 = vmul.f32 %v2319, 1.442695
    %v2324 = vpow.pop %v2323
    %v2325 = vmul.f32 %v2320, 1.442695
    %v2326 = vpow.pop %v2325
    %v2327 = vmul.f32 %v2321, 1.442695
    %v2328 = vpow.pop %v2327
    %v2329 = vmul.f32 %v2322, 1.442695
    %v2330 = vpow.pop %v2329
    %v2331 = vmul.f32 %v2324, %v2296
    %v2332 = vmul.f32 %v2326, %v2297
    %v2333 = vmul.f32 %v2328, %v2298
    %v2334 = vmul.f32 %v2330, %v2299
    %2339 = vrot.lane.b32.xlu0 %v2324, 32
    %v2340 = vpop.permute.xlu0 %2339
    %2341 = vrot.lane.b32.xlu0 %v2326, 32
    %v2342 = vpop.permute.xlu0 %2341
    %2343 = vrot.lane.b32.xlu0 %v2328, 32
    %v2344 = vpop.permute.xlu0 %2343
    %2345 = vrot.lane.b32.xlu0 %v2330, 32
    %v2346 = vpop.permute.xlu0 %2345
    %v2351 = vsel %vm103, %v2331, %v2340
    %v2352 = vsel %vm103, %v2332, %v2342
    %v2353 = vsel %vm103, %v2333, %v2344
    %v2354 = vsel %vm103, %v2334, %v2346
    %v2355 = vpack.c.bf16 %v2352, %v2351
    %v2356 = vpack.c.bf16 %v2354, %v2353
    %2357 = vmatpush.bf16.msra.mxu0 0
    %2358 = vmatpush.bf16.msra.mxu0 0
    %2359 = vmatpush.bf16.msra.mxu0 0
    %2360 = vmatpush.bf16.msra.mxu0 0
    %2361 = vmatpush.bf16.msra.mxu0 0
    %2362 = vmatpush.bf16.msra.mxu0 0
    %2363 = vmatpush.bf16.msra.mxu0 %v2356
    %2364 = vmatpush.bf16.msra.mxu0 %v2355
    %2365 = vmatmul.bf16.gmra.mxu0 %v600
    %v2366 = vpop.f32.mrf.mxu0
    %v2367 = vadd.f32 0.0, %v2366
    %v2368 = vpop.f32.mrf.mxu0
    %v2369 = vadd.f32 0.0, %v2368
    %2370 = vdwg.mxu0
    %vm2371 = vcmp.gt.f32.partialorder %v2367, 0.0
    %vm2372 = vcmp.gt.f32.partialorder %v2369, 0.0
    %v2373 = vmax.f32 %v2367, 1e-30
    %v2374 = vmax.f32 %v2369, 1e-30
    %v2375 = vrcp.pop %v2373
    %v2376 = vmul.f32 %v2373, %v2375
    %v2377 = vsub.f32 1.0, %v2376
    %v2378 = vmul.f32 %v2375, %v2377
    %v2379 = vadd.f32 %v2375, %v2378
    %vm2380 = vweird.f32 %v2373
    %vm2381 = vweird.f32 %v2375
    %vm2382 = vmor %vm2380, %vm2381
    %v2383 = vsel %vm2382, %v2375, %v2379
    %v2384 = vand.u32 2147483647, %v2373
    %vm2385 = vcmp.eq.f32.partialorder %v2384, 8.507059e+37
    %v2386 = vand.u32 %v2373, 2147483648
    %v2387 = vor.u32 1.1754944e-38, %v2386
    %v2388 = vsel %vm2385, %v2387, %v2383
    %v2389 = vmul.f32 1.0, %v2388
    %v2390 = vrcp.pop %v2374
    %v2391 = vmul.f32 %v2374, %v2390
    %v2392 = vsub.f32 1.0, %v2391
    %v2393 = vmul.f32 %v2390, %v2392
    %v2394 = vadd.f32 %v2390, %v2393
    %vm2395 = vweird.f32 %v2374
    %vm2396 = vweird.f32 %v2390
    %vm2397 = vmor %vm2395, %vm2396
    %v2398 = vsel %vm2397, %v2390, %v2394
    %v2399 = vand.u32 2147483647, %v2374
    %vm2400 = vcmp.eq.f32.partialorder %v2399, 8.507059e+37
    %v2401 = vand.u32 %v2374, 2147483648
    %v2402 = vor.u32 1.1754944e-38, %v2401
    %v2403 = vsel %vm2400, %v2402, %v2398
    %v2404 = vmul.f32 1.0, %v2403
    %v2405 = vsel %vm2371, %v2389, 0.0
    %v2406 = vsel %vm2372, %v2404, 0.0
    %2409 = vrot.lane.b32.xlu0 %v2405, 96
    %v2410 = vpop.permute.xlu0 %2409
    %2411 = vrot.lane.b32.xlu0 %v2406, 96
    %v2412 = vpop.permute.xlu0 %2411
    %v2415 = vmul.f32 %v2367, %v2410
    %v2416 = vmul.f32 %v2369, %v2412
    %v2417 = vadd.f32 %v2415, %v2270
    %v2418 = vadd.f32 %v2416, %v2271
    %v2419 = vpack.c.bf16 %v2418, %v2417
    %s2420 = scalar_lea.vmem %s13, 80
    %v2421 = vld [vmem:[%s2420] sm:$0xf]
    %v2422 = vld [vmem:[%s2420 + $0x4] sm:$0xf]
    %v2423 = vld [vmem:[%s2420 + $0x8] sm:$0xf]
    %v2424 = vld [vmem:[%s2420 + $0xc] sm:$0xf]
    %s2425 = scalar_lea.vmem %s16, 20
    %v2426 = vld [vmem:[%s2425] sm:$0x1]
    %v2427 = vperm.slane %v2426, 0
    %v2432 = vunpack.c.l.b16 %v2421
    %v2433 = vunpack.c.l.b16 %v2422
    %v2434 = vunpack.c.l.b16 %v2423
    %v2435 = vunpack.c.l.b16 %v2424
    %v2436 = vpack.c.b16 %v2433, %v2432
    %v2437 = vpack.c.b16 %v2435, %v2434
    %v2441 = vsel %vm103, %v2419, 0
    %2443 = vmatpush.bf16.msra.mxu0 0
    %2444 = vmatpush.bf16.msra.mxu0 0
    %2445 = vmatpush.bf16.msra.mxu0 0
    %2446 = vmatpush.bf16.msra.mxu0 0
    %2447 = vmatpush.bf16.msra.mxu0 0
    %2448 = vmatpush.bf16.msra.mxu0 0
    %2449 = vmatpush.bf16.msra.mxu0 %v2437
    %2450 = vmatpush.bf16.msra.mxu0 %v2436
    %2451 = vmatmul.bf16.gmra.mxu0 %v2441
    %v2452 = vpop.f32.mrf.mxu0
    %v2453 = vadd.f32 %v2427, %v2452
    %v2454 = vpop.f32.mrf.mxu0
    %v2455 = vadd.f32 %v2427, %v2454
    %2456 = vdwg.mxu0
    %v2457 = vld [vmem:[%s2425 + $0x1] sm:$0x1]
    %v2458 = vld [vmem:[%s2425 + $0x2] sm:$0x1]
    %v2459 = vsel %vm702, %v2453, 0.0
    %2460 = vadd.xlane.f32.xlu0 %v2459
    %v2461 = vpop.xlane.xlu0 %2460
    %v2462 = vsel %vm702, %v2455, 0.0
    %2463 = vadd.xlane.f32.xlu0 %v2462
    %v2464 = vpop.xlane.xlu0 %2463
    %v2465 = vmul.f32 %v2461, %v715
    %v2466 = vmul.f32 %v2464, %v715
    %v2467 = vsub.f32 %v2453, %v2465
    %v2468 = vsub.f32 %v2455, %v2466
    %v2469 = vmul.f32 %v2467, %v2467
    %v2470 = vmul.f32 %v2468, %v2468
    %v2471 = vsel %vm702, %v2469, 0.0
    %2472 = vadd.xlane.f32.xlu0 %v2471
    %v2473 = vpop.xlane.xlu0 %2472
    %v2474 = vsel %vm702, %v2470, 0.0
    %2475 = vadd.xlane.f32.xlu0 %v2474
    %v2476 = vpop.xlane.xlu0 %2475
    %v2477 = vmul.f32 %v2473, %v715
    %v2478 = vmul.f32 %v2476, %v715
    %v2479 = vadd.f32 %v2477, 1e-05
    %v2480 = vadd.f32 %v2478, 1e-05
    %v2481 = vrsqrt.pop %v2479
    %v2482 = vmul.f32 %v2481, %v2479
    %v2483 = vmul.f32 %v2482, %v2481
    %v2484 = vmul.f32 0.5, %v2483
    %v2485 = vsub.f32 1.5, %v2484
    %v2486 = vmul.f32 %v2481, %v2485
    %vm2487 = vweird.f32 %v2479
    %vm2488 = vweird.f32 %v2481
    %vm2489 = vmor %vm2487, %vm2488
    %v2490 = vsel %vm2489, %v2481, %v2486
    %v2491 = vrsqrt.pop %v2480
    %v2492 = vmul.f32 %v2491, %v2480
    %v2493 = vmul.f32 %v2492, %v2491
    %v2494 = vmul.f32 0.5, %v2493
    %v2495 = vsub.f32 1.5, %v2494
    %v2496 = vmul.f32 %v2491, %v2495
    %vm2497 = vweird.f32 %v2480
    %vm2498 = vweird.f32 %v2491
    %vm2499 = vmor %vm2497, %vm2498
    %v2500 = vsel %vm2499, %v2491, %v2496
    %v2501 = vmul.f32 %v2467, %v2490
    %v2502 = vmul.f32 %v2468, %v2500
    %v2503 = vperm.slane %v2457, 0
    %v2504 = vmul.f32 %v2501, %v2503
    %v2505 = vmul.f32 %v2502, %v2503
    %v2506 = vperm.slane %v2458, 0
    %v2507 = vadd.f32 %v2504, %v2506
    %v2508 = vadd.f32 %v2505, %v2506
    %v2509 = vmax.f32 %v2507, 0.0
    %v2510 = vmax.f32 %v2508, 0.0
    %v2511 = vpack.c.bf16 %v2510, %v2509
    %s2512 = scalar_lea.vmem %s14, 160
    %v2513 = vld [vmem:[%s2512] sm:$0xf]
    %v2514 = vld [vmem:[%s2512 + $0x4] sm:$0xf]
    %v2515 = vld [vmem:[%s2512 + $0x8] sm:$0xf]
    %v2516 = vld [vmem:[%s2512 + $0xc] sm:$0xf]
    %v2517 = vld [vmem:[%s2512 + $0x10] sm:$0xf]
    %v2518 = vld [vmem:[%s2512 + $0x14] sm:$0xf]
    %v2519 = vld [vmem:[%s2512 + $0x18] sm:$0xf]
    %v2520 = vld [vmem:[%s2512 + $0x1c] sm:$0xf]
    %v2521 = vld [vmem:[%s2217 + $0x3] sm:$0x1]
    %v2522 = vperm.slane %v2521, 0
    %v2531 = vunpack.c.l.b16 %v2513
    %v2532 = vunpack.c.l.b16 %v2514
    %v2533 = vunpack.c.l.b16 %v2515
    %v2534 = vunpack.c.l.b16 %v2516
    %v2535 = vunpack.c.l.b16 %v2517
    %v2536 = vunpack.c.l.b16 %v2518
    %v2537 = vunpack.c.l.b16 %v2519
    %v2538 = vunpack.c.l.b16 %v2520
    %v2539 = vpack.c.b16 %v2532, %v2531
    %v2540 = vpack.c.b16 %v2534, %v2533
    %v2541 = vpack.c.b16 %v2536, %v2535
    %v2542 = vpack.c.b16 %v2538, %v2537
    %v2548 = vsel %vm702, %v2511, 0
    %2550 = vmatpush.bf16.msra.mxu0 0
    %2551 = vmatpush.bf16.msra.mxu0 0
    %2552 = vmatpush.bf16.msra.mxu0 0
    %2553 = vmatpush.bf16.msra.mxu0 0
    %2554 = vmatpush.bf16.msra.mxu0 %v2542
    %2555 = vmatpush.bf16.msra.mxu0 %v2541
    %2556 = vmatpush.bf16.msra.mxu0 %v2540
    %2557 = vmatpush.bf16.msra.mxu0 %v2539
    %2558 = vmatmul.bf16.gmra.mxu0 %v2548
    %v2559 = vpop.f32.mrf.mxu0
    %v2560 = vadd.f32 %v2522, %v2559
    %v2561 = vpop.f32.mrf.mxu0
    %v2562 = vadd.f32 %v2522, %v2561
    %2563 = vdwg.mxu0
    %v2564 = vadd.f32 %v2215, %v2560
    %v2565 = vadd.f32 %v2216, %v2562
    %s2566 = scalar_lea.vmem %s15, 24
    %v2567 = vld [vmem:[%s2566 + $0x1] sm:$0x1]
    %v2568 = vld [vmem:[%s2566 + $0x2] sm:$0x1]
    %v2569 = vsel %vm103, %v2564, 0.0
    %2570 = vadd.xlane.f32.xlu0 %v2569
    %v2571 = vpop.xlane.xlu0 %2570
    %v2572 = vsel %vm103, %v2565, 0.0
    %2573 = vadd.xlane.f32.xlu0 %v2572
    %v2574 = vpop.xlane.xlu0 %2573
    %v2575 = vmul.f32 %v2571, %v829
    %v2576 = vmul.f32 %v2574, %v829
    %v2577 = vsub.f32 %v2564, %v2575
    %v2578 = vsub.f32 %v2565, %v2576
    %v2579 = vmul.f32 %v2577, %v2577
    %v2580 = vmul.f32 %v2578, %v2578
    %v2581 = vsel %vm103, %v2579, 0.0
    %2582 = vadd.xlane.f32.xlu0 %v2581
    %v2583 = vpop.xlane.xlu0 %2582
    %v2584 = vsel %vm103, %v2580, 0.0
    %2585 = vadd.xlane.f32.xlu0 %v2584
    %v2586 = vpop.xlane.xlu0 %2585
    %v2587 = vmul.f32 %v2583, %v829
    %v2588 = vmul.f32 %v2586, %v829
    %v2589 = vadd.f32 %v2587, 1e-05
    %v2590 = vadd.f32 %v2588, 1e-05
    %v2591 = vrsqrt.pop %v2589
    %v2592 = vmul.f32 %v2591, %v2589
    %v2593 = vmul.f32 %v2592, %v2591
    %v2594 = vmul.f32 0.5, %v2593
    %v2595 = vsub.f32 1.5, %v2594
    %v2596 = vmul.f32 %v2591, %v2595
    %vm2597 = vweird.f32 %v2589
    %vm2598 = vweird.f32 %v2591
    %vm2599 = vmor %vm2597, %vm2598
    %v2600 = vsel %vm2599, %v2591, %v2596
    %v2601 = vrsqrt.pop %v2590
    %v2602 = vmul.f32 %v2601, %v2590
    %v2603 = vmul.f32 %v2602, %v2601
    %v2604 = vmul.f32 0.5, %v2603
    %v2605 = vsub.f32 1.5, %v2604
    %v2606 = vmul.f32 %v2601, %v2605
    %vm2607 = vweird.f32 %v2590
    %vm2608 = vweird.f32 %v2601
    %vm2609 = vmor %vm2607, %vm2608
    %v2610 = vsel %vm2609, %v2601, %v2606
    %v2611 = vmul.f32 %v2577, %v2600
    %v2612 = vmul.f32 %v2578, %v2610
    %v2613 = vperm.slane %v2567, 0
    %v2614 = vmul.f32 %v2611, %v2613
    %v2615 = vmul.f32 %v2612, %v2613
    %v2616 = vperm.slane %v2568, 0
    %v2617 = vadd.f32 %v2614, %v2616
    %v2618 = vadd.f32 %v2615, %v2616
    %v2619 = vmax.f32 %v2617, 0.0
    %v2620 = vmax.f32 %v2618, 0.0
    %v2621 = vpack.c.bf16 %v2620, %v2619
    %2622 = vmatpush.bf16.msra.mxu0 0
    %2623 = vmatpush.bf16.msra.mxu0 0
    %2624 = vmatpush.bf16.msra.mxu0 0
    %2625 = vmatpush.bf16.msra.mxu0 0
    %2626 = vmatpush.bf16.msra.mxu0 0
    %2627 = vmatpush.bf16.msra.mxu0 0
    %2628 = vmatpush.bf16.msra.mxu0 0
    %2629 = vmatpush.bf16.msra.mxu0 %v2621
    %2630 = vmatmul.bf16.gmra.mxu0 %v482
    %v2631 = vpop.f32.mrf.mxu0
    %v2632 = vadd.f32 %v452, %v2631
    %v2633 = vpop.f32.mrf.mxu0
    %v2634 = vadd.f32 %v454, %v2633
    %2635 = vmatmul.bf16.gmra.mxu0 %v485
    %v2636 = vpop.f32.mrf.mxu0
    %v2637 = vadd.f32 %v457, %v2636
    %v2638 = vpop.f32.mrf.mxu0
    %v2639 = vadd.f32 %v459, %v2638
    %2640 = vdwg.mxu0
    %v2641 = vmax.f32 %v2632, 0.0
    %v2642 = vmax.f32 %v2634, 0.0
    %v2643 = vmax.f32 %v2637, 0.0
    %v2644 = vmax.f32 %v2639, 0.0
    %v2645 = vadd.f32 %v2641, 1e-07
    %v2646 = vadd.f32 %v2642, 1e-07
    %v2647 = vadd.f32 %v2643, 1e-07
    %v2648 = vadd.f32 %v2644, 1e-07
    %v2649 = vld [vmem:[%s2566] sm:$0x1]
    %v2650 = vperm.slane %v2649, 0
    %v2651 = vmul.f32 %v2650, %v2645
    %v2652 = vmul.f32 %v2650, %v2646
    %v2653 = vmul.f32 %v2650, %v2647
    %v2654 = vmul.f32 %v2650, %v2648
    %v2655 = vsel %vm103, %v2651, -inf
    %v2656 = vsel %vm103, %v2652, -inf
    %v2657 = vsel %vm103, %v2653, -inf
    %v2658 = vsel %vm103, %v2654, -inf
    %v2659 = vmax.f32 %v2655, %v2656
    %v2660 = vmax.f32 %v2657, %v2658
    %v2661 = vmax.f32 %v2659, %v2660
    %v2662 = vrot.slane %v2661, 4
    %v2663 = vmax.f32 %v2661, %v2662
    %v2664 = vrot.slane %v2663, 2
    %v2665 = vmax.f32 %v2663, %v2664
    %v2666 = vrot.slane %v2665, 1
    %v2667 = vmax.f32 %v2665, %v2666
    %v2668 = vsub.f32 %v2651, %v2667
    %v2669 = vsub.f32 %v2652, %v2667
    %v2670 = vsub.f32 %v2653, %v2667
    %v2671 = vsub.f32 %v2654, %v2667
    %v2672 = vmul.f32 %v2668, 1.442695
    %v2673 = vpow.pop %v2672
    %v2674 = vmul.f32 %v2669, 1.442695
    %v2675 = vpow.pop %v2674
    %v2676 = vmul.f32 %v2670, 1.442695
    %v2677 = vpow.pop %v2676
    %v2678 = vmul.f32 %v2671, 1.442695
    %v2679 = vpow.pop %v2678
    %v2680 = vmul.f32 %v2673, %v2645
    %v2681 = vmul.f32 %v2675, %v2646
    %v2682 = vmul.f32 %v2677, %v2647
    %v2683 = vmul.f32 %v2679, %v2648
    %2688 = vrot.lane.b32.xlu0 %v2673, 32
    %v2689 = vpop.permute.xlu0 %2688
    %2690 = vrot.lane.b32.xlu0 %v2675, 32
    %v2691 = vpop.permute.xlu0 %2690
    %2692 = vrot.lane.b32.xlu0 %v2677, 32
    %v2693 = vpop.permute.xlu0 %2692
    %2694 = vrot.lane.b32.xlu0 %v2679, 32
    %v2695 = vpop.permute.xlu0 %2694
    %v2700 = vsel %vm103, %v2680, %v2689
    %v2701 = vsel %vm103, %v2681, %v2691
    %v2702 = vsel %vm103, %v2682, %v2693
    %v2703 = vsel %vm103, %v2683, %v2695
    %v2704 = vpack.c.bf16 %v2701, %v2700
    %v2705 = vpack.c.bf16 %v2703, %v2702
    %2706 = vmatpush.bf16.msra.mxu0 0
    %2707 = vmatpush.bf16.msra.mxu0 0
    %2708 = vmatpush.bf16.msra.mxu0 0
    %2709 = vmatpush.bf16.msra.mxu0 0
    %2710 = vmatpush.bf16.msra.mxu0 0
    %2711 = vmatpush.bf16.msra.mxu0 0
    %2712 = vmatpush.bf16.msra.mxu0 %v2705
    %2713 = vmatpush.bf16.msra.mxu0 %v2704
    %2714 = vmatmul.bf16.gmra.mxu0 %v600
    %v2715 = vpop.f32.mrf.mxu0
    %v2716 = vadd.f32 0.0, %v2715
    %v2717 = vpop.f32.mrf.mxu0
    %v2718 = vadd.f32 0.0, %v2717
    %2719 = vdwg.mxu0
    %vm2720 = vcmp.gt.f32.partialorder %v2716, 0.0
    %vm2721 = vcmp.gt.f32.partialorder %v2718, 0.0
    %v2722 = vmax.f32 %v2716, 1e-30
    %v2723 = vmax.f32 %v2718, 1e-30
    %v2724 = vrcp.pop %v2722
    %v2725 = vmul.f32 %v2722, %v2724
    %v2726 = vsub.f32 1.0, %v2725
    %v2727 = vmul.f32 %v2724, %v2726
    %v2728 = vadd.f32 %v2724, %v2727
    %vm2729 = vweird.f32 %v2722
    %vm2730 = vweird.f32 %v2724
    %vm2731 = vmor %vm2729, %vm2730
    %v2732 = vsel %vm2731, %v2724, %v2728
    %v2733 = vand.u32 2147483647, %v2722
    %vm2734 = vcmp.eq.f32.partialorder %v2733, 8.507059e+37
    %v2735 = vand.u32 %v2722, 2147483648
    %v2736 = vor.u32 1.1754944e-38, %v2735
    %v2737 = vsel %vm2734, %v2736, %v2732
    %v2738 = vmul.f32 1.0, %v2737
    %v2739 = vrcp.pop %v2723
    %v2740 = vmul.f32 %v2723, %v2739
    %v2741 = vsub.f32 1.0, %v2740
    %v2742 = vmul.f32 %v2739, %v2741
    %v2743 = vadd.f32 %v2739, %v2742
    %vm2744 = vweird.f32 %v2723
    %vm2745 = vweird.f32 %v2739
    %vm2746 = vmor %vm2744, %vm2745
    %v2747 = vsel %vm2746, %v2739, %v2743
    %v2748 = vand.u32 2147483647, %v2723
    %vm2749 = vcmp.eq.f32.partialorder %v2748, 8.507059e+37
    %v2750 = vand.u32 %v2723, 2147483648
    %v2751 = vor.u32 1.1754944e-38, %v2750
    %v2752 = vsel %vm2749, %v2751, %v2747
    %v2753 = vmul.f32 1.0, %v2752
    %v2754 = vsel %vm2720, %v2738, 0.0
    %v2755 = vsel %vm2721, %v2753, 0.0
    %2758 = vrot.lane.b32.xlu0 %v2754, 96
    %v2759 = vpop.permute.xlu0 %2758
    %2760 = vrot.lane.b32.xlu0 %v2755, 96
    %v2761 = vpop.permute.xlu0 %2760
    %v2764 = vmul.f32 %v2716, %v2759
    %v2765 = vmul.f32 %v2718, %v2761
    %v2766 = vadd.f32 %v2764, %v2619
    %v2767 = vadd.f32 %v2765, %v2620
    %v2768 = vpack.c.bf16 %v2767, %v2766
    %s2769 = scalar_lea.vmem %s13, 96
    %v2770 = vld [vmem:[%s2769] sm:$0xf]
    %v2771 = vld [vmem:[%s2769 + $0x4] sm:$0xf]
    %v2772 = vld [vmem:[%s2769 + $0x8] sm:$0xf]
    %v2773 = vld [vmem:[%s2769 + $0xc] sm:$0xf]
    %s2774 = scalar_lea.vmem %s16, 24
    %v2775 = vld [vmem:[%s2774] sm:$0x1]
    %v2776 = vperm.slane %v2775, 0
    %v2781 = vunpack.c.l.b16 %v2770
    %v2782 = vunpack.c.l.b16 %v2771
    %v2783 = vunpack.c.l.b16 %v2772
    %v2784 = vunpack.c.l.b16 %v2773
    %v2785 = vpack.c.b16 %v2782, %v2781
    %v2786 = vpack.c.b16 %v2784, %v2783
    %v2790 = vsel %vm103, %v2768, 0
    %2792 = vmatpush.bf16.msra.mxu0 0
    %2793 = vmatpush.bf16.msra.mxu0 0
    %2794 = vmatpush.bf16.msra.mxu0 0
    %2795 = vmatpush.bf16.msra.mxu0 0
    %2796 = vmatpush.bf16.msra.mxu0 0
    %2797 = vmatpush.bf16.msra.mxu0 0
    %2798 = vmatpush.bf16.msra.mxu0 %v2786
    %2799 = vmatpush.bf16.msra.mxu0 %v2785
    %2800 = vmatmul.bf16.gmra.mxu0 %v2790
    %v2801 = vpop.f32.mrf.mxu0
    %v2802 = vadd.f32 %v2776, %v2801
    %v2803 = vpop.f32.mrf.mxu0
    %v2804 = vadd.f32 %v2776, %v2803
    %2805 = vdwg.mxu0
    %v2806 = vld [vmem:[%s2774 + $0x1] sm:$0x1]
    %v2807 = vld [vmem:[%s2774 + $0x2] sm:$0x1]
    %v2808 = vsel %vm702, %v2802, 0.0
    %2809 = vadd.xlane.f32.xlu0 %v2808
    %v2810 = vpop.xlane.xlu0 %2809
    %v2811 = vsel %vm702, %v2804, 0.0
    %2812 = vadd.xlane.f32.xlu0 %v2811
    %v2813 = vpop.xlane.xlu0 %2812
    %v2814 = vmul.f32 %v2810, %v715
    %v2815 = vmul.f32 %v2813, %v715
    %v2816 = vsub.f32 %v2802, %v2814
    %v2817 = vsub.f32 %v2804, %v2815
    %v2818 = vmul.f32 %v2816, %v2816
    %v2819 = vmul.f32 %v2817, %v2817
    %v2820 = vsel %vm702, %v2818, 0.0
    %2821 = vadd.xlane.f32.xlu0 %v2820
    %v2822 = vpop.xlane.xlu0 %2821
    %v2823 = vsel %vm702, %v2819, 0.0
    %2824 = vadd.xlane.f32.xlu0 %v2823
    %v2825 = vpop.xlane.xlu0 %2824
    %v2826 = vmul.f32 %v2822, %v715
    %v2827 = vmul.f32 %v2825, %v715
    %v2828 = vadd.f32 %v2826, 1e-05
    %v2829 = vadd.f32 %v2827, 1e-05
    %v2830 = vrsqrt.pop %v2828
    %v2831 = vmul.f32 %v2830, %v2828
    %v2832 = vmul.f32 %v2831, %v2830
    %v2833 = vmul.f32 0.5, %v2832
    %v2834 = vsub.f32 1.5, %v2833
    %v2835 = vmul.f32 %v2830, %v2834
    %vm2836 = vweird.f32 %v2828
    %vm2837 = vweird.f32 %v2830
    %vm2838 = vmor %vm2836, %vm2837
    %v2839 = vsel %vm2838, %v2830, %v2835
    %v2840 = vrsqrt.pop %v2829
    %v2841 = vmul.f32 %v2840, %v2829
    %v2842 = vmul.f32 %v2841, %v2840
    %v2843 = vmul.f32 0.5, %v2842
    %v2844 = vsub.f32 1.5, %v2843
    %v2845 = vmul.f32 %v2840, %v2844
    %vm2846 = vweird.f32 %v2829
    %vm2847 = vweird.f32 %v2840
    %vm2848 = vmor %vm2846, %vm2847
    %v2849 = vsel %vm2848, %v2840, %v2845
    %v2850 = vmul.f32 %v2816, %v2839
    %v2851 = vmul.f32 %v2817, %v2849
    %v2852 = vperm.slane %v2806, 0
    %v2853 = vmul.f32 %v2850, %v2852
    %v2854 = vmul.f32 %v2851, %v2852
    %v2855 = vperm.slane %v2807, 0
    %v2856 = vadd.f32 %v2853, %v2855
    %v2857 = vadd.f32 %v2854, %v2855
    %v2858 = vmax.f32 %v2856, 0.0
    %v2859 = vmax.f32 %v2857, 0.0
    %v2860 = vpack.c.bf16 %v2859, %v2858
    %s2861 = scalar_lea.vmem %s14, 192
    %v2862 = vld [vmem:[%s2861] sm:$0xf]
    %v2863 = vld [vmem:[%s2861 + $0x4] sm:$0xf]
    %v2864 = vld [vmem:[%s2861 + $0x8] sm:$0xf]
    %v2865 = vld [vmem:[%s2861 + $0xc] sm:$0xf]
    %v2866 = vld [vmem:[%s2861 + $0x10] sm:$0xf]
    %v2867 = vld [vmem:[%s2861 + $0x14] sm:$0xf]
    %v2868 = vld [vmem:[%s2861 + $0x18] sm:$0xf]
    %v2869 = vld [vmem:[%s2861 + $0x1c] sm:$0xf]
    %v2870 = vld [vmem:[%s2566 + $0x3] sm:$0x1]
    %v2871 = vperm.slane %v2870, 0
    %v2880 = vunpack.c.l.b16 %v2862
    %v2881 = vunpack.c.l.b16 %v2863
    %v2882 = vunpack.c.l.b16 %v2864
    %v2883 = vunpack.c.l.b16 %v2865
    %v2884 = vunpack.c.l.b16 %v2866
    %v2885 = vunpack.c.l.b16 %v2867
    %v2886 = vunpack.c.l.b16 %v2868
    %v2887 = vunpack.c.l.b16 %v2869
    %v2888 = vpack.c.b16 %v2881, %v2880
    %v2889 = vpack.c.b16 %v2883, %v2882
    %v2890 = vpack.c.b16 %v2885, %v2884
    %v2891 = vpack.c.b16 %v2887, %v2886
    %v2897 = vsel %vm702, %v2860, 0
    %2899 = vmatpush.bf16.msra.mxu0 0
    %2900 = vmatpush.bf16.msra.mxu0 0
    %2901 = vmatpush.bf16.msra.mxu0 0
    %2902 = vmatpush.bf16.msra.mxu0 0
    %2903 = vmatpush.bf16.msra.mxu0 %v2891
    %2904 = vmatpush.bf16.msra.mxu0 %v2890
    %2905 = vmatpush.bf16.msra.mxu0 %v2889
    %2906 = vmatpush.bf16.msra.mxu0 %v2888
    %2907 = vmatmul.bf16.gmra.mxu0 %v2897
    %v2908 = vpop.f32.mrf.mxu0
    %v2909 = vadd.f32 %v2871, %v2908
    %v2910 = vpop.f32.mrf.mxu0
    %v2911 = vadd.f32 %v2871, %v2910
    %2912 = vdwg.mxu0
    %v2913 = vadd.f32 %v2564, %v2909
    %v2914 = vadd.f32 %v2565, %v2911
    %s2915 = scalar_lea.vmem %s15, 28
    %v2916 = vld [vmem:[%s2915 + $0x1] sm:$0x1]
    %v2917 = vld [vmem:[%s2915 + $0x2] sm:$0x1]
    %v2918 = vsel %vm103, %v2913, 0.0
    %2919 = vadd.xlane.f32.xlu0 %v2918
    %v2920 = vpop.xlane.xlu0 %2919
    %v2921 = vsel %vm103, %v2914, 0.0
    %2922 = vadd.xlane.f32.xlu0 %v2921
    %v2923 = vpop.xlane.xlu0 %2922
    %v2924 = vmul.f32 %v2920, %v829
    %v2925 = vmul.f32 %v2923, %v829
    %v2926 = vsub.f32 %v2913, %v2924
    %v2927 = vsub.f32 %v2914, %v2925
    %v2928 = vmul.f32 %v2926, %v2926
    %v2929 = vmul.f32 %v2927, %v2927
    %v2930 = vsel %vm103, %v2928, 0.0
    %2931 = vadd.xlane.f32.xlu0 %v2930
    %v2932 = vpop.xlane.xlu0 %2931
    %v2933 = vsel %vm103, %v2929, 0.0
    %2934 = vadd.xlane.f32.xlu0 %v2933
    %v2935 = vpop.xlane.xlu0 %2934
    %v2936 = vmul.f32 %v2932, %v829
    %v2937 = vmul.f32 %v2935, %v829
    %v2938 = vadd.f32 %v2936, 1e-05
    %v2939 = vadd.f32 %v2937, 1e-05
    %v2940 = vrsqrt.pop %v2938
    %v2941 = vmul.f32 %v2940, %v2938
    %v2942 = vmul.f32 %v2941, %v2940
    %v2943 = vmul.f32 0.5, %v2942
    %v2944 = vsub.f32 1.5, %v2943
    %v2945 = vmul.f32 %v2940, %v2944
    %vm2946 = vweird.f32 %v2938
    %vm2947 = vweird.f32 %v2940
    %vm2948 = vmor %vm2946, %vm2947
    %v2949 = vsel %vm2948, %v2940, %v2945
    %v2950 = vrsqrt.pop %v2939
    %v2951 = vmul.f32 %v2950, %v2939
    %v2952 = vmul.f32 %v2951, %v2950
    %v2953 = vmul.f32 0.5, %v2952
    %v2954 = vsub.f32 1.5, %v2953
    %v2955 = vmul.f32 %v2950, %v2954
    %vm2956 = vweird.f32 %v2939
    %vm2957 = vweird.f32 %v2950
    %vm2958 = vmor %vm2956, %vm2957
    %v2959 = vsel %vm2958, %v2950, %v2955
    %v2960 = vmul.f32 %v2926, %v2949
    %v2961 = vmul.f32 %v2927, %v2959
    %v2962 = vperm.slane %v2916, 0
    %v2963 = vmul.f32 %v2960, %v2962
    %v2964 = vmul.f32 %v2961, %v2962
    %v2965 = vperm.slane %v2917, 0
    %v2966 = vadd.f32 %v2963, %v2965
    %v2967 = vadd.f32 %v2964, %v2965
    %v2968 = vmax.f32 %v2966, 0.0
    %v2969 = vmax.f32 %v2967, 0.0
    %v2970 = vpack.c.bf16 %v2969, %v2968
    %2971 = vmatpush.bf16.msra.mxu0 0
    %2972 = vmatpush.bf16.msra.mxu0 0
    %2973 = vmatpush.bf16.msra.mxu0 0
    %2974 = vmatpush.bf16.msra.mxu0 0
    %2975 = vmatpush.bf16.msra.mxu0 0
    %2976 = vmatpush.bf16.msra.mxu0 0
    %2977 = vmatpush.bf16.msra.mxu0 0
    %2978 = vmatpush.bf16.msra.mxu0 %v2970
    %2979 = vmatmul.bf16.gmra.mxu0 %v482
    %v2980 = vpop.f32.mrf.mxu0
    %v2981 = vadd.f32 %v452, %v2980
    %v2982 = vpop.f32.mrf.mxu0
    %v2983 = vadd.f32 %v454, %v2982
    %2984 = vmatmul.bf16.gmra.mxu0 %v485
    %v2985 = vpop.f32.mrf.mxu0
    %v2986 = vadd.f32 %v457, %v2985
    %v2987 = vpop.f32.mrf.mxu0
    %v2988 = vadd.f32 %v459, %v2987
    %2989 = vdwg.mxu0
    %v2990 = vmax.f32 %v2981, 0.0
    %v2991 = vmax.f32 %v2983, 0.0
    %v2992 = vmax.f32 %v2986, 0.0
    %v2993 = vmax.f32 %v2988, 0.0
    %v2994 = vadd.f32 %v2990, 1e-07
    %v2995 = vadd.f32 %v2991, 1e-07
    %v2996 = vadd.f32 %v2992, 1e-07
    %v2997 = vadd.f32 %v2993, 1e-07
    %v2998 = vld [vmem:[%s2915] sm:$0x1]
    %v2999 = vperm.slane %v2998, 0
    %v3000 = vmul.f32 %v2999, %v2994
    %v3001 = vmul.f32 %v2999, %v2995
    %v3002 = vmul.f32 %v2999, %v2996
    %v3003 = vmul.f32 %v2999, %v2997
    %v3004 = vsel %vm103, %v3000, -inf
    %v3005 = vsel %vm103, %v3001, -inf
    %v3006 = vsel %vm103, %v3002, -inf
    %v3007 = vsel %vm103, %v3003, -inf
    %v3008 = vmax.f32 %v3004, %v3005
    %v3009 = vmax.f32 %v3006, %v3007
    %v3010 = vmax.f32 %v3008, %v3009
    %v3011 = vrot.slane %v3010, 4
    %v3012 = vmax.f32 %v3010, %v3011
    %v3013 = vrot.slane %v3012, 2
    %v3014 = vmax.f32 %v3012, %v3013
    %v3015 = vrot.slane %v3014, 1
    %v3016 = vmax.f32 %v3014, %v3015
    %v3017 = vsub.f32 %v3000, %v3016
    %v3018 = vsub.f32 %v3001, %v3016
    %v3019 = vsub.f32 %v3002, %v3016
    %v3020 = vsub.f32 %v3003, %v3016
    %v3021 = vmul.f32 %v3017, 1.442695
    %v3022 = vpow.pop %v3021
    %v3023 = vmul.f32 %v3018, 1.442695
    %v3024 = vpow.pop %v3023
    %v3025 = vmul.f32 %v3019, 1.442695
    %v3026 = vpow.pop %v3025
    %v3027 = vmul.f32 %v3020, 1.442695
    %v3028 = vpow.pop %v3027
    %v3029 = vmul.f32 %v3022, %v2994
    %v3030 = vmul.f32 %v3024, %v2995
    %v3031 = vmul.f32 %v3026, %v2996
    %v3032 = vmul.f32 %v3028, %v2997
    %3037 = vrot.lane.b32.xlu0 %v3022, 32
    %v3038 = vpop.permute.xlu0 %3037
    %3039 = vrot.lane.b32.xlu0 %v3024, 32
    %v3040 = vpop.permute.xlu0 %3039
    %3041 = vrot.lane.b32.xlu0 %v3026, 32
    %v3042 = vpop.permute.xlu0 %3041
    %3043 = vrot.lane.b32.xlu0 %v3028, 32
    %v3044 = vpop.permute.xlu0 %3043
    %v3049 = vsel %vm103, %v3029, %v3038
    %v3050 = vsel %vm103, %v3030, %v3040
    %v3051 = vsel %vm103, %v3031, %v3042
    %v3052 = vsel %vm103, %v3032, %v3044
    %v3053 = vpack.c.bf16 %v3050, %v3049
    %v3054 = vpack.c.bf16 %v3052, %v3051
    %3055 = vmatpush.bf16.msra.mxu0 0
    %3056 = vmatpush.bf16.msra.mxu0 0
    %3057 = vmatpush.bf16.msra.mxu0 0
    %3058 = vmatpush.bf16.msra.mxu0 0
    %3059 = vmatpush.bf16.msra.mxu0 0
    %3060 = vmatpush.bf16.msra.mxu0 0
    %3061 = vmatpush.bf16.msra.mxu0 %v3054
    %3062 = vmatpush.bf16.msra.mxu0 %v3053
    %3063 = vmatmul.bf16.gmra.mxu0 %v600
    %v3064 = vpop.f32.mrf.mxu0
    %v3065 = vadd.f32 0.0, %v3064
    %v3066 = vpop.f32.mrf.mxu0
    %v3067 = vadd.f32 0.0, %v3066
    %3068 = vdwg.mxu0
    %vm3069 = vcmp.gt.f32.partialorder %v3065, 0.0
    %vm3070 = vcmp.gt.f32.partialorder %v3067, 0.0
    %v3071 = vmax.f32 %v3065, 1e-30
    %v3072 = vmax.f32 %v3067, 1e-30
    %v3073 = vrcp.pop %v3071
    %v3074 = vmul.f32 %v3071, %v3073
    %v3075 = vsub.f32 1.0, %v3074
    %v3076 = vmul.f32 %v3073, %v3075
    %v3077 = vadd.f32 %v3073, %v3076
    %vm3078 = vweird.f32 %v3071
    %vm3079 = vweird.f32 %v3073
    %vm3080 = vmor %vm3078, %vm3079
    %v3081 = vsel %vm3080, %v3073, %v3077
    %v3082 = vand.u32 2147483647, %v3071
    %vm3083 = vcmp.eq.f32.partialorder %v3082, 8.507059e+37
    %v3084 = vand.u32 %v3071, 2147483648
    %v3085 = vor.u32 1.1754944e-38, %v3084
    %v3086 = vsel %vm3083, %v3085, %v3081
    %v3087 = vmul.f32 1.0, %v3086
    %v3088 = vrcp.pop %v3072
    %v3089 = vmul.f32 %v3072, %v3088
    %v3090 = vsub.f32 1.0, %v3089
    %v3091 = vmul.f32 %v3088, %v3090
    %v3092 = vadd.f32 %v3088, %v3091
    %vm3093 = vweird.f32 %v3072
    %vm3094 = vweird.f32 %v3088
    %vm3095 = vmor %vm3093, %vm3094
    %v3096 = vsel %vm3095, %v3088, %v3092
    %v3097 = vand.u32 2147483647, %v3072
    %vm3098 = vcmp.eq.f32.partialorder %v3097, 8.507059e+37
    %v3099 = vand.u32 %v3072, 2147483648
    %v3100 = vor.u32 1.1754944e-38, %v3099
    %v3101 = vsel %vm3098, %v3100, %v3096
    %v3102 = vmul.f32 1.0, %v3101
    %v3103 = vsel %vm3069, %v3087, 0.0
    %v3104 = vsel %vm3070, %v3102, 0.0
    %3107 = vrot.lane.b32.xlu0 %v3103, 96
    %v3108 = vpop.permute.xlu0 %3107
    %3109 = vrot.lane.b32.xlu0 %v3104, 96
    %v3110 = vpop.permute.xlu0 %3109
    %v3113 = vmul.f32 %v3065, %v3108
    %v3114 = vmul.f32 %v3067, %v3110
    %v3115 = vadd.f32 %v3113, %v2968
    %v3116 = vadd.f32 %v3114, %v2969
    %v3117 = vpack.c.bf16 %v3116, %v3115
    %s3118 = scalar_lea.vmem %s13, 112
    %v3119 = vld [vmem:[%s3118] sm:$0xf]
    %v3120 = vld [vmem:[%s3118 + $0x4] sm:$0xf]
    %v3121 = vld [vmem:[%s3118 + $0x8] sm:$0xf]
    %v3122 = vld [vmem:[%s3118 + $0xc] sm:$0xf]
    %s3123 = scalar_lea.vmem %s16, 28
    %v3124 = vld [vmem:[%s3123] sm:$0x1]
    %v3125 = vperm.slane %v3124, 0
    %v3130 = vunpack.c.l.b16 %v3119
    %v3131 = vunpack.c.l.b16 %v3120
    %v3132 = vunpack.c.l.b16 %v3121
    %v3133 = vunpack.c.l.b16 %v3122
    %v3134 = vpack.c.b16 %v3131, %v3130
    %v3135 = vpack.c.b16 %v3133, %v3132
    %v3139 = vsel %vm103, %v3117, 0
    %3141 = vmatpush.bf16.msra.mxu0 0
    %3142 = vmatpush.bf16.msra.mxu0 0
    %3143 = vmatpush.bf16.msra.mxu0 0
    %3144 = vmatpush.bf16.msra.mxu0 0
    %3145 = vmatpush.bf16.msra.mxu0 0
    %3146 = vmatpush.bf16.msra.mxu0 0
    %3147 = vmatpush.bf16.msra.mxu0 %v3135
    %3148 = vmatpush.bf16.msra.mxu0 %v3134
    %3149 = vmatmul.bf16.gmra.mxu0 %v3139
    %v3150 = vpop.f32.mrf.mxu0
    %v3151 = vadd.f32 %v3125, %v3150
    %v3152 = vpop.f32.mrf.mxu0
    %v3153 = vadd.f32 %v3125, %v3152
    %3154 = vdwg.mxu0
    %v3155 = vld [vmem:[%s3123 + $0x1] sm:$0x1]
    %v3156 = vld [vmem:[%s3123 + $0x2] sm:$0x1]
    %v3157 = vsel %vm702, %v3151, 0.0
    %3158 = vadd.xlane.f32.xlu0 %v3157
    %v3159 = vpop.xlane.xlu0 %3158
    %v3160 = vsel %vm702, %v3153, 0.0
    %3161 = vadd.xlane.f32.xlu0 %v3160
    %v3162 = vpop.xlane.xlu0 %3161
    %v3163 = vmul.f32 %v3159, %v715
    %v3164 = vmul.f32 %v3162, %v715
    %v3165 = vsub.f32 %v3151, %v3163
    %v3166 = vsub.f32 %v3153, %v3164
    %v3167 = vmul.f32 %v3165, %v3165
    %v3168 = vmul.f32 %v3166, %v3166
    %v3169 = vsel %vm702, %v3167, 0.0
    %3170 = vadd.xlane.f32.xlu0 %v3169
    %v3171 = vpop.xlane.xlu0 %3170
    %v3172 = vsel %vm702, %v3168, 0.0
    %3173 = vadd.xlane.f32.xlu0 %v3172
    %v3174 = vpop.xlane.xlu0 %3173
    %v3175 = vmul.f32 %v3171, %v715
    %v3176 = vmul.f32 %v3174, %v715
    %v3177 = vadd.f32 %v3175, 1e-05
    %v3178 = vadd.f32 %v3176, 1e-05
    %v3179 = vrsqrt.pop %v3177
    %v3180 = vmul.f32 %v3179, %v3177
    %v3181 = vmul.f32 %v3180, %v3179
    %v3182 = vmul.f32 0.5, %v3181
    %v3183 = vsub.f32 1.5, %v3182
    %v3184 = vmul.f32 %v3179, %v3183
    %vm3185 = vweird.f32 %v3177
    %vm3186 = vweird.f32 %v3179
    %vm3187 = vmor %vm3185, %vm3186
    %v3188 = vsel %vm3187, %v3179, %v3184
    %v3189 = vrsqrt.pop %v3178
    %v3190 = vmul.f32 %v3189, %v3178
    %v3191 = vmul.f32 %v3190, %v3189
    %v3192 = vmul.f32 0.5, %v3191
    %v3193 = vsub.f32 1.5, %v3192
    %v3194 = vmul.f32 %v3189, %v3193
    %vm3195 = vweird.f32 %v3178
    %vm3196 = vweird.f32 %v3189
    %vm3197 = vmor %vm3195, %vm3196
    %v3198 = vsel %vm3197, %v3189, %v3194
    %v3199 = vmul.f32 %v3165, %v3188
    %v3200 = vmul.f32 %v3166, %v3198
    %v3201 = vperm.slane %v3155, 0
    %v3202 = vmul.f32 %v3199, %v3201
    %v3203 = vmul.f32 %v3200, %v3201
    %v3204 = vperm.slane %v3156, 0
    %v3205 = vadd.f32 %v3202, %v3204
    %v3206 = vadd.f32 %v3203, %v3204
    %v3207 = vmax.f32 %v3205, 0.0
    %v3208 = vmax.f32 %v3206, 0.0
    %v3209 = vpack.c.bf16 %v3208, %v3207
    %s3210 = scalar_lea.vmem %s14, 224
    %v3211 = vld [vmem:[%s3210] sm:$0xf]
    %v3212 = vld [vmem:[%s3210 + $0x4] sm:$0xf]
    %v3213 = vld [vmem:[%s3210 + $0x8] sm:$0xf]
    %v3214 = vld [vmem:[%s3210 + $0xc] sm:$0xf]
    %v3215 = vld [vmem:[%s3210 + $0x10] sm:$0xf]
    %v3216 = vld [vmem:[%s3210 + $0x14] sm:$0xf]
    %v3217 = vld [vmem:[%s3210 + $0x18] sm:$0xf]
    %v3218 = vld [vmem:[%s3210 + $0x1c] sm:$0xf]
    %v3219 = vld [vmem:[%s2915 + $0x3] sm:$0x1]
    %v3220 = vperm.slane %v3219, 0
    %v3229 = vunpack.c.l.b16 %v3211
    %v3230 = vunpack.c.l.b16 %v3212
    %v3231 = vunpack.c.l.b16 %v3213
    %v3232 = vunpack.c.l.b16 %v3214
    %v3233 = vunpack.c.l.b16 %v3215
    %v3234 = vunpack.c.l.b16 %v3216
    %v3235 = vunpack.c.l.b16 %v3217
    %v3236 = vunpack.c.l.b16 %v3218
    %v3237 = vpack.c.b16 %v3230, %v3229
    %v3238 = vpack.c.b16 %v3232, %v3231
    %v3239 = vpack.c.b16 %v3234, %v3233
    %v3240 = vpack.c.b16 %v3236, %v3235
    %v3246 = vsel %vm702, %v3209, 0
    %3248 = vmatpush.bf16.msra.mxu0 0
    %3249 = vmatpush.bf16.msra.mxu0 0
    %3250 = vmatpush.bf16.msra.mxu0 0
    %3251 = vmatpush.bf16.msra.mxu0 0
    %3252 = vmatpush.bf16.msra.mxu0 %v3240
    %3253 = vmatpush.bf16.msra.mxu0 %v3239
    %3254 = vmatpush.bf16.msra.mxu0 %v3238
    %3255 = vmatpush.bf16.msra.mxu0 %v3237
    %3256 = vmatmul.bf16.gmra.mxu0 %v3246
    %v3257 = vpop.f32.mrf.mxu0
    %v3258 = vadd.f32 %v3220, %v3257
    %v3259 = vpop.f32.mrf.mxu0
    %v3260 = vadd.f32 %v3220, %v3259
    %3261 = vdwg.mxu0
    %v3262 = vadd.f32 %v2913, %v3258
    %v3263 = vadd.f32 %v2914, %v3260
    %v3264 = vld [vmem:[%s15 + $0x1] sm:$0x1]
    %v3265 = vld [vmem:[%s15 + $0x2] sm:$0x1]
    %v3266 = vsel %vm103, %v3262, 0.0
    %3267 = vadd.xlane.f32.xlu0 %v3266
    %v3268 = vpop.xlane.xlu0 %3267
    %v3269 = vsel %vm103, %v3263, 0.0
    %3270 = vadd.xlane.f32.xlu0 %v3269
    %v3271 = vpop.xlane.xlu0 %3270
    %v3272 = vmul.f32 %v3268, %v829
    %v3273 = vmul.f32 %v3271, %v829
    %v3274 = vsub.f32 %v3262, %v3272
    %v3275 = vsub.f32 %v3263, %v3273
    %v3276 = vmul.f32 %v3274, %v3274
    %v3277 = vmul.f32 %v3275, %v3275
    %v3278 = vsel %vm103, %v3276, 0.0
    %3279 = vadd.xlane.f32.xlu0 %v3278
    %v3280 = vpop.xlane.xlu0 %3279
    %v3281 = vsel %vm103, %v3277, 0.0
    %3282 = vadd.xlane.f32.xlu0 %v3281
    %v3283 = vpop.xlane.xlu0 %3282
    %v3284 = vmul.f32 %v3280, %v829
    %v3285 = vmul.f32 %v3283, %v829
    %v3286 = vadd.f32 %v3284, 1e-05
    %v3287 = vadd.f32 %v3285, 1e-05
    %v3288 = vrsqrt.pop %v3286
    %v3289 = vmul.f32 %v3288, %v3286
    %v3290 = vmul.f32 %v3289, %v3288
    %v3291 = vmul.f32 0.5, %v3290
    %v3292 = vsub.f32 1.5, %v3291
    %v3293 = vmul.f32 %v3288, %v3292
    %vm3294 = vweird.f32 %v3286
    %vm3295 = vweird.f32 %v3288
    %vm3296 = vmor %vm3294, %vm3295
    %v3297 = vsel %vm3296, %v3288, %v3293
    %v3298 = vrsqrt.pop %v3287
    %v3299 = vmul.f32 %v3298, %v3287
    %v3300 = vmul.f32 %v3299, %v3298
    %v3301 = vmul.f32 0.5, %v3300
    %v3302 = vsub.f32 1.5, %v3301
    %v3303 = vmul.f32 %v3298, %v3302
    %vm3304 = vweird.f32 %v3287
    %vm3305 = vweird.f32 %v3298
    %vm3306 = vmor %vm3304, %vm3305
    %v3307 = vsel %vm3306, %v3298, %v3303
    %v3308 = vmul.f32 %v3274, %v3297
    %v3309 = vmul.f32 %v3275, %v3307
    %v3310 = vperm.slane %v3264, 0
    %v3311 = vmul.f32 %v3308, %v3310
    %v3312 = vmul.f32 %v3309, %v3310
    %v3313 = vperm.slane %v3265, 0
    %v3314 = vadd.f32 %v3311, %v3313
    %v3315 = vadd.f32 %v3312, %v3313
    %v3316 = vmax.f32 %v3314, 0.0
    %v3317 = vmax.f32 %v3315, 0.0
    %v3318 = vpack.c.bf16 %v3317, %v3316
    %v3319 = vld [vmem:[%s17] sm:$0xf]
    %v3320 = vld [vmem:[%s17 + $0x4] sm:$0xf]
    %v3321 = vld [vmem:[%s17 + $0x8] sm:$0xf]
    %v3322 = vld [vmem:[%s17 + $0xc] sm:$0xf]
    %v3323 = vld [vmem:[%s18] sm:$0x1]
    %v3325 = vperm.slane %v3323, 0
    %v3331 = vunpack.c.l.b16 %v3319
    %v3332 = vunpack.c.l.b16 %v3320
    %v3333 = vunpack.c.l.b16 %v3321
    %v3334 = vunpack.c.l.b16 %v3322
    %v3335 = vpack.c.b16 %v3332, %v3331
    %v3336 = vpack.c.b16 %v3334, %v3333
    %v3340 = vsel %vm103, %v3318, 0
    %3342 = vmatpush.bf16.msra.mxu0 0
    %3343 = vmatpush.bf16.msra.mxu0 0
    %3344 = vmatpush.bf16.msra.mxu0 0
    %3345 = vmatpush.bf16.msra.mxu0 0
    %3346 = vmatpush.bf16.msra.mxu0 0
    %3347 = vmatpush.bf16.msra.mxu0 0
    %3348 = vmatpush.bf16.msra.mxu0 %v3336
    %3349 = vmatpush.bf16.msra.mxu0 %v3335
    %3350 = vmatmul.bf16.gmra.mxu0 %v3340
    %v3351 = vpop.f32.mrf.mxu0
    %v3352 = vadd.f32 %v3325, %v3351
    %v3353 = vpop.f32.mrf.mxu0
    %v3354 = vadd.f32 %v3325, %v3353
    %3355 = vdwg.mxu0
    %v3356 = vld [vmem:[%s4] sm:$0xff]
    %v3357 = vld [vmem:[%s4 + $0x8] sm:$0xff]
    %v3358 = vsub.f32 %v3356, 1.0
    %v3359 = vsub.f32 %v3357, 1.0
    %v3360 = vmul.f32 %v3358, 3e+38
    %v3361 = vmul.f32 %v3359, 3e+38
    %3363 = vset.pattern.permute.xlu0 0
    %3364 = vperm.xlu0 %3363, %v3360
    %v3365 = vpop.permute.xlu0 %3364
    %3368 = vset.pattern.permute.xlu0 0
    %3369 = vperm.xlu0 %3368, %v3361
    %v3370 = vpop.permute.xlu0 %3369
    %v3372 = vadd.f32 %v3352, %v3365
    %v3373 = vadd.f32 %v3354, %v3370
    %v3374 = vsel %vm78, %v3372, -inf
    %v3375 = vsel %vm78, %v3373, -inf
    %v3376 = vmax.f32 %v3374, %v3375
    %v3377 = vrot.slane %v3376, 4
    %v3378 = vmax.f32 %v3376, %v3377
    %v3379 = vrot.slane %v3378, 2
    %v3380 = vmax.f32 %v3378, %v3379
    %v3381 = vrot.slane %v3380, 1
    %v3382 = vmax.f32 %v3380, %v3381
    %3383 = vset.pattern.permute.xlu0 1
    %3384 = vperm.xlu0 %3383, %v3360
    %v3385 = vpop.permute.xlu0 %3384
    %3387 = vset.pattern.permute.xlu0 1
    %3388 = vperm.xlu0 %3387, %v3361
    %v3389 = vpop.permute.xlu0 %3388
    %v3391 = vadd.f32 %v3352, %v3385
    %v3392 = vadd.f32 %v3354, %v3389
    %v3393 = vsel %vm78, %v3391, -inf
    %v3394 = vsel %vm78, %v3392, -inf
    %v3395 = vmax.f32 %v3393, %v3394
    %v3396 = vrot.slane %v3395, 4
    %v3397 = vmax.f32 %v3395, %v3396
    %v3398 = vrot.slane %v3397, 2
    %v3399 = vmax.f32 %v3397, %v3398
    %v3400 = vrot.slane %v3399, 1
    %v3401 = vmax.f32 %v3399, %v3400
    %vm3402 = vcmask 1040384
    %v3403 = vsel %vm3402, %v3382, %v3401
    %vm3404 = vcmask 33792
    %3405 = vst.msk [vmem:[#allocation2] sm:$0x3] %vm3404, %v3403
    // Predicated region
    $region78: #{deeper_gcn_forward.1} parent=1 // pred_check
      _
    $region79: #{deeper_gcn_forward.1} parent=1 // pred_check_branch
      %3407 = sbr.rel (0) target = $region81
    $region80: #{deeper_gcn_forward.1} parent=1 // pred_region
      %3409 = vsyncadd [#allocation3], 0
      %s3411 = sshll.u32 [#allocation2], 4
      %s3412 = int_to_ptr.vmem [resolvable:$true] %s3411
      %s3413 = sshll.u32 %s19, 4
      %s3414 = int_to_ptr.hbm [resolvable:$true] %s3413
      %3416 = dma.vmem_to_hbm [thread:$0]  %s3412, 32, %s3414, [#allocation3]
    $region81: #{deeper_gcn_forward.1} parent=1 // pred_fallthru
      _
    // Predicated region
    $region82: #{deeper_gcn_forward.1} parent=1 // pred_check
      _
    $region83: #{deeper_gcn_forward.1} parent=1 // pred_check_branch
      %3418 = sbr.rel (0) target = $region85
    $region84: #{deeper_gcn_forward.1} parent=1 // pred_region
      %3420 = dma.done [#allocation3], 32
    $region85: #{deeper_gcn_forward.1} parent=1 // pred_fallthru
      _
    %3421 = vsyncpa [#allocation3], 1

</llo_original>
